<compile_context>
chip_gen: v6e
topology: v6e:2x2x1
jax: 0.10.0
libtpu: 0.0.40
codegen_flags: <defaults>
</compile_context>

<pallas_src>
import functools

import jax
import jax.numpy as jnp
from jax.experimental import pallas as pl
from jax.experimental.pallas import tpu as pltpu


def _mul_conv_bn_kernel(x_ref, s_ref, w_ref, g_ref, b_ref, o_ref, acc_ref, *, eps):
    # Grid: (Cout tiles, K tiles); K (reduction) is the last, "arbitrary" axis.
    #   x_ref: (tk, R)  f32     s_ref: (tk, 1) f32
    #   w_ref: (tc, tk) bf16    g_ref/b_ref: (tc, 1) f32
    #   o_ref: (tc, R)  f32     acc_ref: (tc, R) f32 scratch (persists over k)
    k = pl.program_id(1)

    @pl.when(k == 0)
    def _():
        acc_ref[...] = jnp.zeros_like(acc_ref)

    # mul (VPU) -> bf16 cast -> 1x1-conv partial product on the MXU (f32 acc).
    # Casting the activations to bf16 is an intentional precision choice: it
    # matches the bf16 weight operand; accumulation and BN stay in f32.
    xs = (x_ref[...] * s_ref[...]).astype(w_ref.dtype)
    acc_ref[...] += jnp.dot(w_ref[...], xs, preferred_element_type=jnp.float32)

    @pl.when(k == pl.num_programs(1) - 1)
    def _():
        # Training-mode BatchNorm over the spatial axis (N == 1), per channel.
        # Stable form: var = mean((y - mean)^2), avoids E[y^2] - E[y]^2 cancel.
        y = acc_ref[...]
        inv_r = 1.0 / y.shape[1]
        mean = jnp.sum(y, axis=1, keepdims=True) * inv_r
        centered = y - mean
        var = jnp.sum(centered * centered, axis=1, keepdims=True) * inv_r
        scale = g_ref[...] * jax.lax.rsqrt(var + eps)     # gamma * rsqrt(var+eps)
        o_ref[...] = centered * scale + b_ref[...]        # one FMA per element


def _num_cout_tiles(cout):
    # v7x has 2 TensorCores per chip: split the independent Cout axis into two
    # fat tiles (>=128 rows each) on a "parallel" leading axis so megacore
    # partitioning can place one tile per core.  On v5e/v6e (1 TC) an extra
    # grid step is pure serial overhead, so keep a single tile there.
    try:
        kind = jax.devices()[0].device_kind.lower()
    except Exception:
        return 1
    if ("v7" in kind or "7x" in kind) and cout % 2 == 0 and (cout // 2) % 8 == 0:
        return 2
    return 1


def _num_k_tiles(cin):
    # 2-3 fat K tiles: enough to pipeline the weight DMA against compute while
    # keeping per-grid-step overhead (~0.35 us) small vs. the per-step DMA.
    # tk must stay a multiple of 128 (it is the weight block's minor dim).
    for nk in (3, 2):
        if cin % nk == 0 and (cin // nk) % 128 == 0:
            return nk
    return 1


def mul_conv_bn(x_cm, scale_col, w, gamma_col, beta_col, *, eps=1e-3):
    """y = BN(W @ (x * s)) with training-mode (batch) statistics.

    x_cm:      (Cin, R)    float32
    scale_col: (Cin, 1)    float32
    w:         (Cout, Cin) bfloat16  (pre-cast once at model-setup time)
    gamma_col: (Cout, 1)   float32
    beta_col:  (Cout, 1)   float32
    returns    (Cout, R)   float32
    """
    Cin, R = x_cm.shape
    Cout, Cin_w = w.shape
    assert Cin_w == Cin
    # A per-call f32->bf16 weight convert would be a separate XLA pass over
    # more HBM bytes than the whole fused kernel touches -> forbid it here.
    assert w.dtype == jnp.bfloat16, "pre-cast the 1x1-conv weight to (Cout, Cin) bfloat16 once"
    assert gamma_col.shape == (Cout, 1) and gamma_col.dtype == jnp.float32
    assert beta_col.shape == (Cout, 1) and beta_col.dtype == jnp.float32

    nct = _num_cout_tiles(Cout)
    nk = _num_k_tiles(Cin)
    tc = Cout // nct
    tk = Cin // nk

    kernel = functools.partial(_mul_conv_bn_kernel, eps=eps)
    return pl.pallas_call(
        kernel,
        out_shape=jax.ShapeDtypeStruct((Cout, R), jnp.float32),
        grid=(nct, nk),  # reduction (K) axis last, marked "arbitrary"
        in_specs=[
            pl.BlockSpec((tk, R), lambda i, k: (k, 0)),    # x: K-tiled, shared by Cout tiles
            pl.BlockSpec((tk, 1), lambda i, k: (k, 0)),    # per-Cin scale
            pl.BlockSpec((tc, tk), lambda i, k: (i, k)),   # weight tile (dominant DMA, pipelined)
            pl.BlockSpec((tc, 1), lambda i, k: (i, 0)),    # gamma
            pl.BlockSpec((tc, 1), lambda i, k: (i, 0)),    # beta
        ],
        out_specs=pl.BlockSpec((tc, R), lambda i, k: (i, 0)),
        scratch_shapes=[pltpu.VMEM((tc, R), jnp.float32)],  # f32 accumulator
        compiler_params=pltpu.CompilerParams(
            dimension_semantics=("parallel", "arbitrary")),
    )(x_cm, scale_col, w, gamma_col, beta_col)


def forward(x762, x757, conv_w_bf16, bn_gamma_col, bn_beta_col, eps=1e-3):
    """Replicates M.forward (mul -> 1x1 conv -> training-mode BN) for N == 1.

    conv_w_bf16:  (Cout, Cin) bfloat16, prepared ONCE from the PyTorch
                  (Cout, Cin, 1, 1) f32 weight at model-setup time.
    bn_gamma_col / bn_beta_col: (Cout, 1) float32, prepared once.
    eps defaults to 1e-3, matching BatchNorm2d(384, eps=0.001).
    """
    N, Cin, H, W = x757.shape
    # TODO(synk): N > 1 needs a batch grid axis + cross-batch BN reduction.
    assert N == 1, "fused kernel supports batch size 1 (as in the module spec)"
    # TODO(synk): PyTorch training-mode BN also updates running_mean/running_var
    # (momentum 0.1, unbiased var); only the normalized activation is produced here.
    Cout = conv_w_bf16.shape[0]
    x_cm = x757.reshape(Cin, H * W)          # (Cin, R)   zero-copy
    s_col = x762.reshape(Cin, 1)             # (Cin, 1)   zero-copy
    out_cm = mul_conv_bn(x_cm, s_col, conv_w_bf16, bn_gamma_col, bn_beta_col, eps=eps)
    return out_cm.reshape(1, Cout, H, W)     # zero-copy back to NCHW


if __name__ == "__main__":
    N, Cin, H, W = 1, 2304, 7, 7
    Cout = 384
    eps = 1e-3   # BatchNorm2d(384, eps=0.001)

    key = jax.random.PRNGKey(0)
    k1, k2, k3, k4, k5 = jax.random.split(key, 5)
    x757 = jax.random.normal(k1, (N, Cin, H, W), dtype=jnp.float32)
    x762 = jax.random.normal(k2, (N, Cin, 1, 1), dtype=jnp.float32)
    # Conv2d(2304, 384, 1, bias=False) weight; deterministic small init.
    conv_w = jax.random.normal(k3, (Cout, Cin, 1, 1), dtype=jnp.float32) * (Cin ** -0.5)
    # BatchNorm2d affine params (slightly randomized to exercise the affine path).
    bn_gamma = 1.0 + 0.1 * jax.random.normal(k4, (Cout,), dtype=jnp.float32)
    bn_beta = 0.1 * jax.random.normal(k5, (Cout,), dtype=jnp.float32)

    # Model-setup step (done ONCE, outside the per-call path): weight in matmul
    # layout + bf16, BN affine params as (Cout, 1) f32 columns.
    conv_w_kernel = conv_w.reshape(Cout, Cin).astype(jnp.bfloat16)
    gamma_col = bn_gamma.reshape(Cout, 1)
    beta_col = bn_beta.reshape(Cout, 1)

    out = forward(x762, x757, conv_w_kernel, gamma_col, beta_col, eps=eps)
    out = jax.block_until_ready(out)

    # Pure-f32 reference (same math: mul -> 1x1 conv -> training-mode BN).
    x_mul = x762 * x757
    y_ref = jnp.einsum("nchw,oc->nohw", x_mul, conv_w.reshape(Cout, Cin))
    mean = y_ref.mean(axis=(0, 2, 3), keepdims=True)
    var = ((y_ref - mean) ** 2).mean(axis=(0, 2, 3), keepdims=True)
    ref = (y_ref - mean) * jax.lax.rsqrt(var + eps) * bn_gamma.reshape(1, Cout, 1, 1) \
          + bn_beta.reshape(1, Cout, 1, 1)

    assert out.shape == (N, Cout, H, W)
    err = float(jnp.max(jnp.abs(out - ref)))
    # bf16 matmul operands over a Cin=2304 contraction give a few e-3 max
    # deviation vs. the f32 reference (f32 accumulation + f32 BN keep it bounded).
    assert err < 2e-2, f"max abs error {err}"
    print("KERNEL_OK")
</pallas_src>

<mosaic_0001>
module attributes {stable_mosaic.version = 11 : i64} {
  func.func @_mul_conv_bn_kernel(%arg0: i32, %arg1: i32, %arg2: memref<768x49xf32, #tpu.memory_space<vmem>>, %arg3: memref<768x1xf32, #tpu.memory_space<vmem>>, %arg4: memref<384x768xbf16, #tpu.memory_space<vmem>>, %arg5: memref<384x1xf32, #tpu.memory_space<vmem>>, %arg6: memref<384x1xf32, #tpu.memory_space<vmem>>, %arg7: memref<384x49xf32, #tpu.memory_space<vmem>>, %arg8: memref<384x49xf32, #tpu.memory_space<vmem>>) attributes {dimension_semantics = [#tpu.dimension_semantics<parallel>, #tpu.dimension_semantics<arbitrary>], iteration_bounds = array<i64: 1, 3>, scalar_prefetch = 0 : i64, scratch_operands = 1 : i64, tpu.core_type = #tpu.core_type<tc>, window_params = [{transform_indices = @transform_0, window_bounds = array<i64: 768, 49>}, {transform_indices = @transform_1, window_bounds = array<i64: 768, 1>}, {transform_indices = @transform_2, window_bounds = array<i64: 384, 768>}, {transform_indices = @transform_3, window_bounds = array<i64: 384, 1>}, {transform_indices = @transform_4, window_bounds = array<i64: 384, 1>}, {transform_indices = @transform_5, window_bounds = array<i64: 384, 49>}]} {
    %c0_i32 = arith.constant 0 : i32
    %0 = arith.cmpi eq, %arg1, %c0_i32 : i32
    %1 = arith.extui %0 : i1 to i32
    %c0_i32_0 = arith.constant 0 : i32
    %2 = arith.cmpi ne, %1, %c0_i32_0 : i32
    scf.if %2 {
      %cst_11 = arith.constant 0.000000e+00 : f32
      %16 = vector.broadcast %cst_11 : f32 to vector<384x49xf32>
      %c0_12 = arith.constant 0 : index
      %c0_13 = arith.constant 0 : index
      %17 = vector.load %arg8[%c0_12, %c0_13] : memref<384x49xf32, #tpu.memory_space<vmem>>, vector<384x49xf32>
      tpu.vector_store %arg8[%c0_12, %c0_13], %16 {strides = array<i32>} : memref<384x49xf32, #tpu.memory_space<vmem>>, vector<384x49xf32>,
    } else {
    }
    %c0 = arith.constant 0 : index
    %c0_1 = arith.constant 0 : index
    %3 = vector.load %arg2[%c0, %c0_1] : memref<768x49xf32, #tpu.memory_space<vmem>>, vector<768x49xf32>
    %c0_2 = arith.constant 0 : index
    %c0_3 = arith.constant 0 : index
    %4 = vector.load %arg3[%c0_2, %c0_3] : memref<768x1xf32, #tpu.memory_space<vmem>>, vector<768x1xf32>
    %5 = vector.broadcast %4 : vector<768x1xf32> to vector<768x49xf32>
    %6 = arith.mulf %3, %5 : vector<768x49xf32>
    %7 = arith.truncf %6 : vector<768x49xf32> to vector<768x49xbf16>
    %c0_4 = arith.constant 0 : index
    %c0_5 = arith.constant 0 : index
    %8 = vector.load %arg8[%c0_4, %c0_5] : memref<384x49xf32, #tpu.memory_space<vmem>>, vector<384x49xf32>
    %c0_6 = arith.constant 0 : index
    %c0_7 = arith.constant 0 : index
    %9 = vector.load %arg4[%c0_6, %c0_7] : memref<384x768xbf16, #tpu.memory_space<vmem>>, vector<384x768xbf16>
    %cst = arith.constant dense<0.000000e+00> : vector<384x49xf32>
    %10 = tpu.matmul %9, %7, %cst {dimension_numbers = #tpu.dot_dimension_numbers<[1], [0], [0], [1], [0, 0, 1, 1], [], []>} : vector<384x768xbf16>, vector<768x49xbf16>, vector<384x49xf32> -> vector<384x49xf32>
    %11 = arith.addf %8, %10 : vector<384x49xf32>
    %c0_8 = arith.constant 0 : index
    %c0_9 = arith.constant 0 : index
    %12 = vector.load %arg8[%c0_8, %c0_9] : memref<384x49xf32, #tpu.memory_space<vmem>>, vector<384x49xf32>
    tpu.vector_store %arg8[%c0_8, %c0_9], %11 {strides = array<i32>} : memref<384x49xf32, #tpu.memory_space<vmem>>, vector<384x49xf32>,
    %c2_i32 = arith.constant 2 : i32
    %13 = arith.cmpi eq, %arg1, %c2_i32 : i32
    %14 = arith.extui %13 : i1 to i32
    %c0_i32_10 = arith.constant 0 : i32
    %15 = arith.cmpi ne, %14, %c0_i32_10 : i32
    scf.if %15 {
      %c0_11 = arith.constant 0 : index
      %c0_12 = arith.constant 0 : index
      %16 = vector.load %arg8[%c0_11, %c0_12] : memref<384x49xf32, #tpu.memory_space<vmem>>, vector<384x49xf32>
      %cst_13 = arith.constant dense<0.000000e+00> : vector<384xf32>
      %17 = vector.multi_reduction <add>, %16, %cst_13 [1] : vector<384x49xf32> to vector<384xf32>
      %18 = vector.shape_cast %17 : vector<384xf32> to vector<384x1xf32>
      %cst_14 = arith.constant 0.0204081628 : f32
      %19 = vector.broadcast %cst_14 : f32 to vector<384x1xf32>
      %20 = arith.mulf %18, %19 : vector<384x1xf32>
      %21 = vector.broadcast %20 : vector<384x1xf32> to vector<384x49xf32>
      %22 = arith.subf %16, %21 : vector<384x49xf32>
      %23 = arith.mulf %22, %22 : vector<384x49xf32>
      %cst_15 = arith.constant dense<0.000000e+00> : vector<384xf32>
      %24 = vector.multi_reduction <add>, %23, %cst_15 [1] : vector<384x49xf32> to vector<384xf32>
      %25 = vector.shape_cast %24 : vector<384xf32> to vector<384x1xf32>
      %cst_16 = arith.constant 0.0204081628 : f32
      %26 = vector.broadcast %cst_16 : f32 to vector<384x1xf32>
      %27 = arith.mulf %25, %26 : vector<384x1xf32>
      %c0_17 = arith.constant 0 : index
      %c0_18 = arith.constant 0 : index
      %28 = vector.load %arg5[%c0_17, %c0_18] : memref<384x1xf32, #tpu.memory_space<vmem>>, vector<384x1xf32>
      %cst_19 = arith.constant 1.000000e-03 : f32
      %29 = vector.broadcast %cst_19 : f32 to vector<384x1xf32>
      %30 = arith.addf %27, %29 : vector<384x1xf32>
      %31 = math.rsqrt %30 : vector<384x1xf32>
      %32 = arith.mulf %28, %31 : vector<384x1xf32>
      %33 = vector.broadcast %32 : vector<384x1xf32> to vector<384x49xf32>
      %34 = arith.mulf %22, %33 : vector<384x49xf32>
      %c0_20 = arith.constant 0 : index
      %c0_21 = arith.constant 0 : index
      %35 = vector.load %arg6[%c0_20, %c0_21] : memref<384x1xf32, #tpu.memory_space<vmem>>, vector<384x1xf32>
      %36 = vector.broadcast %35 : vector<384x1xf32> to vector<384x49xf32>
      %37 = arith.addf %34, %36 : vector<384x49xf32>
      %c0_22 = arith.constant 0 : index
      %c0_23 = arith.constant 0 : index
      %38 = vector.load %arg7[%c0_22, %c0_23] : memref<384x49xf32, #tpu.memory_space<vmem>>, vector<384x49xf32>
      tpu.vector_store %arg7[%c0_22, %c0_23], %37 {strides = array<i32>} : memref<384x49xf32, #tpu.memory_space<vmem>>, vector<384x49xf32>,
    } else {
    }
    return
  }
  func.func @transform_0(%arg0: i32, %arg1: i32) -> (i32, i32) {
    %c0_i32 = arith.constant 0 : i32
    %c0_i32_0 = arith.constant 0 : i32
    return %arg1, %c0_i32 : i32, i32
  }
  func.func @transform_1(%arg0: i32, %arg1: i32) -> (i32, i32) {
    %c0_i32 = arith.constant 0 : i32
    %c0_i32_0 = arith.constant 0 : i32
    return %arg1, %c0_i32 : i32, i32
  }
  func.func @transform_2(%arg0: i32, %arg1: i32) -> (i32, i32) {
    %c0_i32 = arith.constant 0 : i32
    return %arg0, %arg1 : i32, i32
  }
  func.func @transform_3(%arg0: i32, %arg1: i32) -> (i32, i32) {
    %c0_i32 = arith.constant 0 : i32
    %c0_i32_0 = arith.constant 0 : i32
    return %arg0, %c0_i32 : i32, i32
  }
  func.func @transform_4(%arg0: i32, %arg1: i32) -> (i32, i32) {
    %c0_i32 = arith.constant 0 : i32
    %c0_i32_0 = arith.constant 0 : i32
    return %arg0, %c0_i32 : i32, i32
  }
  func.func @transform_5(%arg0: i32, %arg1: i32) -> (i32, i32) {
    %c0_i32 = arith.constant 0 : i32
    %c0_i32_0 = arith.constant 0 : i32
    return %arg0, %c0_i32 : i32, i32
  }
}

</mosaic_0001>

<llo_original>
// kernel: tpu_custom_call.1
$region0: #{tpu_custom_call.1}
  #allocation0 [shape = 'u32[]', space=smem, size = 0x4, offset = 0x4, fixed_abs, tag = 'smem constant byte address 0x4 - core index']
  #allocation1 [shape = 'u32[144,128]{1,0:T(1,128)}', space=vmem, size = 0x12000, scoped, tag = 'internal scratch']
  #allocation2 [shape = 'f32[384,49]{1,0:T(8,128)}', space=vmem, size = 0x30000, scoped, tag = 'scratch operand']
  %s0 = inlined_call_operand.vmem [shape: f32[2304,49], index: 0, kind: input, shape index: {}]
  %s1 = inlined_call_operand.vmem [shape: f32[2304,1], index: 1, kind: input, shape index: {}]
  %s2 = inlined_call_operand.vmem [shape: bf16[384,2304], index: 2, kind: input, shape index: {}]
  %s3 = inlined_call_operand.vmem [shape: f32[384,1], index: 3, kind: input, shape index: {}]
  %s4 = inlined_call_operand.vmem [shape: f32[384,1], index: 4, kind: input, shape index: {}]
  %s5 = inlined_call_operand.vmem [shape: f32[384,49], index: 5, kind: output, shape index: {}]
  %s6 = sld [smem:[#allocation0]]
  $region84: #{tpu_custom_call.1} parent=0
    _
  %s8 = ssub.s32 1, %s6
  %s9 = scalar_select 0, %s8, %s6
  $region1: #{tpu_custom_call.1} parent=0
    #allocation3 [shape = 'u8[1179648]{0}', space=vmem, size = 0x120000, scoped, tag = 'input window, operand 2']
    loop: start=0, step=1, limit=5
    $region2: #{tpu_custom_call.1} parent=1 // loop_pre_header
      _
    $region3: #{tpu_custom_call.1} parent=1 // loop_header
      %s11 = sphi 0, %s15
      %p12 = scmp.ge.s32.totalorder %s11, 5
      %s18 = sphi 0, %s30
      %s19 = sphi 0, %s26
      %s20 = sphi 0, %s18
      %s21 = sphi 0, %s19
      %s22 = sphi 0, %s20
      %s23 = sphi 0, %s21
      %s33 = sphi 0, %s35
      %s36 = sphi 0, %s33
      %s37 = sphi 0, %s36
      %s53 = sphi 0, %s37
      %s59 = sphi 0, %s61
      %s62 = sphi 0, %s59
      %s63 = sphi 0, %s62
      %s79 = sphi 0, %s63
      %s87 = sphi 0, %s89
      %s90 = sphi 0, %s87
      %s91 = sphi 0, %s90
      %s107 = sphi 0, %s91
      %s113 = sphi 0, %s115
      %s116 = sphi 0, %s113
      %s117 = sphi 0, %s116
      %s133 = sphi 0, %s117
      %s139 = sphi 0, %s141
      %s142 = sphi 0, %s139
      %s143 = sphi 0, %s142
      %s159 = sphi 0, %s143
      %s165 = sphi 0, %s167
      %s168 = sphi 0, %s165
      %s169 = sphi 0, %s168
      %s185 = sphi 0, %s169
    $region4: #{tpu_custom_call.1} parent=1 // loop_header_branch
      %14 = sbr.rel (%p12) target = $region8
    $region5: #{tpu_custom_call.1} parent=1 // loop_body
      %s16 = ssub.s32 %s11, 1
      %s17 = ssub.s32 %s11, 2
      %s24 = sadd.s32 1, %s19
      %p25 = scmp.ge.s32.totalorder %s24, 3
      %s26 = scalar_select %p25, 0, %s24
      %s27 = sadd.s32 1, %s18
      %s28 = scalar_select %p25, %s27, %s18
      %p29 = scmp.ge.s32.totalorder %s28, 1
      %s30 = scalar_select %p29, 0, %s28
      %s31 = ssub.s32 %s19, %s26
      %p32 = scmp.eq.s32.totalorder %s31, 0
      %s34 = sadd.s32 %s33, 1
      %s35 = scalar_select %p32, %s33, %s34
      %p38 = pneg %p32
      %p39 = scmp.eq.s32.totalorder %s11, 2
      %p40 = por %p38, %p39
      %p41 = scmp.ne.s32.totalorder %s33, %s36
      %p42 = scmp.eq.s32.totalorder %s11, 0
      %p43 = por %p41, %p42
      %p44 = scmp.ne.s32.totalorder %s33, %s36
      %p45 = scmp.eq.s32.totalorder %s16, 2
      %p46 = por %p44, %p45
      %p47 = scmp.ne.s32.totalorder %s36, %s37
      %p48 = scmp.eq.s32.totalorder %s16, 0
      %p49 = por %p47, %p48
      %p50 = scmp.ne.s32.totalorder %s36, %s37
      %p51 = scmp.eq.s32.totalorder %s17, 2
      %p52 = por %p50, %p51
      %p54 = scmp.ne.s32.totalorder %s37, %s53
      %p55 = scmp.eq.s32.totalorder %s17, 0
      %p56 = por %p54, %p55
      %s57 = ssub.s32 %s19, %s26
      %p58 = scmp.eq.s32.totalorder %s57, 0
      %s60 = sadd.s32 %s59, 1
      %s61 = scalar_select %p58, %s59, %s60
      %p64 = pneg %p58
      %p65 = scmp.eq.s32.totalorder %s11, 2
      %p66 = por %p64, %p65
      %p67 = scmp.ne.s32.totalorder %s59, %s62
      %p68 = scmp.eq.s32.totalorder %s11, 0
      %p69 = por %p67, %p68
      %p70 = scmp.ne.s32.totalorder %s59, %s62
      %p71 = scmp.eq.s32.totalorder %s16, 2
      %p72 = por %p70, %p71
      %p73 = scmp.ne.s32.totalorder %s62, %s63
      %p74 = scmp.eq.s32.totalorder %s16, 0
      %p75 = por %p73, %p74
      %p76 = scmp.ne.s32.totalorder %s62, %s63
      %p77 = scmp.eq.s32.totalorder %s17, 2
      %p78 = por %p76, %p77
      %p80 = scmp.ne.s32.totalorder %s63, %s79
      %p81 = scmp.eq.s32.totalorder %s17, 0
      %p82 = por %p80, %p81
      %s83 = ssub.s32 %s18, %s30
      %s84 = ssub.s32 %s19, %s26
      %s85 = sor.u32 %s83, %s84
      %p86 = scmp.eq.s32.totalorder %s85, 0
      %s88 = sadd.s32 %s87, 1
      %s89 = scalar_select %p86, %s87, %s88
      %p92 = pneg %p86
      %p93 = scmp.eq.s32.totalorder %s11, 2
      %p94 = por %p92, %p93
      %p95 = scmp.ne.s32.totalorder %s87, %s90
      %p96 = scmp.eq.s32.totalorder %s11, 0
      %p97 = por %p95, %p96
      %p98 = scmp.ne.s32.totalorder %s87, %s90
      %p99 = scmp.eq.s32.totalorder %s16, 2
      %p100 = por %p98, %p99
      %p101 = scmp.ne.s32.totalorder %s90, %s91
      %p102 = scmp.eq.s32.totalorder %s16, 0
      %p103 = por %p101, %p102
      %p104 = scmp.ne.s32.totalorder %s90, %s91
      %p105 = scmp.eq.s32.totalorder %s17, 2
      %p106 = por %p104, %p105
      %p108 = scmp.ne.s32.totalorder %s91, %s107
      %p109 = scmp.eq.s32.totalorder %s17, 0
      %p110 = por %p108, %p109
      %s111 = ssub.s32 %s18, %s30
      %p112 = scmp.eq.s32.totalorder %s111, 0
      %s114 = sadd.s32 %s113, 1
      %s115 = scalar_select %p112, %s113, %s114
      %p118 = pneg %p112
      %p119 = scmp.eq.s32.totalorder %s11, 2
      %p120 = por %p118, %p119
      %p121 = scmp.ne.s32.totalorder %s113, %s116
      %p122 = scmp.eq.s32.totalorder %s11, 0
      %p123 = por %p121, %p122
      %p124 = scmp.ne.s32.totalorder %s113, %s116
      %p125 = scmp.eq.s32.totalorder %s16, 2
      %p126 = por %p124, %p125
      %p127 = scmp.ne.s32.totalorder %s116, %s117
      %p128 = scmp.eq.s32.totalorder %s16, 0
      %p129 = por %p127, %p128
      %p130 = scmp.ne.s32.totalorder %s116, %s117
      %p131 = scmp.eq.s32.totalorder %s17, 2
      %p132 = por %p130, %p131
      %p134 = scmp.ne.s32.totalorder %s117, %s133
      %p135 = scmp.eq.s32.totalorder %s17, 0
      %p136 = por %p134, %p135
      %s137 = ssub.s32 %s18, %s30
      %p138 = scmp.eq.s32.totalorder %s137, 0
      %s140 = sadd.s32 %s139, 1
      %s141 = scalar_select %p138, %s139, %s140
      %p144 = pneg %p138
      %p145 = scmp.eq.s32.totalorder %s11, 2
      %p146 = por %p144, %p145
      %p147 = scmp.ne.s32.totalorder %s139, %s142
      %p148 = scmp.eq.s32.totalorder %s11, 0
      %p149 = por %p147, %p148
      %p150 = scmp.ne.s32.totalorder %s139, %s142
      %p151 = scmp.eq.s32.totalorder %s16, 2
      %p152 = por %p150, %p151
      %p153 = scmp.ne.s32.totalorder %s142, %s143
      %p154 = scmp.eq.s32.totalorder %s16, 0
      %p155 = por %p153, %p154
      %p156 = scmp.ne.s32.totalorder %s142, %s143
      %p157 = scmp.eq.s32.totalorder %s17, 2
      %p158 = por %p156, %p157
      %p160 = scmp.ne.s32.totalorder %s143, %s159
      %p161 = scmp.eq.s32.totalorder %s17, 0
      %p162 = por %p160, %p161
      %s163 = ssub.s32 %s18, %s30
      %p164 = scmp.eq.s32.totalorder %s163, 0
      %s166 = sadd.s32 %s165, 1
      %s167 = scalar_select %p164, %s165, %s166
      %p170 = pneg %p164
      %p171 = scmp.eq.s32.totalorder %s11, 2
      %p172 = por %p170, %p171
      %p173 = scmp.ne.s32.totalorder %s165, %s168
      %p174 = scmp.eq.s32.totalorder %s11, 0
      %p175 = por %p173, %p174
      %p176 = scmp.ne.s32.totalorder %s165, %s168
      %p177 = scmp.eq.s32.totalorder %s16, 2
      %p178 = por %p176, %p177
      %p179 = scmp.ne.s32.totalorder %s168, %s169
      %p180 = scmp.eq.s32.totalorder %s16, 0
      %p181 = por %p179, %p180
      %p182 = scmp.ne.s32.totalorder %s168, %s169
      %p183 = scmp.eq.s32.totalorder %s17, 2
      %p184 = por %p182, %p183
      %p186 = scmp.ne.s32.totalorder %s169, %s185
      %p187 = scmp.eq.s32.totalorder %s17, 0
      %p188 = por %p186, %p187
      %p189 = scmp.le.s32.totalorder 1, %s11
      %p190 = scmp.lt.s32.totalorder %s11, 4
      %p191 = pnand %p189, %p190
      %p192 = pneg %p191
      // Predicated region
      $region9: #{tpu_custom_call.1} parent=5 // pred_check
        _
      $region10: #{tpu_custom_call.1} parent=5 // pred_check_branch
        %194 = sbr.rel (%p191) target = $region12
      $region11: #{tpu_custom_call.1} parent=5 // pred_region
        %s195 = ssub.s32 %s11, 1
        // Predicated region
        $region13: #{tpu_custom_call.1} parent=11 // pred_check
          %p196 = pneg %p129
        $region14: #{tpu_custom_call.1} parent=11 // pred_check_branch
          %198 = sbr.rel (%p196) target = $region16
        $region15: #{tpu_custom_call.1} parent=11 // pred_region
          %s199 = smul.u32 48, %s20
          %p200 = scmp.lt.s32.totalorder %s199, 47
          %s201 = scalar_select %p200, %s199, 47
          %s202 = smul.addr %s201, 8
          %s203 = scalar_lea.vmem %s3, %s202
          %s204 = smul.u32 48, %s20
        $region16: #{tpu_custom_call.1} parent=11 // pred_fallthru
          _
        // Predicated region
        $region17: #{tpu_custom_call.1} parent=11 // pred_check
          %p205 = pneg %p155
        $region18: #{tpu_custom_call.1} parent=11 // pred_check_branch
          %207 = sbr.rel (%p205) target = $region20
        $region19: #{tpu_custom_call.1} parent=11 // pred_region
          %s208 = smul.u32 48, %s20
          %p209 = scmp.lt.s32.totalorder %s208, 47
          %s210 = scalar_select %p209, %s208, 47
          %s211 = smul.addr %s210, 8
          %s212 = scalar_lea.vmem %s4, %s211
          %s213 = smul.u32 48, %s20
        $region20: #{tpu_custom_call.1} parent=11 // pred_fallthru
          _
      $region12: #{tpu_custom_call.1} parent=5 // pred_fallthru
        _
      %p214 = scmp.lt.s32.totalorder %s11, 3
      // Predicated region
      $region21: #{tpu_custom_call.1} parent=5 // pred_check
        %p215 = pneg %p214
      $region22: #{tpu_custom_call.1} parent=5 // pred_check_branch
        %217 = sbr.rel (%p215) target = $region24
      $region23: #{tpu_custom_call.1} parent=5 // pred_region
        // Predicated region
        $region25: #{tpu_custom_call.1} parent=23 // pred_check
          %p218 = pneg %p43
        $region26: #{tpu_custom_call.1} parent=23 // pred_check_branch
          %220 = sbr.rel (%p218) target = $region28
        $region27: #{tpu_custom_call.1} parent=23 // pred_region
          %s221 = smul.u32 96, %s19
          %p222 = scmp.lt.s32.totalorder %s221, 287
          %s223 = scalar_select %p222, %s221, 287
          %s224 = smul.addr %s223, 8
          %s225 = scalar_lea.vmem %s0, %s224
          %s226 = smul.u32 96, %s19
        $region28: #{tpu_custom_call.1} parent=23 // pred_fallthru
          _
        // Predicated region
        $region29: #{tpu_custom_call.1} parent=23 // pred_check
          %p227 = pneg %p69
        $region30: #{tpu_custom_call.1} parent=23 // pred_check_branch
          %229 = sbr.rel (%p227) target = $region32
        $region31: #{tpu_custom_call.1} parent=23 // pred_region
          %s230 = smul.u32 96, %s19
          %p231 = scmp.lt.s32.totalorder %s230, 287
          %s232 = scalar_select %p231, %s230, 287
          %s233 = smul.addr %s232, 8
          %s234 = scalar_lea.vmem %s1, %s233
          %s235 = smul.u32 96, %s19
        $region32: #{tpu_custom_call.1} parent=23 // pred_fallthru
          _
        // Predicated region
        $region33: #{tpu_custom_call.1} parent=23 // pred_check
          %p236 = pneg %p97
        $region34: #{tpu_custom_call.1} parent=23 // pred_check_branch
          %238 = sbr.rel (%p236) target = $region36
        $region35: #{tpu_custom_call.1} parent=23 // pred_region
          %s239 = sand.u32 %s87, 1
          %s240 = sand.u32 %s87, 1
          %s241 = smul.addr %s240, 1152
          %s242 = scalar_lea.vmem [#allocation3], %s241
          %s243 = smul.u32 48, %s18
          %s244 = smul.u32 6, %s19
          %s245 = smul.addr %s243, 18
          %s246 = sadd.s32 %s244, %s245
          %s247 = smul.addr %s246, 4
          %s248 = scalar_lea.vmem %s2, %s247
          // Predicated region
          $region37: #{tpu_custom_call.1} parent=35 // pred_check
            _
          $region38: #{tpu_custom_call.1} parent=35 // pred_check_branch
            %250 = sbr.rel (0) target = $region40
          $region39: #{tpu_custom_call.1} parent=35 // pred_region
            // Predicated region
            $region41: #{tpu_custom_call.1} parent=39 // pred_check
              _
            $region42: #{tpu_custom_call.1} parent=39 // pred_check_branch
              %252 = sbr.rel (0) target = $region44
            $region43: #{tpu_custom_call.1} parent=39 // pred_region
              loop: start=0, step=1, limit=1
              $region45: #{tpu_custom_call.1} parent=43 // loop_pre_header
                _
              $region46: #{tpu_custom_call.1} parent=43 // loop_header
                %s254 = sphi 0, %s258
                %p255 = scmp.ge.s32.totalorder %s254, 1
                %s259 = sphi %s248, %s248
                %s260 = sphi %s242, %s242
              $region47: #{tpu_custom_call.1} parent=43 // loop_header_branch
                %257 = sbr.rel (%p255) target = $region51
              $region48: #{tpu_custom_call.1} parent=43 // loop_body
                %v261 = vld [vmem:[%s259] sm:$0xff]
                %262 = vst [vmem:[%s260] sm:$0xff] %v261
                %v263 = vld [vmem:[%s259 + $0x8] sm:$0xff]
                %264 = vst [vmem:[%s260 + $0x8] sm:$0xff] %v263
                %v265 = vld [vmem:[%s259 + $0x10] sm:$0xff]
                %266 = vst [vmem:[%s260 + $0x10] sm:$0xff] %v265
                %v267 = vld [vmem:[%s259 + $0x48] sm:$0xff]
                %268 = vst [vmem:[%s260 + $0x18] sm:$0xff] %v267
                %v269 = vld [vmem:[%s259 + $0x50] sm:$0xff]
                %270 = vst [vmem:[%s260 + $0x20] sm:$0xff] %v269
                %v271 = vld [vmem:[%s259 + $0x58] sm:$0xff]
                %272 = vst [vmem:[%s260 + $0x28] sm:$0xff] %v271
                %v273 = vld [vmem:[%s259 + $0x90] sm:$0xff]
                %274 = vst [vmem:[%s260 + $0x30] sm:$0xff] %v273
                %v275 = vld [vmem:[%s259 + $0x98] sm:$0xff]
                %276 = vst [vmem:[%s260 + $0x38] sm:$0xff] %v275
                %v277 = vld [vmem:[%s259 + $0xa0] sm:$0xff]
                %278 = vst [vmem:[%s260 + $0x40] sm:$0xff] %v277
                %v279 = vld [vmem:[%s259 + $0xd8] sm:$0xff]
                %280 = vst [vmem:[%s260 + $0x48] sm:$0xff] %v279
                %v281 = vld [vmem:[%s259 + $0xe0] sm:$0xff]
                %282 = vst [vmem:[%s260 + $0x50] sm:$0xff] %v281
                %v283 = vld [vmem:[%s259 + $0xe8] sm:$0xff]
                %284 = vst [vmem:[%s260 + $0x58] sm:$0xff] %v283
                %v285 = vld [vmem:[%s259 + $0x120] sm:$0xff]
                %286 = vst [vmem:[%s260 + $0x60] sm:$0xff] %v285
                %v287 = vld [vmem:[%s259 + $0x128] sm:$0xff]
                %288 = vst [vmem:[%s260 + $0x68] sm:$0xff] %v287
                %v289 = vld [vmem:[%s259 + $0x130] sm:$0xff]
                %290 = vst [vmem:[%s260 + $0x70] sm:$0xff] %v289
                %v291 = vld [vmem:[%s259 + $0x168] sm:$0xff]
                %292 = vst [vmem:[%s260 + $0x78] sm:$0xff] %v291
                %v293 = vld [vmem:[%s259 + $0x170] sm:$0xff]
                %294 = vst [vmem:[%s260 + $0x80] sm:$0xff] %v293
                %v295 = vld [vmem:[%s259 + $0x178] sm:$0xff]
                %296 = vst [vmem:[%s260 + $0x88] sm:$0xff] %v295
                %v297 = vld [vmem:[%s259 + $0x1b0] sm:$0xff]
                %298 = vst [vmem:[%s260 + $0x90] sm:$0xff] %v297
                %v299 = vld [vmem:[%s259 + $0x1b8] sm:$0xff]
                %300 = vst [vmem:[%s260 + $0x98] sm:$0xff] %v299
                %v301 = vld [vmem:[%s259 + $0x1c0] sm:$0xff]
                %302 = vst [vmem:[%s260 + $0xa0] sm:$0xff] %v301
                %v303 = vld [vmem:[%s259 + $0x1f8] sm:$0xff]
                %304 = vst [vmem:[%s260 + $0xa8] sm:$0xff] %v303
                %v305 = vld [vmem:[%s259 + $0x200] sm:$0xff]
                %306 = vst [vmem:[%s260 + $0xb0] sm:$0xff] %v305
                %v307 = vld [vmem:[%s259 + $0x208] sm:$0xff]
                %308 = vst [vmem:[%s260 + $0xb8] sm:$0xff] %v307
                %v309 = vld [vmem:[%s259 + $0x240] sm:$0xff]
                %310 = vst [vmem:[%s260 + $0xc0] sm:$0xff] %v309
                %v311 = vld [vmem:[%s259 + $0x248] sm:$0xff]
                %312 = vst [vmem:[%s260 + $0xc8] sm:$0xff] %v311
                %v313 = vld [vmem:[%s259 + $0x250] sm:$0xff]
                %314 = vst [vmem:[%s260 + $0xd0] sm:$0xff] %v313
                %v315 = vld [vmem:[%s259 + $0x288] sm:$0xff]
                %316 = vst [vmem:[%s260 + $0xd8] sm:$0xff] %v315
                %v317 = vld [vmem:[%s259 + $0x290] sm:$0xff]
                %318 = vst [vmem:[%s260 + $0xe0] sm:$0xff] %v317
                %v319 = vld [vmem:[%s259 + $0x298] sm:$0xff]
                %320 = vst [vmem:[%s260 + $0xe8] sm:$0xff] %v319
                %v321 = vld [vmem:[%s259 + $0x2d0] sm:$0xff]
                %322 = vst [vmem:[%s260 + $0xf0] sm:$0xff] %v321
                %v323 = vld [vmem:[%s259 + $0x2d8] sm:$0xff]
                %324 = vst [vmem:[%s260 + $0xf8] sm:$0xff] %v323
                %v325 = vld [vmem:[%s259 + $0x2e0] sm:$0xff]
                %326 = vst [vmem:[%s260 + $0x100] sm:$0xff] %v325
                %v327 = vld [vmem:[%s259 + $0x318] sm:$0xff]
                %328 = vst [vmem:[%s260 + $0x108] sm:$0xff] %v327
                %v329 = vld [vmem:[%s259 + $0x320] sm:$0xff]
                %330 = vst [vmem:[%s260 + $0x110] sm:$0xff] %v329
                %v331 = vld [vmem:[%s259 + $0x328] sm:$0xff]
                %332 = vst [vmem:[%s260 + $0x118] sm:$0xff] %v331
                %v333 = vld [vmem:[%s259 + $0x360] sm:$0xff]
                %334 = vst [vmem:[%s260 + $0x120] sm:$0xff] %v333
                %v335 = vld [vmem:[%s259 + $0x368] sm:$0xff]
                %336 = vst [vmem:[%s260 + $0x128] sm:$0xff] %v335
                %v337 = vld [vmem:[%s259 + $0x370] sm:$0xff]
                %338 = vst [vmem:[%s260 + $0x130] sm:$0xff] %v337
                %v339 = vld [vmem:[%s259 + $0x3a8] sm:$0xff]
                %340 = vst [vmem:[%s260 + $0x138] sm:$0xff] %v339
                %v341 = vld [vmem:[%s259 + $0x3b0] sm:$0xff]
                %342 = vst [vmem:[%s260 + $0x140] sm:$0xff] %v341
                %v343 = vld [vmem:[%s259 + $0x3b8] sm:$0xff]
                %344 = vst [vmem:[%s260 + $0x148] sm:$0xff] %v343
                %v345 = vld [vmem:[%s259 + $0x3f0] sm:$0xff]
                %346 = vst [vmem:[%s260 + $0x150] sm:$0xff] %v345
                %v347 = vld [vmem:[%s259 + $0x3f8] sm:$0xff]
                %348 = vst [vmem:[%s260 + $0x158] sm:$0xff] %v347
                %v349 = vld [vmem:[%s259 + $0x400] sm:$0xff]
                %350 = vst [vmem:[%s260 + $0x160] sm:$0xff] %v349
                %v351 = vld [vmem:[%s259 + $0x438] sm:$0xff]
                %352 = vst [vmem:[%s260 + $0x168] sm:$0xff] %v351
                %v353 = vld [vmem:[%s259 + $0x440] sm:$0xff]
                %354 = vst [vmem:[%s260 + $0x170] sm:$0xff] %v353
                %v355 = vld [vmem:[%s259 + $0x448] sm:$0xff]
                %356 = vst [vmem:[%s260 + $0x178] sm:$0xff] %v355
                %v357 = vld [vmem:[%s259 + $0x480] sm:$0xff]
                %358 = vst [vmem:[%s260 + $0x180] sm:$0xff] %v357
                %v359 = vld [vmem:[%s259 + $0x488] sm:$0xff]
                %360 = vst [vmem:[%s260 + $0x188] sm:$0xff] %v359
                %v361 = vld [vmem:[%s259 + $0x490] sm:$0xff]
                %362 = vst [vmem:[%s260 + $0x190] sm:$0xff] %v361
                %v363 = vld [vmem:[%s259 + $0x4c8] sm:$0xff]
                %364 = vst [vmem:[%s260 + $0x198] sm:$0xff] %v363
                %v365 = vld [vmem:[%s259 + $0x4d0] sm:$0xff]
                %366 = vst [vmem:[%s260 + $0x1a0] sm:$0xff] %v365
                %v367 = vld [vmem:[%s259 + $0x4d8] sm:$0xff]
                %368 = vst [vmem:[%s260 + $0x1a8] sm:$0xff] %v367
                %v369 = vld [vmem:[%s259 + $0x510] sm:$0xff]
                %370 = vst [vmem:[%s260 + $0x1b0] sm:$0xff] %v369
                %v371 = vld [vmem:[%s259 + $0x518] sm:$0xff]
                %372 = vst [vmem:[%s260 + $0x1b8] sm:$0xff] %v371
                %v373 = vld [vmem:[%s259 + $0x520] sm:$0xff]
                %374 = vst [vmem:[%s260 + $0x1c0] sm:$0xff] %v373
                %v375 = vld [vmem:[%s259 + $0x558] sm:$0xff]
                %376 = vst [vmem:[%s260 + $0x1c8] sm:$0xff] %v375
                %v377 = vld [vmem:[%s259 + $0x560] sm:$0xff]
                %378 = vst [vmem:[%s260 + $0x1d0] sm:$0xff] %v377
                %v379 = vld [vmem:[%s259 + $0x568] sm:$0xff]
                %380 = vst [vmem:[%s260 + $0x1d8] sm:$0xff] %v379
                %v381 = vld [vmem:[%s259 + $0x5a0] sm:$0xff]
                %382 = vst [vmem:[%s260 + $0x1e0] sm:$0xff] %v381
                %v383 = vld [vmem:[%s259 + $0x5a8] sm:$0xff]
                %384 = vst [vmem:[%s260 + $0x1e8] sm:$0xff] %v383
                %v385 = vld [vmem:[%s259 + $0x5b0] sm:$0xff]
                %386 = vst [vmem:[%s260 + $0x1f0] sm:$0xff] %v385
                %v387 = vld [vmem:[%s259 + $0x5e8] sm:$0xff]
                %388 = vst [vmem:[%s260 + $0x1f8] sm:$0xff] %v387
                %v389 = vld [vmem:[%s259 + $0x5f0] sm:$0xff]
                %390 = vst [vmem:[%s260 + $0x200] sm:$0xff] %v389
                %v391 = vld [vmem:[%s259 + $0x5f8] sm:$0xff]
                %392 = vst [vmem:[%s260 + $0x208] sm:$0xff] %v391
                %v393 = vld [vmem:[%s259 + $0x630] sm:$0xff]
                %394 = vst [vmem:[%s260 + $0x210] sm:$0xff] %v393
                %v395 = vld [vmem:[%s259 + $0x638] sm:$0xff]
                %396 = vst [vmem:[%s260 + $0x218] sm:$0xff] %v395
                %v397 = vld [vmem:[%s259 + $0x640] sm:$0xff]
                %398 = vst [vmem:[%s260 + $0x220] sm:$0xff] %v397
                %v399 = vld [vmem:[%s259 + $0x678] sm:$0xff]
                %400 = vst [vmem:[%s260 + $0x228] sm:$0xff] %v399
                %v401 = vld [vmem:[%s259 + $0x680] sm:$0xff]
                %402 = vst [vmem:[%s260 + $0x230] sm:$0xff] %v401
                %v403 = vld [vmem:[%s259 + $0x688] sm:$0xff]
                %404 = vst [vmem:[%s260 + $0x238] sm:$0xff] %v403
                %v405 = vld [vmem:[%s259 + $0x6c0] sm:$0xff]
                %406 = vst [vmem:[%s260 + $0x240] sm:$0xff] %v405
                %v407 = vld [vmem:[%s259 + $0x6c8] sm:$0xff]
                %408 = vst [vmem:[%s260 + $0x248] sm:$0xff] %v407
                %v409 = vld [vmem:[%s259 + $0x6d0] sm:$0xff]
                %410 = vst [vmem:[%s260 + $0x250] sm:$0xff] %v409
                %v411 = vld [vmem:[%s259 + $0x708] sm:$0xff]
                %412 = vst [vmem:[%s260 + $0x258] sm:$0xff] %v411
                %v413 = vld [vmem:[%s259 + $0x710] sm:$0xff]
                %414 = vst [vmem:[%s260 + $0x260] sm:$0xff] %v413
                %v415 = vld [vmem:[%s259 + $0x718] sm:$0xff]
                %416 = vst [vmem:[%s260 + $0x268] sm:$0xff] %v415
                %v417 = vld [vmem:[%s259 + $0x750] sm:$0xff]
                %418 = vst [vmem:[%s260 + $0x270] sm:$0xff] %v417
                %v419 = vld [vmem:[%s259 + $0x758] sm:$0xff]
                %420 = vst [vmem:[%s260 + $0x278] sm:$0xff] %v419
                %v421 = vld [vmem:[%s259 + $0x760] sm:$0xff]
                %422 = vst [vmem:[%s260 + $0x280] sm:$0xff] %v421
                %v423 = vld [vmem:[%s259 + $0x798] sm:$0xff]
                %424 = vst [vmem:[%s260 + $0x288] sm:$0xff] %v423
                %v425 = vld [vmem:[%s259 + $0x7a0] sm:$0xff]
                %426 = vst [vmem:[%s260 + $0x290] sm:$0xff] %v425
                %v427 = vld [vmem:[%s259 + $0x7a8] sm:$0xff]
                %428 = vst [vmem:[%s260 + $0x298] sm:$0xff] %v427
                %v429 = vld [vmem:[%s259 + $0x7e0] sm:$0xff]
                %430 = vst [vmem:[%s260 + $0x2a0] sm:$0xff] %v429
                %v431 = vld [vmem:[%s259 + $0x7e8] sm:$0xff]
                %432 = vst [vmem:[%s260 + $0x2a8] sm:$0xff] %v431
                %v433 = vld [vmem:[%s259 + $0x7f0] sm:$0xff]
                %434 = vst [vmem:[%s260 + $0x2b0] sm:$0xff] %v433
                %v435 = vld [vmem:[%s259 + $0x828] sm:$0xff]
                %436 = vst [vmem:[%s260 + $0x2b8] sm:$0xff] %v435
                %v437 = vld [vmem:[%s259 + $0x830] sm:$0xff]
                %438 = vst [vmem:[%s260 + $0x2c0] sm:$0xff] %v437
                %v439 = vld [vmem:[%s259 + $0x838] sm:$0xff]
                %440 = vst [vmem:[%s260 + $0x2c8] sm:$0xff] %v439
                %v441 = vld [vmem:[%s259 + $0x870] sm:$0xff]
                %442 = vst [vmem:[%s260 + $0x2d0] sm:$0xff] %v441
                %v443 = vld [vmem:[%s259 + $0x878] sm:$0xff]
                %444 = vst [vmem:[%s260 + $0x2d8] sm:$0xff] %v443
                %v445 = vld [vmem:[%s259 + $0x880] sm:$0xff]
                %446 = vst [vmem:[%s260 + $0x2e0] sm:$0xff] %v445
                %v447 = vld [vmem:[%s259 + $0x8b8] sm:$0xff]
                %448 = vst [vmem:[%s260 + $0x2e8] sm:$0xff] %v447
                %v449 = vld [vmem:[%s259 + $0x8c0] sm:$0xff]
                %450 = vst [vmem:[%s260 + $0x2f0] sm:$0xff] %v449
                %v451 = vld [vmem:[%s259 + $0x8c8] sm:$0xff]
                %452 = vst [vmem:[%s260 + $0x2f8] sm:$0xff] %v451
                %v453 = vld [vmem:[%s259 + $0x900] sm:$0xff]
                %454 = vst [vmem:[%s260 + $0x300] sm:$0xff] %v453
                %v455 = vld [vmem:[%s259 + $0x908] sm:$0xff]
                %456 = vst [vmem:[%s260 + $0x308] sm:$0xff] %v455
                %v457 = vld [vmem:[%s259 + $0x910] sm:$0xff]
                %458 = vst [vmem:[%s260 + $0x310] sm:$0xff] %v457
                %v459 = vld [vmem:[%s259 + $0x948] sm:$0xff]
                %460 = vst [vmem:[%s260 + $0x318] sm:$0xff] %v459
                %v461 = vld [vmem:[%s259 + $0x950] sm:$0xff]
                %462 = vst [vmem:[%s260 + $0x320] sm:$0xff] %v461
                %v463 = vld [vmem:[%s259 + $0x958] sm:$0xff]
                %464 = vst [vmem:[%s260 + $0x328] sm:$0xff] %v463
                %v465 = vld [vmem:[%s259 + $0x990] sm:$0xff]
                %466 = vst [vmem:[%s260 + $0x330] sm:$0xff] %v465
                %v467 = vld [vmem:[%s259 + $0x998] sm:$0xff]
                %468 = vst [vmem:[%s260 + $0x338] sm:$0xff] %v467
                %v469 = vld [vmem:[%s259 + $0x9a0] sm:$0xff]
                %470 = vst [vmem:[%s260 + $0x340] sm:$0xff] %v469
                %v471 = vld [vmem:[%s259 + $0x9d8] sm:$0xff]
                %472 = vst [vmem:[%s260 + $0x348] sm:$0xff] %v471
                %v473 = vld [vmem:[%s259 + $0x9e0] sm:$0xff]
                %474 = vst [vmem:[%s260 + $0x350] sm:$0xff] %v473
                %v475 = vld [vmem:[%s259 + $0x9e8] sm:$0xff]
                %476 = vst [vmem:[%s260 + $0x358] sm:$0xff] %v475
                %v477 = vld [vmem:[%s259 + $0xa20] sm:$0xff]
                %478 = vst [vmem:[%s260 + $0x360] sm:$0xff] %v477
                %v479 = vld [vmem:[%s259 + $0xa28] sm:$0xff]
                %480 = vst [vmem:[%s260 + $0x368] sm:$0xff] %v479
                %v481 = vld [vmem:[%s259 + $0xa30] sm:$0xff]
                %482 = vst [vmem:[%s260 + $0x370] sm:$0xff] %v481
                %v483 = vld [vmem:[%s259 + $0xa68] sm:$0xff]
                %484 = vst [vmem:[%s260 + $0x378] sm:$0xff] %v483
                %v485 = vld [vmem:[%s259 + $0xa70] sm:$0xff]
                %486 = vst [vmem:[%s260 + $0x380] sm:$0xff] %v485
                %v487 = vld [vmem:[%s259 + $0xa78] sm:$0xff]
                %488 = vst [vmem:[%s260 + $0x388] sm:$0xff] %v487
                %v489 = vld [vmem:[%s259 + $0xab0] sm:$0xff]
                %490 = vst [vmem:[%s260 + $0x390] sm:$0xff] %v489
                %v491 = vld [vmem:[%s259 + $0xab8] sm:$0xff]
                %492 = vst [vmem:[%s260 + $0x398] sm:$0xff] %v491
                %v493 = vld [vmem:[%s259 + $0xac0] sm:$0xff]
                %494 = vst [vmem:[%s260 + $0x3a0] sm:$0xff] %v493
                %v495 = vld [vmem:[%s259 + $0xaf8] sm:$0xff]
                %496 = vst [vmem:[%s260 + $0x3a8] sm:$0xff] %v495
                %v497 = vld [vmem:[%s259 + $0xb00] sm:$0xff]
                %498 = vst [vmem:[%s260 + $0x3b0] sm:$0xff] %v497
                %v499 = vld [vmem:[%s259 + $0xb08] sm:$0xff]
                %500 = vst [vmem:[%s260 + $0x3b8] sm:$0xff] %v499
                %v501 = vld [vmem:[%s259 + $0xb40] sm:$0xff]
                %502 = vst [vmem:[%s260 + $0x3c0] sm:$0xff] %v501
                %v503 = vld [vmem:[%s259 + $0xb48] sm:$0xff]
                %504 = vst [vmem:[%s260 + $0x3c8] sm:$0xff] %v503
                %v505 = vld [vmem:[%s259 + $0xb50] sm:$0xff]
                %506 = vst [vmem:[%s260 + $0x3d0] sm:$0xff] %v505
                %v507 = vld [vmem:[%s259 + $0xb88] sm:$0xff]
                %508 = vst [vmem:[%s260 + $0x3d8] sm:$0xff] %v507
                %v509 = vld [vmem:[%s259 + $0xb90] sm:$0xff]
                %510 = vst [vmem:[%s260 + $0x3e0] sm:$0xff] %v509
                %v511 = vld [vmem:[%s259 + $0xb98] sm:$0xff]
                %512 = vst [vmem:[%s260 + $0x3e8] sm:$0xff] %v511
                %v513 = vld [vmem:[%s259 + $0xbd0] sm:$0xff]
                %514 = vst [vmem:[%s260 + $0x3f0] sm:$0xff] %v513
                %v515 = vld [vmem:[%s259 + $0xbd8] sm:$0xff]
                %516 = vst [vmem:[%s260 + $0x3f8] sm:$0xff] %v515
                %v517 = vld [vmem:[%s259 + $0xbe0] sm:$0xff]
                %518 = vst [vmem:[%s260 + $0x400] sm:$0xff] %v517
                %v519 = vld [vmem:[%s259 + $0xc18] sm:$0xff]
                %520 = vst [vmem:[%s260 + $0x408] sm:$0xff] %v519
                %v521 = vld [vmem:[%s259 + $0xc20] sm:$0xff]
                %522 = vst [vmem:[%s260 + $0x410] sm:$0xff] %v521
                %v523 = vld [vmem:[%s259 + $0xc28] sm:$0xff]
                %524 = vst [vmem:[%s260 + $0x418] sm:$0xff] %v523
                %v525 = vld [vmem:[%s259 + $0xc60] sm:$0xff]
                %526 = vst [vmem:[%s260 + $0x420] sm:$0xff] %v525
                %v527 = vld [vmem:[%s259 + $0xc68] sm:$0xff]
                %528 = vst [vmem:[%s260 + $0x428] sm:$0xff] %v527
                %v529 = vld [vmem:[%s259 + $0xc70] sm:$0xff]
                %530 = vst [vmem:[%s260 + $0x430] sm:$0xff] %v529
                %v531 = vld [vmem:[%s259 + $0xca8] sm:$0xff]
                %532 = vst [vmem:[%s260 + $0x438] sm:$0xff] %v531
                %v533 = vld [vmem:[%s259 + $0xcb0] sm:$0xff]
                %534 = vst [vmem:[%s260 + $0x440] sm:$0xff] %v533
                %v535 = vld [vmem:[%s259 + $0xcb8] sm:$0xff]
                %536 = vst [vmem:[%s260 + $0x448] sm:$0xff] %v535
                %v537 = vld [vmem:[%s259 + $0xcf0] sm:$0xff]
                %538 = vst [vmem:[%s260 + $0x450] sm:$0xff] %v537
                %v539 = vld [vmem:[%s259 + $0xcf8] sm:$0xff]
                %540 = vst [vmem:[%s260 + $0x458] sm:$0xff] %v539
                %v541 = vld [vmem:[%s259 + $0xd00] sm:$0xff]
                %542 = vst [vmem:[%s260 + $0x460] sm:$0xff] %v541
                %v543 = vld [vmem:[%s259 + $0xd38] sm:$0xff]
                %544 = vst [vmem:[%s260 + $0x468] sm:$0xff] %v543
                %v545 = vld [vmem:[%s259 + $0xd40] sm:$0xff]
                %546 = vst [vmem:[%s260 + $0x470] sm:$0xff] %v545
                %v547 = vld [vmem:[%s259 + $0xd48] sm:$0xff]
                %548 = vst [vmem:[%s260 + $0x478] sm:$0xff] %v547
              $region49: #{tpu_custom_call.1} parent=43 // loop_footer
                %s258 = sadd.s32 1, %s254
              $region50: #{tpu_custom_call.1} parent=43 // loop_footer_branch
                %253 = sbr.rel target = $region46
              $region51: #{tpu_custom_call.1} parent=43 // loop_exit
                _
            $region44: #{tpu_custom_call.1} parent=39 // pred_fallthru
              _
            // Predicated region
            $region52: #{tpu_custom_call.1} parent=39 // pred_check
              _
            $region53: #{tpu_custom_call.1} parent=39 // pred_check_branch
              %550 = sbr.rel target = $region55
            $region54: #{tpu_custom_call.1} parent=39 // pred_region
              _
            $region55: #{tpu_custom_call.1} parent=39 // pred_fallthru
              _
          $region40: #{tpu_custom_call.1} parent=35 // pred_fallthru
            _
          %551 = vnop
        $region36: #{tpu_custom_call.1} parent=23 // pred_fallthru
          _
      $region24: #{tpu_custom_call.1} parent=5 // pred_fallthru
        _
      %p552 = scmp.le.s32.totalorder 1, %s11
      %p553 = scmp.lt.s32.totalorder %s11, 4
      %p554 = pnand %p552, %p553
      %p555 = pneg %p554
      // Predicated region
      $region56: #{tpu_custom_call.1} parent=5 // pred_check
        _
      $region57: #{tpu_custom_call.1} parent=5 // pred_check_branch
        %557 = sbr.rel (%p554) target = $region59
      $region58: #{tpu_custom_call.1} parent=5 // pred_region
        %s558 = ssub.s32 %s11, 1
        %s559 = sand.u32 %s90, 1
        %s560 = sand.u32 %s90, 1
        %s561 = smul.addr %s560, 1152
        %s562 = scalar_lea.vmem [#allocation3], %s561
        // Predicated region
        $region60: #{tpu_custom_call.1} parent=58 // pred_check
          %p563 = pneg %p103
        $region61: #{tpu_custom_call.1} parent=58 // pred_check_branch
          %565 = sbr.rel (%p563) target = $region63
        $region62: #{tpu_custom_call.1} parent=58 // pred_region
          _
        $region63: #{tpu_custom_call.1} parent=58 // pred_fallthru
          _
        %s566 = smul.u32 96, %s21
        %p567 = scmp.lt.s32.totalorder %s566, 287
        %s568 = scalar_select %p567, %s566, 287
        %s569 = smul.addr %s568, 8
        %s570 = scalar_lea.vmem %s0, %s569
        %p571 = pneg %p49
        %p572 = pneg %p46
        %s573 = smul.u32 96, %s21
        %p574 = scmp.lt.s32.totalorder %s573, 287
        %s575 = scalar_select %p574, %s573, 287
        %s576 = smul.addr %s575, 8
        %s577 = scalar_lea.vmem %s1, %s576
        %p578 = pneg %p75
        %p579 = pneg %p72
        %s580 = sand.u32 %s90, 1
        %s581 = sand.u32 %s90, 1
        %s582 = smul.addr %s581, 1152
        %s583 = scalar_lea.vmem [#allocation3], %s582
        %p584 = pneg %p103
        %p585 = pneg %p100
        %s586 = smul.u32 48, %s20
        %p587 = scmp.lt.s32.totalorder %s586, 47
        %s588 = scalar_select %p587, %s586, 47
        %s589 = smul.addr %s588, 8
        %s590 = scalar_lea.vmem %s3, %s589
        %p591 = pneg %p129
        %p592 = pneg %p126
        %s593 = smul.u32 48, %s20
        %p594 = scmp.lt.s32.totalorder %s593, 47
        %s595 = scalar_select %p594, %s593, 47
        %s596 = smul.addr %s595, 8
        %s597 = scalar_lea.vmem %s4, %s596
        %p598 = pneg %p155
        %p599 = pneg %p152
        %p600 = pneg %p181
        %p601 = pneg %p178
        %s602 = smul.u32 48, %s20
        %p603 = scmp.lt.s32.totalorder %s602, 47
        %s604 = scalar_select %p603, %s602, 47
        %s605 = smul.addr %s604, 8
        %s606 = scalar_lea.vmem %s5, %s605
        %s607 = smul.u32 96, %s21
        %p608 = scmp.lt.s32.totalorder %s607, 287
        %s609 = scalar_select %p608, %s607, 287
        %s610 = smul.addr %s609, 8
        %s611 = scalar_lea.vmem %s0, %s610
        %s612 = smul.u32 96, %s21
        %s613 = smul.u32 96, %s21
        %p614 = scmp.lt.s32.totalorder %s613, 287
        %s615 = scalar_select %p614, %s613, 287
        %s616 = smul.addr %s615, 8
        %s617 = scalar_lea.vmem %s1, %s616
        %s618 = smul.u32 96, %s21
        %s619 = smul.u32 48, %s20
        %s620 = smul.u32 6, %s21
        %s621 = smul.u32 48, %s20
        %p622 = scmp.lt.s32.totalorder %s621, 47
        %s623 = scalar_select %p622, %s621, 47
        %s624 = smul.addr %s623, 8
        %s625 = scalar_lea.vmem %s3, %s624
        %s626 = smul.u32 48, %s20
        %s627 = smul.u32 48, %s20
        %p628 = scmp.lt.s32.totalorder %s627, 47
        %s629 = scalar_select %p628, %s627, 47
        %s630 = smul.addr %s629, 8
        %s631 = scalar_lea.vmem %s4, %s630
        %s632 = smul.u32 48, %s20
        %s633 = smul.u32 48, %s20
        %p634 = scmp.lt.s32.totalorder %s633, 47
        %s635 = scalar_select %p634, %s633, 47
        %s636 = smul.addr %s635, 8
        %s637 = scalar_lea.vmem %s5, %s636
        %s638 = smul.u32 48, %s20
        %p640 = scmp.eq.s32.totalorder %s21, 0
        // Predicated region
        $region64: #{tpu_custom_call.1} parent=58 // pred_check
          %p641 = pneg %p640
        $region65: #{tpu_custom_call.1} parent=58 // pred_check_branch
          %643 = sbr.rel (%p641) target = $region67
        $region66: #{tpu_custom_call.1} parent=58 // pred_region
          %vm644 = vcmask 400384
          %645 = vst.msk [vmem:[#allocation2] sm:$0xff] %vm644, 0.0
          %646 = vst.msk [vmem:[#allocation2 + $0x8] sm:$0xff] %vm644, 0.0
          %647 = vst.msk [vmem:[#allocation2 + $0x10] sm:$0xff] %vm644, 0.0
          %648 = vst.msk [vmem:[#allocation2 + $0x18] sm:$0xff] %vm644, 0.0
          %649 = vst.msk [vmem:[#allocation2 + $0x20] sm:$0xff] %vm644, 0.0
          %650 = vst.msk [vmem:[#allocation2 + $0x28] sm:$0xff] %vm644, 0.0
          %651 = vst.msk [vmem:[#allocation2 + $0x30] sm:$0xff] %vm644, 0.0
          %652 = vst.msk [vmem:[#allocation2 + $0x38] sm:$0xff] %vm644, 0.0
          %653 = vst.msk [vmem:[#allocation2 + $0x40] sm:$0xff] %vm644, 0.0
          %654 = vst.msk [vmem:[#allocation2 + $0x48] sm:$0xff] %vm644, 0.0
          %655 = vst.msk [vmem:[#allocation2 + $0x50] sm:$0xff] %vm644, 0.0
          %656 = vst.msk [vmem:[#allocation2 + $0x58] sm:$0xff] %vm644, 0.0
          %657 = vst.msk [vmem:[#allocation2 + $0x60] sm:$0xff] %vm644, 0.0
          %658 = vst.msk [vmem:[#allocation2 + $0x68] sm:$0xff] %vm644, 0.0
          %659 = vst.msk [vmem:[#allocation2 + $0x70] sm:$0xff] %vm644, 0.0
          %660 = vst.msk [vmem:[#allocation2 + $0x78] sm:$0xff] %vm644, 0.0
          %661 = vst.msk [vmem:[#allocation2 + $0x80] sm:$0xff] %vm644, 0.0
          %662 = vst.msk [vmem:[#allocation2 + $0x88] sm:$0xff] %vm644, 0.0
          %663 = vst.msk [vmem:[#allocation2 + $0x90] sm:$0xff] %vm644, 0.0
          %664 = vst.msk [vmem:[#allocation2 + $0x98] sm:$0xff] %vm644, 0.0
          %665 = vst.msk [vmem:[#allocation2 + $0xa0] sm:$0xff] %vm644, 0.0
          %666 = vst.msk [vmem:[#allocation2 + $0xa8] sm:$0xff] %vm644, 0.0
          %667 = vst.msk [vmem:[#allocation2 + $0xb0] sm:$0xff] %vm644, 0.0
          %668 = vst.msk [vmem:[#allocation2 + $0xb8] sm:$0xff] %vm644, 0.0
          %669 = vst.msk [vmem:[#allocation2 + $0xc0] sm:$0xff] %vm644, 0.0
          %670 = vst.msk [vmem:[#allocation2 + $0xc8] sm:$0xff] %vm644, 0.0
          %671 = vst.msk [vmem:[#allocation2 + $0xd0] sm:$0xff] %vm644, 0.0
          %672 = vst.msk [vmem:[#allocation2 + $0xd8] sm:$0xff] %vm644, 0.0
          %673 = vst.msk [vmem:[#allocation2 + $0xe0] sm:$0xff] %vm644, 0.0
          %674 = vst.msk [vmem:[#allocation2 + $0xe8] sm:$0xff] %vm644, 0.0
          %675 = vst.msk [vmem:[#allocation2 + $0xf0] sm:$0xff] %vm644, 0.0
          %676 = vst.msk [vmem:[#allocation2 + $0xf8] sm:$0xff] %vm644, 0.0
          %677 = vst.msk [vmem:[#allocation2 + $0x100] sm:$0xff] %vm644, 0.0
          %678 = vst.msk [vmem:[#allocation2 + $0x108] sm:$0xff] %vm644, 0.0
          %679 = vst.msk [vmem:[#allocation2 + $0x110] sm:$0xff] %vm644, 0.0
          %680 = vst.msk [vmem:[#allocation2 + $0x118] sm:$0xff] %vm644, 0.0
          %681 = vst.msk [vmem:[#allocation2 + $0x120] sm:$0xff] %vm644, 0.0
          %682 = vst.msk [vmem:[#allocation2 + $0x128] sm:$0xff] %vm644, 0.0
          %683 = vst.msk [vmem:[#allocation2 + $0x130] sm:$0xff] %vm644, 0.0
          %684 = vst.msk [vmem:[#allocation2 + $0x138] sm:$0xff] %vm644, 0.0
          %685 = vst.msk [vmem:[#allocation2 + $0x140] sm:$0xff] %vm644, 0.0
          %686 = vst.msk [vmem:[#allocation2 + $0x148] sm:$0xff] %vm644, 0.0
          %687 = vst.msk [vmem:[#allocation2 + $0x150] sm:$0xff] %vm644, 0.0
          %688 = vst.msk [vmem:[#allocation2 + $0x158] sm:$0xff] %vm644, 0.0
          %689 = vst.msk [vmem:[#allocation2 + $0x160] sm:$0xff] %vm644, 0.0
          %690 = vst.msk [vmem:[#allocation2 + $0x168] sm:$0xff] %vm644, 0.0
          %691 = vst.msk [vmem:[#allocation2 + $0x170] sm:$0xff] %vm644, 0.0
          %692 = vst.msk [vmem:[#allocation2 + $0x178] sm:$0xff] %vm644, 0.0
        $region67: #{tpu_custom_call.1} parent=58 // pred_fallthru
          _
        %v693 = vld [vmem:[%s611] sm:$0xff]
        %v694 = vld [vmem:[%s611 + $0x8] sm:$0xff]
        %v695 = vld [vmem:[%s611 + $0x10] sm:$0xff]
        %v696 = vld [vmem:[%s611 + $0x18] sm:$0xff]
        %v697 = vld [vmem:[%s611 + $0x20] sm:$0xff]
        %v698 = vld [vmem:[%s611 + $0x28] sm:$0xff]
        %v699 = vld [vmem:[%s611 + $0x30] sm:$0xff]
        %v700 = vld [vmem:[%s611 + $0x38] sm:$0xff]
        %v701 = vld [vmem:[%s611 + $0x40] sm:$0xff]
        %v702 = vld [vmem:[%s611 + $0x48] sm:$0xff]
        %v703 = vld [vmem:[%s611 + $0x50] sm:$0xff]
        %v704 = vld [vmem:[%s611 + $0x58] sm:$0xff]
        %v705 = vld [vmem:[%s611 + $0x60] sm:$0xff]
        %v706 = vld [vmem:[%s611 + $0x68] sm:$0xff]
        %v707 = vld [vmem:[%s611 + $0x70] sm:$0xff]
        %v708 = vld [vmem:[%s611 + $0x78] sm:$0xff]
        %v709 = vld [vmem:[%s611 + $0x80] sm:$0xff]
        %v710 = vld [vmem:[%s611 + $0x88] sm:$0xff]
        %v711 = vld [vmem:[%s611 + $0x90] sm:$0xff]
        %v712 = vld [vmem:[%s611 + $0x98] sm:$0xff]
        %v713 = vld [vmem:[%s611 + $0xa0] sm:$0xff]
        %v714 = vld [vmem:[%s611 + $0xa8] sm:$0xff]
        %v715 = vld [vmem:[%s611 + $0xb0] sm:$0xff]
        %v716 = vld [vmem:[%s611 + $0xb8] sm:$0xff]
        %v717 = vld [vmem:[%s611 + $0xc0] sm:$0xff]
        %v718 = vld [vmem:[%s611 + $0xc8] sm:$0xff]
        %v719 = vld [vmem:[%s611 + $0xd0] sm:$0xff]
        %v720 = vld [vmem:[%s611 + $0xd8] sm:$0xff]
        %v721 = vld [vmem:[%s611 + $0xe0] sm:$0xff]
        %v722 = vld [vmem:[%s611 + $0xe8] sm:$0xff]
        %v723 = vld [vmem:[%s611 + $0xf0] sm:$0xff]
        %v724 = vld [vmem:[%s611 + $0xf8] sm:$0xff]
        %v725 = vld [vmem:[%s611 + $0x100] sm:$0xff]
        %v726 = vld [vmem:[%s611 + $0x108] sm:$0xff]
        %v727 = vld [vmem:[%s611 + $0x110] sm:$0xff]
        %v728 = vld [vmem:[%s611 + $0x118] sm:$0xff]
        %v729 = vld [vmem:[%s611 + $0x120] sm:$0xff]
        %v730 = vld [vmem:[%s611 + $0x128] sm:$0xff]
        %v731 = vld [vmem:[%s611 + $0x130] sm:$0xff]
        %v732 = vld [vmem:[%s611 + $0x138] sm:$0xff]
        %v733 = vld [vmem:[%s611 + $0x140] sm:$0xff]
        %v734 = vld [vmem:[%s611 + $0x148] sm:$0xff]
        %v735 = vld [vmem:[%s611 + $0x150] sm:$0xff]
        %v736 = vld [vmem:[%s611 + $0x158] sm:$0xff]
        %v737 = vld [vmem:[%s611 + $0x160] sm:$0xff]
        %v738 = vld [vmem:[%s611 + $0x168] sm:$0xff]
        %v739 = vld [vmem:[%s611 + $0x170] sm:$0xff]
        %v740 = vld [vmem:[%s611 + $0x178] sm:$0xff]
        %v741 = vld [vmem:[%s611 + $0x180] sm:$0xff]
        %v742 = vld [vmem:[%s611 + $0x188] sm:$0xff]
        %v743 = vld [vmem:[%s611 + $0x190] sm:$0xff]
        %v744 = vld [vmem:[%s611 + $0x198] sm:$0xff]
        %v745 = vld [vmem:[%s611 + $0x1a0] sm:$0xff]
        %v746 = vld [vmem:[%s611 + $0x1a8] sm:$0xff]
        %v747 = vld [vmem:[%s611 + $0x1b0] sm:$0xff]
        %v748 = vld [vmem:[%s611 + $0x1b8] sm:$0xff]
        %v749 = vld [vmem:[%s611 + $0x1c0] sm:$0xff]
        %v750 = vld [vmem:[%s611 + $0x1c8] sm:$0xff]
        %v751 = vld [vmem:[%s611 + $0x1d0] sm:$0xff]
        %v752 = vld [vmem:[%s611 + $0x1d8] sm:$0xff]
        %v753 = vld [vmem:[%s611 + $0x1e0] sm:$0xff]
        %v754 = vld [vmem:[%s611 + $0x1e8] sm:$0xff]
        %v755 = vld [vmem:[%s611 + $0x1f0] sm:$0xff]
        %v756 = vld [vmem:[%s611 + $0x1f8] sm:$0xff]
        %v757 = vld [vmem:[%s611 + $0x200] sm:$0xff]
        %v758 = vld [vmem:[%s611 + $0x208] sm:$0xff]
        %v759 = vld [vmem:[%s611 + $0x210] sm:$0xff]
        %v760 = vld [vmem:[%s611 + $0x218] sm:$0xff]
        %v761 = vld [vmem:[%s611 + $0x220] sm:$0xff]
        %v762 = vld [vmem:[%s611 + $0x228] sm:$0xff]
        %v763 = vld [vmem:[%s611 + $0x230] sm:$0xff]
        %v764 = vld [vmem:[%s611 + $0x238] sm:$0xff]
        %v765 = vld [vmem:[%s611 + $0x240] sm:$0xff]
        %v766 = vld [vmem:[%s611 + $0x248] sm:$0xff]
        %v767 = vld [vmem:[%s611 + $0x250] sm:$0xff]
        %v768 = vld [vmem:[%s611 + $0x258] sm:$0xff]
        %v769 = vld [vmem:[%s611 + $0x260] sm:$0xff]
        %v770 = vld [vmem:[%s611 + $0x268] sm:$0xff]
        %v771 = vld [vmem:[%s611 + $0x270] sm:$0xff]
        %v772 = vld [vmem:[%s611 + $0x278] sm:$0xff]
        %v773 = vld [vmem:[%s611 + $0x280] sm:$0xff]
        %v774 = vld [vmem:[%s611 + $0x288] sm:$0xff]
        %v775 = vld [vmem:[%s611 + $0x290] sm:$0xff]
        %v776 = vld [vmem:[%s611 + $0x298] sm:$0xff]
        %v777 = vld [vmem:[%s611 + $0x2a0] sm:$0xff]
        %v778 = vld [vmem:[%s611 + $0x2a8] sm:$0xff]
        %v779 = vld [vmem:[%s611 + $0x2b0] sm:$0xff]
        %v780 = vld [vmem:[%s611 + $0x2b8] sm:$0xff]
        %v781 = vld [vmem:[%s611 + $0x2c0] sm:$0xff]
        %v782 = vld [vmem:[%s611 + $0x2c8] sm:$0xff]
        %v783 = vld [vmem:[%s611 + $0x2d0] sm:$0xff]
        %v784 = vld [vmem:[%s611 + $0x2d8] sm:$0xff]
        %v785 = vld [vmem:[%s611 + $0x2e0] sm:$0xff]
        %v786 = vld [vmem:[%s611 + $0x2e8] sm:$0xff]
        %v787 = vld [vmem:[%s611 + $0x2f0] sm:$0xff]
        %v788 = vld [vmem:[%s611 + $0x2f8] sm:$0xff]
        %v789 = vld [vmem:[%s617] sm:$0xff]
        %v790 = vld [vmem:[%s617 + $0x8] sm:$0xff]
        %v791 = vld [vmem:[%s617 + $0x10] sm:$0xff]
        %v792 = vld [vmem:[%s617 + $0x18] sm:$0xff]
        %v793 = vld [vmem:[%s617 + $0x20] sm:$0xff]
        %v794 = vld [vmem:[%s617 + $0x28] sm:$0xff]
        %v795 = vld [vmem:[%s617 + $0x30] sm:$0xff]
        %v796 = vld [vmem:[%s617 + $0x38] sm:$0xff]
        %v797 = vld [vmem:[%s617 + $0x40] sm:$0xff]
        %v798 = vld [vmem:[%s617 + $0x48] sm:$0xff]
        %v799 = vld [vmem:[%s617 + $0x50] sm:$0xff]
        %v800 = vld [vmem:[%s617 + $0x58] sm:$0xff]
        %v801 = vld [vmem:[%s617 + $0x60] sm:$0xff]
        %v802 = vld [vmem:[%s617 + $0x68] sm:$0xff]
        %v803 = vld [vmem:[%s617 + $0x70] sm:$0xff]
        %v804 = vld [vmem:[%s617 + $0x78] sm:$0xff]
        %v805 = vld [vmem:[%s617 + $0x80] sm:$0xff]
        %v806 = vld [vmem:[%s617 + $0x88] sm:$0xff]
        %v807 = vld [vmem:[%s617 + $0x90] sm:$0xff]
        %v808 = vld [vmem:[%s617 + $0x98] sm:$0xff]
        %v809 = vld [vmem:[%s617 + $0xa0] sm:$0xff]
        %v810 = vld [vmem:[%s617 + $0xa8] sm:$0xff]
        %v811 = vld [vmem:[%s617 + $0xb0] sm:$0xff]
        %v812 = vld [vmem:[%s617 + $0xb8] sm:$0xff]
        %v813 = vld [vmem:[%s617 + $0xc0] sm:$0xff]
        %v814 = vld [vmem:[%s617 + $0xc8] sm:$0xff]
        %v815 = vld [vmem:[%s617 + $0xd0] sm:$0xff]
        %v816 = vld [vmem:[%s617 + $0xd8] sm:$0xff]
        %v817 = vld [vmem:[%s617 + $0xe0] sm:$0xff]
        %v818 = vld [vmem:[%s617 + $0xe8] sm:$0xff]
        %v819 = vld [vmem:[%s617 + $0xf0] sm:$0xff]
        %v820 = vld [vmem:[%s617 + $0xf8] sm:$0xff]
        %v821 = vld [vmem:[%s617 + $0x100] sm:$0xff]
        %v822 = vld [vmem:[%s617 + $0x108] sm:$0xff]
        %v823 = vld [vmem:[%s617 + $0x110] sm:$0xff]
        %v824 = vld [vmem:[%s617 + $0x118] sm:$0xff]
        %v825 = vld [vmem:[%s617 + $0x120] sm:$0xff]
        %v826 = vld [vmem:[%s617 + $0x128] sm:$0xff]
        %v827 = vld [vmem:[%s617 + $0x130] sm:$0xff]
        %v828 = vld [vmem:[%s617 + $0x138] sm:$0xff]
        %v829 = vld [vmem:[%s617 + $0x140] sm:$0xff]
        %v830 = vld [vmem:[%s617 + $0x148] sm:$0xff]
        %v831 = vld [vmem:[%s617 + $0x150] sm:$0xff]
        %v832 = vld [vmem:[%s617 + $0x158] sm:$0xff]
        %v833 = vld [vmem:[%s617 + $0x160] sm:$0xff]
        %v834 = vld [vmem:[%s617 + $0x168] sm:$0xff]
        %v835 = vld [vmem:[%s617 + $0x170] sm:$0xff]
        %v836 = vld [vmem:[%s617 + $0x178] sm:$0xff]
        %v837 = vld [vmem:[%s617 + $0x180] sm:$0xff]
        %v838 = vld [vmem:[%s617 + $0x188] sm:$0xff]
        %v839 = vld [vmem:[%s617 + $0x190] sm:$0xff]
        %v840 = vld [vmem:[%s617 + $0x198] sm:$0xff]
        %v841 = vld [vmem:[%s617 + $0x1a0] sm:$0xff]
        %v842 = vld [vmem:[%s617 + $0x1a8] sm:$0xff]
        %v843 = vld [vmem:[%s617 + $0x1b0] sm:$0xff]
        %v844 = vld [vmem:[%s617 + $0x1b8] sm:$0xff]
        %v845 = vld [vmem:[%s617 + $0x1c0] sm:$0xff]
        %v846 = vld [vmem:[%s617 + $0x1c8] sm:$0xff]
        %v847 = vld [vmem:[%s617 + $0x1d0] sm:$0xff]
        %v848 = vld [vmem:[%s617 + $0x1d8] sm:$0xff]
        %v849 = vld [vmem:[%s617 + $0x1e0] sm:$0xff]
        %v850 = vld [vmem:[%s617 + $0x1e8] sm:$0xff]
        %v851 = vld [vmem:[%s617 + $0x1f0] sm:$0xff]
        %v852 = vld [vmem:[%s617 + $0x1f8] sm:$0xff]
        %v853 = vld [vmem:[%s617 + $0x200] sm:$0xff]
        %v854 = vld [vmem:[%s617 + $0x208] sm:$0xff]
        %v855 = vld [vmem:[%s617 + $0x210] sm:$0xff]
        %v856 = vld [vmem:[%s617 + $0x218] sm:$0xff]
        %v857 = vld [vmem:[%s617 + $0x220] sm:$0xff]
        %v858 = vld [vmem:[%s617 + $0x228] sm:$0xff]
        %v859 = vld [vmem:[%s617 + $0x230] sm:$0xff]
        %v860 = vld [vmem:[%s617 + $0x238] sm:$0xff]
        %v861 = vld [vmem:[%s617 + $0x240] sm:$0xff]
        %v862 = vld [vmem:[%s617 + $0x248] sm:$0xff]
        %v863 = vld [vmem:[%s617 + $0x250] sm:$0xff]
        %v864 = vld [vmem:[%s617 + $0x258] sm:$0xff]
        %v865 = vld [vmem:[%s617 + $0x260] sm:$0xff]
        %v866 = vld [vmem:[%s617 + $0x268] sm:$0xff]
        %v867 = vld [vmem:[%s617 + $0x270] sm:$0xff]
        %v868 = vld [vmem:[%s617 + $0x278] sm:$0xff]
        %v869 = vld [vmem:[%s617 + $0x280] sm:$0xff]
        %v870 = vld [vmem:[%s617 + $0x288] sm:$0xff]
        %v871 = vld [vmem:[%s617 + $0x290] sm:$0xff]
        %v872 = vld [vmem:[%s617 + $0x298] sm:$0xff]
        %v873 = vld [vmem:[%s617 + $0x2a0] sm:$0xff]
        %v874 = vld [vmem:[%s617 + $0x2a8] sm:$0xff]
        %v875 = vld [vmem:[%s617 + $0x2b0] sm:$0xff]
        %v876 = vld [vmem:[%s617 + $0x2b8] sm:$0xff]
        %v877 = vld [vmem:[%s617 + $0x2c0] sm:$0xff]
        %v878 = vld [vmem:[%s617 + $0x2c8] sm:$0xff]
        %v879 = vld [vmem:[%s617 + $0x2d0] sm:$0xff]
        %v880 = vld [vmem:[%s617 + $0x2d8] sm:$0xff]
        %v881 = vld [vmem:[%s617 + $0x2e0] sm:$0xff]
        %v882 = vld [vmem:[%s617 + $0x2e8] sm:$0xff]
        %v883 = vld [vmem:[%s617 + $0x2f0] sm:$0xff]
        %v884 = vld [vmem:[%s617 + $0x2f8] sm:$0xff]
        %886 = vset.pattern.permute.xlu0 0
        %887 = vperm.xlu0 %886, %v789
        %v888 = vpop.permute.xlu0 %887
        %891 = vset.pattern.permute.xlu0 0
        %892 = vperm.xlu0 %891, %v790
        %v893 = vpop.permute.xlu0 %892
        %896 = vset.pattern.permute.xlu0 0
        %897 = vperm.xlu0 %896, %v791
        %v898 = vpop.permute.xlu0 %897
        %901 = vset.pattern.permute.xlu0 0
        %902 = vperm.xlu0 %901, %v792
        %v903 = vpop.permute.xlu0 %902
        %906 = vset.pattern.permute.xlu0 0
        %907 = vperm.xlu0 %906, %v793
        %v908 = vpop.permute.xlu0 %907
        %911 = vset.pattern.permute.xlu0 0
        %912 = vperm.xlu0 %911, %v794
        %v913 = vpop.permute.xlu0 %912
        %916 = vset.pattern.permute.xlu0 0
        %917 = vperm.xlu0 %916, %v795
        %v918 = vpop.permute.xlu0 %917
        %921 = vset.pattern.permute.xlu0 0
        %922 = vperm.xlu0 %921, %v796
        %v923 = vpop.permute.xlu0 %922
        %926 = vset.pattern.permute.xlu0 0
        %927 = vperm.xlu0 %926, %v797
        %v928 = vpop.permute.xlu0 %927
        %931 = vset.pattern.permute.xlu0 0
        %932 = vperm.xlu0 %931, %v798
        %v933 = vpop.permute.xlu0 %932
        %936 = vset.pattern.permute.xlu0 0
        %937 = vperm.xlu0 %936, %v799
        %v938 = vpop.permute.xlu0 %937
        %941 = vset.pattern.permute.xlu0 0
        %942 = vperm.xlu0 %941, %v800
        %v943 = vpop.permute.xlu0 %942
        %946 = vset.pattern.permute.xlu0 0
        %947 = vperm.xlu0 %946, %v801
        %v948 = vpop.permute.xlu0 %947
        %951 = vset.pattern.permute.xlu0 0
        %952 = vperm.xlu0 %951, %v802
        %v953 = vpop.permute.xlu0 %952
        %956 = vset.pattern.permute.xlu0 0
        %957 = vperm.xlu0 %956, %v803
        %v958 = vpop.permute.xlu0 %957
        %961 = vset.pattern.permute.xlu0 0
        %962 = vperm.xlu0 %961, %v804
        %v963 = vpop.permute.xlu0 %962
        %966 = vset.pattern.permute.xlu0 0
        %967 = vperm.xlu0 %966, %v805
        %v968 = vpop.permute.xlu0 %967
        %971 = vset.pattern.permute.xlu0 0
        %972 = vperm.xlu0 %971, %v806
        %v973 = vpop.permute.xlu0 %972
        %976 = vset.pattern.permute.xlu0 0
        %977 = vperm.xlu0 %976, %v807
        %v978 = vpop.permute.xlu0 %977
        %981 = vset.pattern.permute.xlu0 0
        %982 = vperm.xlu0 %981, %v808
        %v983 = vpop.permute.xlu0 %982
        %986 = vset.pattern.permute.xlu0 0
        %987 = vperm.xlu0 %986, %v809
        %v988 = vpop.permute.xlu0 %987
        %991 = vset.pattern.permute.xlu0 0
        %992 = vperm.xlu0 %991, %v810
        %v993 = vpop.permute.xlu0 %992
        %996 = vset.pattern.permute.xlu0 0
        %997 = vperm.xlu0 %996, %v811
        %v998 = vpop.permute.xlu0 %997
        %1001 = vset.pattern.permute.xlu0 0
        %1002 = vperm.xlu0 %1001, %v812
        %v1003 = vpop.permute.xlu0 %1002
        %1006 = vset.pattern.permute.xlu0 0
        %1007 = vperm.xlu0 %1006, %v813
        %v1008 = vpop.permute.xlu0 %1007
        %1011 = vset.pattern.permute.xlu0 0
        %1012 = vperm.xlu0 %1011, %v814
        %v1013 = vpop.permute.xlu0 %1012
        %1016 = vset.pattern.permute.xlu0 0
        %1017 = vperm.xlu0 %1016, %v815
        %v1018 = vpop.permute.xlu0 %1017
        %1021 = vset.pattern.permute.xlu0 0
        %1022 = vperm.xlu0 %1021, %v816
        %v1023 = vpop.permute.xlu0 %1022
        %1026 = vset.pattern.permute.xlu0 0
        %1027 = vperm.xlu0 %1026, %v817
        %v1028 = vpop.permute.xlu0 %1027
        %1031 = vset.pattern.permute.xlu0 0
        %1032 = vperm.xlu0 %1031, %v818
        %v1033 = vpop.permute.xlu0 %1032
        %1036 = vset.pattern.permute.xlu0 0
        %1037 = vperm.xlu0 %1036, %v819
        %v1038 = vpop.permute.xlu0 %1037
        %1041 = vset.pattern.permute.xlu0 0
        %1042 = vperm.xlu0 %1041, %v820
        %v1043 = vpop.permute.xlu0 %1042
        %1046 = vset.pattern.permute.xlu0 0
        %1047 = vperm.xlu0 %1046, %v821
        %v1048 = vpop.permute.xlu0 %1047
        %1051 = vset.pattern.permute.xlu0 0
        %1052 = vperm.xlu0 %1051, %v822
        %v1053 = vpop.permute.xlu0 %1052
        %1056 = vset.pattern.permute.xlu0 0
        %1057 = vperm.xlu0 %1056, %v823
        %v1058 = vpop.permute.xlu0 %1057
        %1061 = vset.pattern.permute.xlu0 0
        %1062 = vperm.xlu0 %1061, %v824
        %v1063 = vpop.permute.xlu0 %1062
        %1066 = vset.pattern.permute.xlu0 0
        %1067 = vperm.xlu0 %1066, %v825
        %v1068 = vpop.permute.xlu0 %1067
        %1071 = vset.pattern.permute.xlu0 0
        %1072 = vperm.xlu0 %1071, %v826
        %v1073 = vpop.permute.xlu0 %1072
        %1076 = vset.pattern.permute.xlu0 0
        %1077 = vperm.xlu0 %1076, %v827
        %v1078 = vpop.permute.xlu0 %1077
        %1081 = vset.pattern.permute.xlu0 0
        %1082 = vperm.xlu0 %1081, %v828
        %v1083 = vpop.permute.xlu0 %1082
        %1086 = vset.pattern.permute.xlu0 0
        %1087 = vperm.xlu0 %1086, %v829
        %v1088 = vpop.permute.xlu0 %1087
        %1091 = vset.pattern.permute.xlu0 0
        %1092 = vperm.xlu0 %1091, %v830
        %v1093 = vpop.permute.xlu0 %1092
        %1096 = vset.pattern.permute.xlu0 0
        %1097 = vperm.xlu0 %1096, %v831
        %v1098 = vpop.permute.xlu0 %1097
        %1101 = vset.pattern.permute.xlu0 0
        %1102 = vperm.xlu0 %1101, %v832
        %v1103 = vpop.permute.xlu0 %1102
        %1106 = vset.pattern.permute.xlu0 0
        %1107 = vperm.xlu0 %1106, %v833
        %v1108 = vpop.permute.xlu0 %1107
        %1111 = vset.pattern.permute.xlu0 0
        %1112 = vperm.xlu0 %1111, %v834
        %v1113 = vpop.permute.xlu0 %1112
        %1116 = vset.pattern.permute.xlu0 0
        %1117 = vperm.xlu0 %1116, %v835
        %v1118 = vpop.permute.xlu0 %1117
        %1121 = vset.pattern.permute.xlu0 0
        %1122 = vperm.xlu0 %1121, %v836
        %v1123 = vpop.permute.xlu0 %1122
        %1126 = vset.pattern.permute.xlu0 0
        %1127 = vperm.xlu0 %1126, %v837
        %v1128 = vpop.permute.xlu0 %1127
        %1131 = vset.pattern.permute.xlu0 0
        %1132 = vperm.xlu0 %1131, %v838
        %v1133 = vpop.permute.xlu0 %1132
        %1136 = vset.pattern.permute.xlu0 0
        %1137 = vperm.xlu0 %1136, %v839
        %v1138 = vpop.permute.xlu0 %1137
        %1141 = vset.pattern.permute.xlu0 0
        %1142 = vperm.xlu0 %1141, %v840
        %v1143 = vpop.permute.xlu0 %1142
        %1146 = vset.pattern.permute.xlu0 0
        %1147 = vperm.xlu0 %1146, %v841
        %v1148 = vpop.permute.xlu0 %1147
        %1151 = vset.pattern.permute.xlu0 0
        %1152 = vperm.xlu0 %1151, %v842
        %v1153 = vpop.permute.xlu0 %1152
        %1156 = vset.pattern.permute.xlu0 0
        %1157 = vperm.xlu0 %1156, %v843
        %v1158 = vpop.permute.xlu0 %1157
        %1161 = vset.pattern.permute.xlu0 0
        %1162 = vperm.xlu0 %1161, %v844
        %v1163 = vpop.permute.xlu0 %1162
        %1166 = vset.pattern.permute.xlu0 0
        %1167 = vperm.xlu0 %1166, %v845
        %v1168 = vpop.permute.xlu0 %1167
        %1171 = vset.pattern.permute.xlu0 0
        %1172 = vperm.xlu0 %1171, %v846
        %v1173 = vpop.permute.xlu0 %1172
        %1176 = vset.pattern.permute.xlu0 0
        %1177 = vperm.xlu0 %1176, %v847
        %v1178 = vpop.permute.xlu0 %1177
        %1181 = vset.pattern.permute.xlu0 0
        %1182 = vperm.xlu0 %1181, %v848
        %v1183 = vpop.permute.xlu0 %1182
        %1186 = vset.pattern.permute.xlu0 0
        %1187 = vperm.xlu0 %1186, %v849
        %v1188 = vpop.permute.xlu0 %1187
        %1191 = vset.pattern.permute.xlu0 0
        %1192 = vperm.xlu0 %1191, %v850
        %v1193 = vpop.permute.xlu0 %1192
        %1196 = vset.pattern.permute.xlu0 0
        %1197 = vperm.xlu0 %1196, %v851
        %v1198 = vpop.permute.xlu0 %1197
        %1201 = vset.pattern.permute.xlu0 0
        %1202 = vperm.xlu0 %1201, %v852
        %v1203 = vpop.permute.xlu0 %1202
        %1206 = vset.pattern.permute.xlu0 0
        %1207 = vperm.xlu0 %1206, %v853
        %v1208 = vpop.permute.xlu0 %1207
        %1211 = vset.pattern.permute.xlu0 0
        %1212 = vperm.xlu0 %1211, %v854
        %v1213 = vpop.permute.xlu0 %1212
        %1216 = vset.pattern.permute.xlu0 0
        %1217 = vperm.xlu0 %1216, %v855
        %v1218 = vpop.permute.xlu0 %1217
        %1221 = vset.pattern.permute.xlu0 0
        %1222 = vperm.xlu0 %1221, %v856
        %v1223 = vpop.permute.xlu0 %1222
        %1226 = vset.pattern.permute.xlu0 0
        %1227 = vperm.xlu0 %1226, %v857
        %v1228 = vpop.permute.xlu0 %1227
        %1231 = vset.pattern.permute.xlu0 0
        %1232 = vperm.xlu0 %1231, %v858
        %v1233 = vpop.permute.xlu0 %1232
        %1236 = vset.pattern.permute.xlu0 0
        %1237 = vperm.xlu0 %1236, %v859
        %v1238 = vpop.permute.xlu0 %1237
        %1241 = vset.pattern.permute.xlu0 0
        %1242 = vperm.xlu0 %1241, %v860
        %v1243 = vpop.permute.xlu0 %1242
        %1246 = vset.pattern.permute.xlu0 0
        %1247 = vperm.xlu0 %1246, %v861
        %v1248 = vpop.permute.xlu0 %1247
        %1251 = vset.pattern.permute.xlu0 0
        %1252 = vperm.xlu0 %1251, %v862
        %v1253 = vpop.permute.xlu0 %1252
        %1256 = vset.pattern.permute.xlu0 0
        %1257 = vperm.xlu0 %1256, %v863
        %v1258 = vpop.permute.xlu0 %1257
        %1261 = vset.pattern.permute.xlu0 0
        %1262 = vperm.xlu0 %1261, %v864
        %v1263 = vpop.permute.xlu0 %1262
        %1266 = vset.pattern.permute.xlu0 0
        %1267 = vperm.xlu0 %1266, %v865
        %v1268 = vpop.permute.xlu0 %1267
        %1271 = vset.pattern.permute.xlu0 0
        %1272 = vperm.xlu0 %1271, %v866
        %v1273 = vpop.permute.xlu0 %1272
        %1276 = vset.pattern.permute.xlu0 0
        %1277 = vperm.xlu0 %1276, %v867
        %v1278 = vpop.permute.xlu0 %1277
        %1281 = vset.pattern.permute.xlu0 0
        %1282 = vperm.xlu0 %1281, %v868
        %v1283 = vpop.permute.xlu0 %1282
        %1286 = vset.pattern.permute.xlu0 0
        %1287 = vperm.xlu0 %1286, %v869
        %v1288 = vpop.permute.xlu0 %1287
        %1291 = vset.pattern.permute.xlu0 0
        %1292 = vperm.xlu0 %1291, %v870
        %v1293 = vpop.permute.xlu0 %1292
        %1296 = vset.pattern.permute.xlu0 0
        %1297 = vperm.xlu0 %1296, %v871
        %v1298 = vpop.permute.xlu0 %1297
        %1301 = vset.pattern.permute.xlu0 0
        %1302 = vperm.xlu0 %1301, %v872
        %v1303 = vpop.permute.xlu0 %1302
        %1306 = vset.pattern.permute.xlu0 0
        %1307 = vperm.xlu0 %1306, %v873
        %v1308 = vpop.permute.xlu0 %1307
        %1311 = vset.pattern.permute.xlu0 0
        %1312 = vperm.xlu0 %1311, %v874
        %v1313 = vpop.permute.xlu0 %1312
        %1316 = vset.pattern.permute.xlu0 0
        %1317 = vperm.xlu0 %1316, %v875
        %v1318 = vpop.permute.xlu0 %1317
        %1321 = vset.pattern.permute.xlu0 0
        %1322 = vperm.xlu0 %1321, %v876
        %v1323 = vpop.permute.xlu0 %1322
        %1326 = vset.pattern.permute.xlu0 0
        %1327 = vperm.xlu0 %1326, %v877
        %v1328 = vpop.permute.xlu0 %1327
        %1331 = vset.pattern.permute.xlu0 0
        %1332 = vperm.xlu0 %1331, %v878
        %v1333 = vpop.permute.xlu0 %1332
        %1336 = vset.pattern.permute.xlu0 0
        %1337 = vperm.xlu0 %1336, %v879
        %v1338 = vpop.permute.xlu0 %1337
        %1341 = vset.pattern.permute.xlu0 0
        %1342 = vperm.xlu0 %1341, %v880
        %v1343 = vpop.permute.xlu0 %1342
        %1346 = vset.pattern.permute.xlu0 0
        %1347 = vperm.xlu0 %1346, %v881
        %v1348 = vpop.permute.xlu0 %1347
        %1351 = vset.pattern.permute.xlu0 0
        %1352 = vperm.xlu0 %1351, %v882
        %v1353 = vpop.permute.xlu0 %1352
        %1356 = vset.pattern.permute.xlu0 0
        %1357 = vperm.xlu0 %1356, %v883
        %v1358 = vpop.permute.xlu0 %1357
        %1361 = vset.pattern.permute.xlu0 0
        %1362 = vperm.xlu0 %1361, %v884
        %v1363 = vpop.permute.xlu0 %1362
        %v1365 = vmul.f32 %v693, %v888
        %v1366 = vmul.f32 %v694, %v893
        %v1367 = vmul.f32 %v695, %v898
        %v1368 = vmul.f32 %v696, %v903
        %v1369 = vmul.f32 %v697, %v908
        %v1370 = vmul.f32 %v698, %v913
        %v1371 = vmul.f32 %v699, %v918
        %v1372 = vmul.f32 %v700, %v923
        %v1373 = vmul.f32 %v701, %v928
        %v1374 = vmul.f32 %v702, %v933
        %v1375 = vmul.f32 %v703, %v938
        %v1376 = vmul.f32 %v704, %v943
        %v1377 = vmul.f32 %v705, %v948
        %v1378 = vmul.f32 %v706, %v953
        %v1379 = vmul.f32 %v707, %v958
        %v1380 = vmul.f32 %v708, %v963
        %v1381 = vmul.f32 %v709, %v968
        %v1382 = vmul.f32 %v710, %v973
        %v1383 = vmul.f32 %v711, %v978
        %v1384 = vmul.f32 %v712, %v983
        %v1385 = vmul.f32 %v713, %v988
        %v1386 = vmul.f32 %v714, %v993
        %v1387 = vmul.f32 %v715, %v998
        %v1388 = vmul.f32 %v716, %v1003
        %v1389 = vmul.f32 %v717, %v1008
        %v1390 = vmul.f32 %v718, %v1013
        %v1391 = vmul.f32 %v719, %v1018
        %v1392 = vmul.f32 %v720, %v1023
        %v1393 = vmul.f32 %v721, %v1028
        %v1394 = vmul.f32 %v722, %v1033
        %v1395 = vmul.f32 %v723, %v1038
        %v1396 = vmul.f32 %v724, %v1043
        %v1397 = vmul.f32 %v725, %v1048
        %v1398 = vmul.f32 %v726, %v1053
        %v1399 = vmul.f32 %v727, %v1058
        %v1400 = vmul.f32 %v728, %v1063
        %v1401 = vmul.f32 %v729, %v1068
        %v1402 = vmul.f32 %v730, %v1073
        %v1403 = vmul.f32 %v731, %v1078
        %v1404 = vmul.f32 %v732, %v1083
        %v1405 = vmul.f32 %v733, %v1088
        %v1406 = vmul.f32 %v734, %v1093
        %v1407 = vmul.f32 %v735, %v1098
        %v1408 = vmul.f32 %v736, %v1103
        %v1409 = vmul.f32 %v737, %v1108
        %v1410 = vmul.f32 %v738, %v1113
        %v1411 = vmul.f32 %v739, %v1118
        %v1412 = vmul.f32 %v740, %v1123
        %v1413 = vmul.f32 %v741, %v1128
        %v1414 = vmul.f32 %v742, %v1133
        %v1415 = vmul.f32 %v743, %v1138
        %v1416 = vmul.f32 %v744, %v1143
        %v1417 = vmul.f32 %v745, %v1148
        %v1418 = vmul.f32 %v746, %v1153
        %v1419 = vmul.f32 %v747, %v1158
        %v1420 = vmul.f32 %v748, %v1163
        %v1421 = vmul.f32 %v749, %v1168
        %v1422 = vmul.f32 %v750, %v1173
        %v1423 = vmul.f32 %v751, %v1178
        %v1424 = vmul.f32 %v752, %v1183
        %v1425 = vmul.f32 %v753, %v1188
        %v1426 = vmul.f32 %v754, %v1193
        %v1427 = vmul.f32 %v755, %v1198
        %v1428 = vmul.f32 %v756, %v1203
        %v1429 = vmul.f32 %v757, %v1208
        %v1430 = vmul.f32 %v758, %v1213
        %v1431 = vmul.f32 %v759, %v1218
        %v1432 = vmul.f32 %v760, %v1223
        %v1433 = vmul.f32 %v761, %v1228
        %v1434 = vmul.f32 %v762, %v1233
        %v1435 = vmul.f32 %v763, %v1238
        %v1436 = vmul.f32 %v764, %v1243
        %v1437 = vmul.f32 %v765, %v1248
        %v1438 = vmul.f32 %v766, %v1253
        %v1439 = vmul.f32 %v767, %v1258
        %v1440 = vmul.f32 %v768, %v1263
        %v1441 = vmul.f32 %v769, %v1268
        %v1442 = vmul.f32 %v770, %v1273
        %v1443 = vmul.f32 %v771, %v1278
        %v1444 = vmul.f32 %v772, %v1283
        %v1445 = vmul.f32 %v773, %v1288
        %v1446 = vmul.f32 %v774, %v1293
        %v1447 = vmul.f32 %v775, %v1298
        %v1448 = vmul.f32 %v776, %v1303
        %v1449 = vmul.f32 %v777, %v1308
        %v1450 = vmul.f32 %v778, %v1313
        %v1451 = vmul.f32 %v779, %v1318
        %v1452 = vmul.f32 %v780, %v1323
        %v1453 = vmul.f32 %v781, %v1328
        %v1454 = vmul.f32 %v782, %v1333
        %v1455 = vmul.f32 %v783, %v1338
        %v1456 = vmul.f32 %v784, %v1343
        %v1457 = vmul.f32 %v785, %v1348
        %v1458 = vmul.f32 %v786, %v1353
        %v1459 = vmul.f32 %v787, %v1358
        %v1460 = vmul.f32 %v788, %v1363
        %v1461 = vpack.c.bf16 %v1366, %v1365
        %v1462 = vpack.c.bf16 %v1368, %v1367
        %v1463 = vpack.c.bf16 %v1370, %v1369
        %v1464 = vpack.c.bf16 %v1372, %v1371
        %v1465 = vpack.c.bf16 %v1374, %v1373
        %v1466 = vpack.c.bf16 %v1376, %v1375
        %v1467 = vpack.c.bf16 %v1378, %v1377
        %v1468 = vpack.c.bf16 %v1380, %v1379
        %v1469 = vpack.c.bf16 %v1382, %v1381
        %v1470 = vpack.c.bf16 %v1384, %v1383
        %v1471 = vpack.c.bf16 %v1386, %v1385
        %v1472 = vpack.c.bf16 %v1388, %v1387
        %v1473 = vpack.c.bf16 %v1390, %v1389
        %v1474 = vpack.c.bf16 %v1392, %v1391
        %v1475 = vpack.c.bf16 %v1394, %v1393
        %v1476 = vpack.c.bf16 %v1396, %v1395
        %v1477 = vpack.c.bf16 %v1398, %v1397
        %v1478 = vpack.c.bf16 %v1400, %v1399
        %v1479 = vpack.c.bf16 %v1402, %v1401
        %v1480 = vpack.c.bf16 %v1404, %v1403
        %v1481 = vpack.c.bf16 %v1406, %v1405
        %v1482 = vpack.c.bf16 %v1408, %v1407
        %v1483 = vpack.c.bf16 %v1410, %v1409
        %v1484 = vpack.c.bf16 %v1412, %v1411
        %v1485 = vpack.c.bf16 %v1414, %v1413
        %v1486 = vpack.c.bf16 %v1416, %v1415
        %v1487 = vpack.c.bf16 %v1418, %v1417
        %v1488 = vpack.c.bf16 %v1420, %v1419
        %v1489 = vpack.c.bf16 %v1422, %v1421
        %v1490 = vpack.c.bf16 %v1424, %v1423
        %v1491 = vpack.c.bf16 %v1426, %v1425
        %v1492 = vpack.c.bf16 %v1428, %v1427
        %v1493 = vpack.c.bf16 %v1430, %v1429
        %v1494 = vpack.c.bf16 %v1432, %v1431
        %v1495 = vpack.c.bf16 %v1434, %v1433
        %v1496 = vpack.c.bf16 %v1436, %v1435
        %v1497 = vpack.c.bf16 %v1438, %v1437
        %v1498 = vpack.c.bf16 %v1440, %v1439
        %v1499 = vpack.c.bf16 %v1442, %v1441
        %v1500 = vpack.c.bf16 %v1444, %v1443
        %v1501 = vpack.c.bf16 %v1446, %v1445
        %v1502 = vpack.c.bf16 %v1448, %v1447
        %v1503 = vpack.c.bf16 %v1450, %v1449
        %v1504 = vpack.c.bf16 %v1452, %v1451
        %v1505 = vpack.c.bf16 %v1454, %v1453
        %v1506 = vpack.c.bf16 %v1456, %v1455
        %v1507 = vpack.c.bf16 %v1458, %v1457
        %v1508 = vpack.c.bf16 %v1460, %v1459
        %v1509 = vld [vmem:[#allocation2] sm:$0xff]
        %v1510 = vld [vmem:[#allocation2 + $0x8] sm:$0xff]
        %v1511 = vld [vmem:[#allocation2 + $0x10] sm:$0xff]
        %v1512 = vld [vmem:[#allocation2 + $0x18] sm:$0xff]
        %v1513 = vld [vmem:[#allocation2 + $0x20] sm:$0xff]
        %v1514 = vld [vmem:[#allocation2 + $0x28] sm:$0xff]
        %v1515 = vld [vmem:[#allocation2 + $0x30] sm:$0xff]
        %v1516 = vld [vmem:[#allocation2 + $0x38] sm:$0xff]
        %v1517 = vld [vmem:[#allocation2 + $0x40] sm:$0xff]
        %v1518 = vld [vmem:[#allocation2 + $0x48] sm:$0xff]
        %v1519 = vld [vmem:[#allocation2 + $0x50] sm:$0xff]
        %v1520 = vld [vmem:[#allocation2 + $0x58] sm:$0xff]
        %v1521 = vld [vmem:[#allocation2 + $0x60] sm:$0xff]
        %v1522 = vld [vmem:[#allocation2 + $0x68] sm:$0xff]
        %v1523 = vld [vmem:[#allocation2 + $0x70] sm:$0xff]
        %v1524 = vld [vmem:[#allocation2 + $0x78] sm:$0xff]
        %v1525 = vld [vmem:[#allocation2 + $0x80] sm:$0xff]
        %v1526 = vld [vmem:[#allocation2 + $0x88] sm:$0xff]
        %v1527 = vld [vmem:[#allocation2 + $0x90] sm:$0xff]
        %v1528 = vld [vmem:[#allocation2 + $0x98] sm:$0xff]
        %v1529 = vld [vmem:[#allocation2 + $0xa0] sm:$0xff]
        %v1530 = vld [vmem:[#allocation2 + $0xa8] sm:$0xff]
        %v1531 = vld [vmem:[#allocation2 + $0xb0] sm:$0xff]
        %v1532 = vld [vmem:[#allocation2 + $0xb8] sm:$0xff]
        %v1533 = vld [vmem:[#allocation2 + $0xc0] sm:$0xff]
        %v1534 = vld [vmem:[#allocation2 + $0xc8] sm:$0xff]
        %v1535 = vld [vmem:[#allocation2 + $0xd0] sm:$0xff]
        %v1536 = vld [vmem:[#allocation2 + $0xd8] sm:$0xff]
        %v1537 = vld [vmem:[#allocation2 + $0xe0] sm:$0xff]
        %v1538 = vld [vmem:[#allocation2 + $0xe8] sm:$0xff]
        %v1539 = vld [vmem:[#allocation2 + $0xf0] sm:$0xff]
        %v1540 = vld [vmem:[#allocation2 + $0xf8] sm:$0xff]
        %v1541 = vld [vmem:[#allocation2 + $0x100] sm:$0xff]
        %v1542 = vld [vmem:[#allocation2 + $0x108] sm:$0xff]
        %v1543 = vld [vmem:[#allocation2 + $0x110] sm:$0xff]
        %v1544 = vld [vmem:[#allocation2 + $0x118] sm:$0xff]
        %v1545 = vld [vmem:[#allocation2 + $0x120] sm:$0xff]
        %v1546 = vld [vmem:[#allocation2 + $0x128] sm:$0xff]
        %v1547 = vld [vmem:[#allocation2 + $0x130] sm:$0xff]
        %v1548 = vld [vmem:[#allocation2 + $0x138] sm:$0xff]
        %v1549 = vld [vmem:[#allocation2 + $0x140] sm:$0xff]
        %v1550 = vld [vmem:[#allocation2 + $0x148] sm:$0xff]
        %v1551 = vld [vmem:[#allocation2 + $0x150] sm:$0xff]
        %v1552 = vld [vmem:[#allocation2 + $0x158] sm:$0xff]
        %v1553 = vld [vmem:[#allocation2 + $0x160] sm:$0xff]
        %v1554 = vld [vmem:[#allocation2 + $0x168] sm:$0xff]
        %v1555 = vld [vmem:[#allocation2 + $0x170] sm:$0xff]
        %v1556 = vld [vmem:[#allocation2 + $0x178] sm:$0xff]
        %v1557 = vld [vmem:[%s562] sm:$0xff]
        %v1558 = vld [vmem:[%s562 + $0x8] sm:$0xff]
        %v1559 = vld [vmem:[%s562 + $0x10] sm:$0xff]
        %v1560 = vld [vmem:[%s562 + $0x18] sm:$0xff]
        %v1561 = vld [vmem:[%s562 + $0x20] sm:$0xff]
        %v1562 = vld [vmem:[%s562 + $0x28] sm:$0xff]
        %v1563 = vld [vmem:[%s562 + $0x30] sm:$0xff]
        %v1564 = vld [vmem:[%s562 + $0x38] sm:$0xff]
        %v1565 = vld [vmem:[%s562 + $0x40] sm:$0xff]
        %v1566 = vld [vmem:[%s562 + $0x48] sm:$0xff]
        %v1567 = vld [vmem:[%s562 + $0x50] sm:$0xff]
        %v1568 = vld [vmem:[%s562 + $0x58] sm:$0xff]
        %v1569 = vld [vmem:[%s562 + $0x60] sm:$0xff]
        %v1570 = vld [vmem:[%s562 + $0x68] sm:$0xff]
        %v1571 = vld [vmem:[%s562 + $0x70] sm:$0xff]
        %v1572 = vld [vmem:[%s562 + $0x78] sm:$0xff]
        %v1573 = vld [vmem:[%s562 + $0x80] sm:$0xff]
        %v1574 = vld [vmem:[%s562 + $0x88] sm:$0xff]
        %v1575 = vld [vmem:[%s562 + $0x90] sm:$0xff]
        %v1576 = vld [vmem:[%s562 + $0x98] sm:$0xff]
        %v1577 = vld [vmem:[%s562 + $0xa0] sm:$0xff]
        %v1578 = vld [vmem:[%s562 + $0xa8] sm:$0xff]
        %v1579 = vld [vmem:[%s562 + $0xb0] sm:$0xff]
        %v1580 = vld [vmem:[%s562 + $0xb8] sm:$0xff]
        %v1581 = vld [vmem:[%s562 + $0xc0] sm:$0xff]
        %v1582 = vld [vmem:[%s562 + $0xc8] sm:$0xff]
        %v1583 = vld [vmem:[%s562 + $0xd0] sm:$0xff]
        %v1584 = vld [vmem:[%s562 + $0xd8] sm:$0xff]
        %v1585 = vld [vmem:[%s562 + $0xe0] sm:$0xff]
        %v1586 = vld [vmem:[%s562 + $0xe8] sm:$0xff]
        %v1587 = vld [vmem:[%s562 + $0xf0] sm:$0xff]
        %v1588 = vld [vmem:[%s562 + $0xf8] sm:$0xff]
        %v1589 = vld [vmem:[%s562 + $0x100] sm:$0xff]
        %v1590 = vld [vmem:[%s562 + $0x108] sm:$0xff]
        %v1591 = vld [vmem:[%s562 + $0x110] sm:$0xff]
        %v1592 = vld [vmem:[%s562 + $0x118] sm:$0xff]
        %v1593 = vld [vmem:[%s562 + $0x120] sm:$0xff]
        %v1594 = vld [vmem:[%s562 + $0x128] sm:$0xff]
        %v1595 = vld [vmem:[%s562 + $0x130] sm:$0xff]
        %v1596 = vld [vmem:[%s562 + $0x138] sm:$0xff]
        %v1597 = vld [vmem:[%s562 + $0x140] sm:$0xff]
        %v1598 = vld [vmem:[%s562 + $0x148] sm:$0xff]
        %v1599 = vld [vmem:[%s562 + $0x150] sm:$0xff]
        %v1600 = vld [vmem:[%s562 + $0x158] sm:$0xff]
        %v1601 = vld [vmem:[%s562 + $0x160] sm:$0xff]
        %v1602 = vld [vmem:[%s562 + $0x168] sm:$0xff]
        %v1603 = vld [vmem:[%s562 + $0x170] sm:$0xff]
        %v1604 = vld [vmem:[%s562 + $0x178] sm:$0xff]
        %v1605 = vld [vmem:[%s562 + $0x180] sm:$0xff]
        %v1606 = vld [vmem:[%s562 + $0x188] sm:$0xff]
        %v1607 = vld [vmem:[%s562 + $0x190] sm:$0xff]
        %v1608 = vld [vmem:[%s562 + $0x198] sm:$0xff]
        %v1609 = vld [vmem:[%s562 + $0x1a0] sm:$0xff]
        %v1610 = vld [vmem:[%s562 + $0x1a8] sm:$0xff]
        %v1611 = vld [vmem:[%s562 + $0x1b0] sm:$0xff]
        %v1612 = vld [vmem:[%s562 + $0x1b8] sm:$0xff]
        %v1613 = vld [vmem:[%s562 + $0x1c0] sm:$0xff]
        %v1614 = vld [vmem:[%s562 + $0x1c8] sm:$0xff]
        %v1615 = vld [vmem:[%s562 + $0x1d0] sm:$0xff]
        %v1616 = vld [vmem:[%s562 + $0x1d8] sm:$0xff]
        %v1617 = vld [vmem:[%s562 + $0x1e0] sm:$0xff]
        %v1618 = vld [vmem:[%s562 + $0x1e8] sm:$0xff]
        %v1619 = vld [vmem:[%s562 + $0x1f0] sm:$0xff]
        %v1620 = vld [vmem:[%s562 + $0x1f8] sm:$0xff]
        %v1621 = vld [vmem:[%s562 + $0x200] sm:$0xff]
        %v1622 = vld [vmem:[%s562 + $0x208] sm:$0xff]
        %v1623 = vld [vmem:[%s562 + $0x210] sm:$0xff]
        %v1624 = vld [vmem:[%s562 + $0x218] sm:$0xff]
        %v1625 = vld [vmem:[%s562 + $0x220] sm:$0xff]
        %v1626 = vld [vmem:[%s562 + $0x228] sm:$0xff]
        %v1627 = vld [vmem:[%s562 + $0x230] sm:$0xff]
        %v1628 = vld [vmem:[%s562 + $0x238] sm:$0xff]
        %v1629 = vld [vmem:[%s562 + $0x240] sm:$0xff]
        %v1630 = vld [vmem:[%s562 + $0x248] sm:$0xff]
        %v1631 = vld [vmem:[%s562 + $0x250] sm:$0xff]
        %v1632 = vld [vmem:[%s562 + $0x258] sm:$0xff]
        %v1633 = vld [vmem:[%s562 + $0x260] sm:$0xff]
        %v1634 = vld [vmem:[%s562 + $0x268] sm:$0xff]
        %v1635 = vld [vmem:[%s562 + $0x270] sm:$0xff]
        %v1636 = vld [vmem:[%s562 + $0x278] sm:$0xff]
        %v1637 = vld [vmem:[%s562 + $0x280] sm:$0xff]
        %v1638 = vld [vmem:[%s562 + $0x288] sm:$0xff]
        %v1639 = vld [vmem:[%s562 + $0x290] sm:$0xff]
        %v1640 = vld [vmem:[%s562 + $0x298] sm:$0xff]
        %v1641 = vld [vmem:[%s562 + $0x2a0] sm:$0xff]
        %v1642 = vld [vmem:[%s562 + $0x2a8] sm:$0xff]
        %v1643 = vld [vmem:[%s562 + $0x2b0] sm:$0xff]
        %v1644 = vld [vmem:[%s562 + $0x2b8] sm:$0xff]
        %v1645 = vld [vmem:[%s562 + $0x2c0] sm:$0xff]
        %v1646 = vld [vmem:[%s562 + $0x2c8] sm:$0xff]
        %v1647 = vld [vmem:[%s562 + $0x2d0] sm:$0xff]
        %v1648 = vld [vmem:[%s562 + $0x2d8] sm:$0xff]
        %v1649 = vld [vmem:[%s562 + $0x2e0] sm:$0xff]
        %v1650 = vld [vmem:[%s562 + $0x2e8] sm:$0xff]
        %v1651 = vld [vmem:[%s562 + $0x2f0] sm:$0xff]
        %v1652 = vld [vmem:[%s562 + $0x2f8] sm:$0xff]
        %v1653 = vld [vmem:[%s562 + $0x300] sm:$0xff]
        %v1654 = vld [vmem:[%s562 + $0x308] sm:$0xff]
        %v1655 = vld [vmem:[%s562 + $0x310] sm:$0xff]
        %v1656 = vld [vmem:[%s562 + $0x318] sm:$0xff]
        %v1657 = vld [vmem:[%s562 + $0x320] sm:$0xff]
        %v1658 = vld [vmem:[%s562 + $0x328] sm:$0xff]
        %v1659 = vld [vmem:[%s562 + $0x330] sm:$0xff]
        %v1660 = vld [vmem:[%s562 + $0x338] sm:$0xff]
        %v1661 = vld [vmem:[%s562 + $0x340] sm:$0xff]
        %v1662 = vld [vmem:[%s562 + $0x348] sm:$0xff]
        %v1663 = vld [vmem:[%s562 + $0x350] sm:$0xff]
        %v1664 = vld [vmem:[%s562 + $0x358] sm:$0xff]
        %v1665 = vld [vmem:[%s562 + $0x360] sm:$0xff]
        %v1666 = vld [vmem:[%s562 + $0x368] sm:$0xff]
        %v1667 = vld [vmem:[%s562 + $0x370] sm:$0xff]
        %v1668 = vld [vmem:[%s562 + $0x378] sm:$0xff]
        %v1669 = vld [vmem:[%s562 + $0x380] sm:$0xff]
        %v1670 = vld [vmem:[%s562 + $0x388] sm:$0xff]
        %v1671 = vld [vmem:[%s562 + $0x390] sm:$0xff]
        %v1672 = vld [vmem:[%s562 + $0x398] sm:$0xff]
        %v1673 = vld [vmem:[%s562 + $0x3a0] sm:$0xff]
        %v1674 = vld [vmem:[%s562 + $0x3a8] sm:$0xff]
        %v1675 = vld [vmem:[%s562 + $0x3b0] sm:$0xff]
        %v1676 = vld [vmem:[%s562 + $0x3b8] sm:$0xff]
        %v1677 = vld [vmem:[%s562 + $0x3c0] sm:$0xff]
        %v1678 = vld [vmem:[%s562 + $0x3c8] sm:$0xff]
        %v1679 = vld [vmem:[%s562 + $0x3d0] sm:$0xff]
        %v1680 = vld [vmem:[%s562 + $0x3d8] sm:$0xff]
        %v1681 = vld [vmem:[%s562 + $0x3e0] sm:$0xff]
        %v1682 = vld [vmem:[%s562 + $0x3e8] sm:$0xff]
        %v1683 = vld [vmem:[%s562 + $0x3f0] sm:$0xff]
        %v1684 = vld [vmem:[%s562 + $0x3f8] sm:$0xff]
        %v1685 = vld [vmem:[%s562 + $0x400] sm:$0xff]
        %v1686 = vld [vmem:[%s562 + $0x408] sm:$0xff]
        %v1687 = vld [vmem:[%s562 + $0x410] sm:$0xff]
        %v1688 = vld [vmem:[%s562 + $0x418] sm:$0xff]
        %v1689 = vld [vmem:[%s562 + $0x420] sm:$0xff]
        %v1690 = vld [vmem:[%s562 + $0x428] sm:$0xff]
        %v1691 = vld [vmem:[%s562 + $0x430] sm:$0xff]
        %v1692 = vld [vmem:[%s562 + $0x438] sm:$0xff]
        %v1693 = vld [vmem:[%s562 + $0x440] sm:$0xff]
        %v1694 = vld [vmem:[%s562 + $0x448] sm:$0xff]
        %v1695 = vld [vmem:[%s562 + $0x450] sm:$0xff]
        %v1696 = vld [vmem:[%s562 + $0x458] sm:$0xff]
        %v1697 = vld [vmem:[%s562 + $0x460] sm:$0xff]
        %v1698 = vld [vmem:[%s562 + $0x468] sm:$0xff]
        %v1699 = vld [vmem:[%s562 + $0x470] sm:$0xff]
        %v1700 = vld [vmem:[%s562 + $0x478] sm:$0xff]
        %v1845 = vunpack.c.l.b16 %v1557
        %v1846 = vunpack.c.h.b16 %v1557
        %v1847 = vunpack.c.l.b16 %v1558
        %v1848 = vunpack.c.h.b16 %v1558
        %v1849 = vunpack.c.l.b16 %v1559
        %v1850 = vunpack.c.h.b16 %v1559
        %v1851 = vunpack.c.l.b16 %v1560
        %v1852 = vunpack.c.h.b16 %v1560
        %v1853 = vunpack.c.l.b16 %v1561
        %v1854 = vunpack.c.h.b16 %v1561
        %v1855 = vunpack.c.l.b16 %v1562
        %v1856 = vunpack.c.h.b16 %v1562
        %v1857 = vunpack.c.l.b16 %v1563
        %v1858 = vunpack.c.h.b16 %v1563
        %v1859 = vunpack.c.l.b16 %v1564
        %v1860 = vunpack.c.h.b16 %v1564
        %v1861 = vunpack.c.l.b16 %v1565
        %v1862 = vunpack.c.h.b16 %v1565
        %v1863 = vunpack.c.l.b16 %v1566
        %v1864 = vunpack.c.h.b16 %v1566
        %v1865 = vunpack.c.l.b16 %v1567
        %v1866 = vunpack.c.h.b16 %v1567
        %v1867 = vunpack.c.l.b16 %v1568
        %v1868 = vunpack.c.h.b16 %v1568
        %v1869 = vunpack.c.l.b16 %v1569
        %v1870 = vunpack.c.h.b16 %v1569
        %v1871 = vunpack.c.l.b16 %v1570
        %v1872 = vunpack.c.h.b16 %v1570
        %v1873 = vunpack.c.l.b16 %v1571
        %v1874 = vunpack.c.h.b16 %v1571
        %v1875 = vunpack.c.l.b16 %v1572
        %v1876 = vunpack.c.h.b16 %v1572
        %v1877 = vunpack.c.l.b16 %v1573
        %v1878 = vunpack.c.h.b16 %v1573
        %v1879 = vunpack.c.l.b16 %v1574
        %v1880 = vunpack.c.h.b16 %v1574
        %v1881 = vunpack.c.l.b16 %v1575
        %v1882 = vunpack.c.h.b16 %v1575
        %v1883 = vunpack.c.l.b16 %v1576
        %v1884 = vunpack.c.h.b16 %v1576
        %v1885 = vunpack.c.l.b16 %v1577
        %v1886 = vunpack.c.h.b16 %v1577
        %v1887 = vunpack.c.l.b16 %v1578
        %v1888 = vunpack.c.h.b16 %v1578
        %v1889 = vunpack.c.l.b16 %v1579
        %v1890 = vunpack.c.h.b16 %v1579
        %v1891 = vunpack.c.l.b16 %v1580
        %v1892 = vunpack.c.h.b16 %v1580
        %v1893 = vunpack.c.l.b16 %v1581
        %v1894 = vunpack.c.h.b16 %v1581
        %v1895 = vunpack.c.l.b16 %v1582
        %v1896 = vunpack.c.h.b16 %v1582
        %v1897 = vunpack.c.l.b16 %v1583
        %v1898 = vunpack.c.h.b16 %v1583
        %v1899 = vunpack.c.l.b16 %v1584
        %v1900 = vunpack.c.h.b16 %v1584
        %v1901 = vunpack.c.l.b16 %v1585
        %v1902 = vunpack.c.h.b16 %v1585
        %v1903 = vunpack.c.l.b16 %v1586
        %v1904 = vunpack.c.h.b16 %v1586
        %v1905 = vunpack.c.l.b16 %v1587
        %v1906 = vunpack.c.h.b16 %v1587
        %v1907 = vunpack.c.l.b16 %v1588
        %v1908 = vunpack.c.h.b16 %v1588
        %v1909 = vunpack.c.l.b16 %v1589
        %v1910 = vunpack.c.h.b16 %v1589
        %v1911 = vunpack.c.l.b16 %v1590
        %v1912 = vunpack.c.h.b16 %v1590
        %v1913 = vunpack.c.l.b16 %v1591
        %v1914 = vunpack.c.h.b16 %v1591
        %v1915 = vunpack.c.l.b16 %v1592
        %v1916 = vunpack.c.h.b16 %v1592
        %v1917 = vunpack.c.l.b16 %v1593
        %v1918 = vunpack.c.h.b16 %v1593
        %v1919 = vunpack.c.l.b16 %v1594
        %v1920 = vunpack.c.h.b16 %v1594
        %v1921 = vunpack.c.l.b16 %v1595
        %v1922 = vunpack.c.h.b16 %v1595
        %v1923 = vunpack.c.l.b16 %v1596
        %v1924 = vunpack.c.h.b16 %v1596
        %v1925 = vunpack.c.l.b16 %v1597
        %v1926 = vunpack.c.h.b16 %v1597
        %v1927 = vunpack.c.l.b16 %v1598
        %v1928 = vunpack.c.h.b16 %v1598
        %v1929 = vunpack.c.l.b16 %v1599
        %v1930 = vunpack.c.h.b16 %v1599
        %v1931 = vunpack.c.l.b16 %v1600
        %v1932 = vunpack.c.h.b16 %v1600
        %v1933 = vunpack.c.l.b16 %v1601
        %v1934 = vunpack.c.h.b16 %v1601
        %v1935 = vunpack.c.l.b16 %v1602
        %v1936 = vunpack.c.h.b16 %v1602
        %v1937 = vunpack.c.l.b16 %v1603
        %v1938 = vunpack.c.h.b16 %v1603
        %v1939 = vunpack.c.l.b16 %v1604
        %v1940 = vunpack.c.h.b16 %v1604
        %v1941 = vunpack.c.l.b16 %v1605
        %v1942 = vunpack.c.h.b16 %v1605
        %v1943 = vunpack.c.l.b16 %v1606
        %v1944 = vunpack.c.h.b16 %v1606
        %v1945 = vunpack.c.l.b16 %v1607
        %v1946 = vunpack.c.h.b16 %v1607
        %v1947 = vunpack.c.l.b16 %v1608
        %v1948 = vunpack.c.h.b16 %v1608
        %v1949 = vunpack.c.l.b16 %v1609
        %v1950 = vunpack.c.h.b16 %v1609
        %v1951 = vunpack.c.l.b16 %v1610
        %v1952 = vunpack.c.h.b16 %v1610
        %v1953 = vunpack.c.l.b16 %v1611
        %v1954 = vunpack.c.h.b16 %v1611
        %v1955 = vunpack.c.l.b16 %v1612
        %v1956 = vunpack.c.h.b16 %v1612
        %v1957 = vunpack.c.l.b16 %v1613
        %v1958 = vunpack.c.h.b16 %v1613
        %v1959 = vunpack.c.l.b16 %v1614
        %v1960 = vunpack.c.h.b16 %v1614
        %v1961 = vunpack.c.l.b16 %v1615
        %v1962 = vunpack.c.h.b16 %v1615
        %v1963 = vunpack.c.l.b16 %v1616
        %v1964 = vunpack.c.h.b16 %v1616
        %v1965 = vunpack.c.l.b16 %v1617
        %v1966 = vunpack.c.h.b16 %v1617
        %v1967 = vunpack.c.l.b16 %v1618
        %v1968 = vunpack.c.h.b16 %v1618
        %v1969 = vunpack.c.l.b16 %v1619
        %v1970 = vunpack.c.h.b16 %v1619
        %v1971 = vunpack.c.l.b16 %v1620
        %v1972 = vunpack.c.h.b16 %v1620
        %v1973 = vunpack.c.l.b16 %v1621
        %v1974 = vunpack.c.h.b16 %v1621
        %v1975 = vunpack.c.l.b16 %v1622
        %v1976 = vunpack.c.h.b16 %v1622
        %v1977 = vunpack.c.l.b16 %v1623
        %v1978 = vunpack.c.h.b16 %v1623
        %v1979 = vunpack.c.l.b16 %v1624
        %v1980 = vunpack.c.h.b16 %v1624
        %v1981 = vunpack.c.l.b16 %v1625
        %v1982 = vunpack.c.h.b16 %v1625
        %v1983 = vunpack.c.l.b16 %v1626
        %v1984 = vunpack.c.h.b16 %v1626
        %v1985 = vunpack.c.l.b16 %v1627
        %v1986 = vunpack.c.h.b16 %v1627
        %v1987 = vunpack.c.l.b16 %v1628
        %v1988 = vunpack.c.h.b16 %v1628
        %v1989 = vunpack.c.l.b16 %v1629
        %v1990 = vunpack.c.h.b16 %v1629
        %v1991 = vunpack.c.l.b16 %v1630
        %v1992 = vunpack.c.h.b16 %v1630
        %v1993 = vunpack.c.l.b16 %v1631
        %v1994 = vunpack.c.h.b16 %v1631
        %v1995 = vunpack.c.l.b16 %v1632
        %v1996 = vunpack.c.h.b16 %v1632
        %v1997 = vunpack.c.l.b16 %v1633
        %v1998 = vunpack.c.h.b16 %v1633
        %v1999 = vunpack.c.l.b16 %v1634
        %v2000 = vunpack.c.h.b16 %v1634
        %v2001 = vunpack.c.l.b16 %v1635
        %v2002 = vunpack.c.h.b16 %v1635
        %v2003 = vunpack.c.l.b16 %v1636
        %v2004 = vunpack.c.h.b16 %v1636
        %v2005 = vunpack.c.l.b16 %v1637
        %v2006 = vunpack.c.h.b16 %v1637
        %v2007 = vunpack.c.l.b16 %v1638
        %v2008 = vunpack.c.h.b16 %v1638
        %v2009 = vunpack.c.l.b16 %v1639
        %v2010 = vunpack.c.h.b16 %v1639
        %v2011 = vunpack.c.l.b16 %v1640
        %v2012 = vunpack.c.h.b16 %v1640
        %v2013 = vunpack.c.l.b16 %v1641
        %v2014 = vunpack.c.h.b16 %v1641
        %v2015 = vunpack.c.l.b16 %v1642
        %v2016 = vunpack.c.h.b16 %v1642
        %v2017 = vunpack.c.l.b16 %v1643
        %v2018 = vunpack.c.h.b16 %v1643
        %v2019 = vunpack.c.l.b16 %v1644
        %v2020 = vunpack.c.h.b16 %v1644
        %v2021 = vunpack.c.l.b16 %v1645
        %v2022 = vunpack.c.h.b16 %v1645
        %v2023 = vunpack.c.l.b16 %v1646
        %v2024 = vunpack.c.h.b16 %v1646
        %v2025 = vunpack.c.l.b16 %v1647
        %v2026 = vunpack.c.h.b16 %v1647
        %v2027 = vunpack.c.l.b16 %v1648
        %v2028 = vunpack.c.h.b16 %v1648
        %v2029 = vunpack.c.l.b16 %v1649
        %v2030 = vunpack.c.h.b16 %v1649
        %v2031 = vunpack.c.l.b16 %v1650
        %v2032 = vunpack.c.h.b16 %v1650
        %v2033 = vunpack.c.l.b16 %v1651
        %v2034 = vunpack.c.h.b16 %v1651
        %v2035 = vunpack.c.l.b16 %v1652
        %v2036 = vunpack.c.h.b16 %v1652
        %v2037 = vunpack.c.l.b16 %v1653
        %v2038 = vunpack.c.h.b16 %v1653
        %v2039 = vunpack.c.l.b16 %v1654
        %v2040 = vunpack.c.h.b16 %v1654
        %v2041 = vunpack.c.l.b16 %v1655
        %v2042 = vunpack.c.h.b16 %v1655
        %v2043 = vunpack.c.l.b16 %v1656
        %v2044 = vunpack.c.h.b16 %v1656
        %v2045 = vunpack.c.l.b16 %v1657
        %v2046 = vunpack.c.h.b16 %v1657
        %v2047 = vunpack.c.l.b16 %v1658
        %v2048 = vunpack.c.h.b16 %v1658
        %v2049 = vunpack.c.l.b16 %v1659
        %v2050 = vunpack.c.h.b16 %v1659
        %v2051 = vunpack.c.l.b16 %v1660
        %v2052 = vunpack.c.h.b16 %v1660
        %v2053 = vunpack.c.l.b16 %v1661
        %v2054 = vunpack.c.h.b16 %v1661
        %v2055 = vunpack.c.l.b16 %v1662
        %v2056 = vunpack.c.h.b16 %v1662
        %v2057 = vunpack.c.l.b16 %v1663
        %v2058 = vunpack.c.h.b16 %v1663
        %v2059 = vunpack.c.l.b16 %v1664
        %v2060 = vunpack.c.h.b16 %v1664
        %v2061 = vunpack.c.l.b16 %v1665
        %v2062 = vunpack.c.h.b16 %v1665
        %v2063 = vunpack.c.l.b16 %v1666
        %v2064 = vunpack.c.h.b16 %v1666
        %v2065 = vunpack.c.l.b16 %v1667
        %v2066 = vunpack.c.h.b16 %v1667
        %v2067 = vunpack.c.l.b16 %v1668
        %v2068 = vunpack.c.h.b16 %v1668
        %v2069 = vunpack.c.l.b16 %v1669
        %v2070 = vunpack.c.h.b16 %v1669
        %v2071 = vunpack.c.l.b16 %v1670
        %v2072 = vunpack.c.h.b16 %v1670
        %v2073 = vunpack.c.l.b16 %v1671
        %v2074 = vunpack.c.h.b16 %v1671
        %v2075 = vunpack.c.l.b16 %v1672
        %v2076 = vunpack.c.h.b16 %v1672
        %v2077 = vunpack.c.l.b16 %v1673
        %v2078 = vunpack.c.h.b16 %v1673
        %v2079 = vunpack.c.l.b16 %v1674
        %v2080 = vunpack.c.h.b16 %v1674
        %v2081 = vunpack.c.l.b16 %v1675
        %v2082 = vunpack.c.h.b16 %v1675
        %v2083 = vunpack.c.l.b16 %v1676
        %v2084 = vunpack.c.h.b16 %v1676
        %v2085 = vunpack.c.l.b16 %v1677
        %v2086 = vunpack.c.h.b16 %v1677
        %v2087 = vunpack.c.l.b16 %v1678
        %v2088 = vunpack.c.h.b16 %v1678
        %v2089 = vunpack.c.l.b16 %v1679
        %v2090 = vunpack.c.h.b16 %v1679
        %v2091 = vunpack.c.l.b16 %v1680
        %v2092 = vunpack.c.h.b16 %v1680
        %v2093 = vunpack.c.l.b16 %v1681
        %v2094 = vunpack.c.h.b16 %v1681
        %v2095 = vunpack.c.l.b16 %v1682
        %v2096 = vunpack.c.h.b16 %v1682
        %v2097 = vunpack.c.l.b16 %v1683
        %v2098 = vunpack.c.h.b16 %v1683
        %v2099 = vunpack.c.l.b16 %v1684
        %v2100 = vunpack.c.h.b16 %v1684
        %v2101 = vunpack.c.l.b16 %v1685
        %v2102 = vunpack.c.h.b16 %v1685
        %v2103 = vunpack.c.l.b16 %v1686
        %v2104 = vunpack.c.h.b16 %v1686
        %v2105 = vunpack.c.l.b16 %v1687
        %v2106 = vunpack.c.h.b16 %v1687
        %v2107 = vunpack.c.l.b16 %v1688
        %v2108 = vunpack.c.h.b16 %v1688
        %v2109 = vunpack.c.l.b16 %v1689
        %v2110 = vunpack.c.h.b16 %v1689
        %v2111 = vunpack.c.l.b16 %v1690
        %v2112 = vunpack.c.h.b16 %v1690
        %v2113 = vunpack.c.l.b16 %v1691
        %v2114 = vunpack.c.h.b16 %v1691
        %v2115 = vunpack.c.l.b16 %v1692
        %v2116 = vunpack.c.h.b16 %v1692
        %v2117 = vunpack.c.l.b16 %v1693
        %v2118 = vunpack.c.h.b16 %v1693
        %v2119 = vunpack.c.l.b16 %v1694
        %v2120 = vunpack.c.h.b16 %v1694
        %v2121 = vunpack.c.l.b16 %v1695
        %v2122 = vunpack.c.h.b16 %v1695
        %v2123 = vunpack.c.l.b16 %v1696
        %v2124 = vunpack.c.h.b16 %v1696
        %v2125 = vunpack.c.l.b16 %v1697
        %v2126 = vunpack.c.h.b16 %v1697
        %v2127 = vunpack.c.l.b16 %v1698
        %v2128 = vunpack.c.h.b16 %v1698
        %v2129 = vunpack.c.l.b16 %v1699
        %v2130 = vunpack.c.h.b16 %v1699
        %v2131 = vunpack.c.l.b16 %v1700
        %v2132 = vunpack.c.h.b16 %v1700
        %v2133 = vpack.c.b16 %v1851, %v1845
        %v2134 = vpack.c.b16 %v1852, %v1846
        %v2135 = vpack.c.b16 %v1853, %v1847
        %v2136 = vpack.c.b16 %v1854, %v1848
        %v2137 = vpack.c.b16 %v1855, %v1849
        %v2138 = vpack.c.b16 %v1856, %v1850
        %v2139 = vpack.c.b16 %v1863, %v1857
        %v2140 = vpack.c.b16 %v1864, %v1858
        %v2141 = vpack.c.b16 %v1865, %v1859
        %v2142 = vpack.c.b16 %v1866, %v1860
        %v2143 = vpack.c.b16 %v1867, %v1861
        %v2144 = vpack.c.b16 %v1868, %v1862
        %v2145 = vpack.c.b16 %v1875, %v1869
        %v2146 = vpack.c.b16 %v1876, %v1870
        %v2147 = vpack.c.b16 %v1877, %v1871
        %v2148 = vpack.c.b16 %v1878, %v1872
        %v2149 = vpack.c.b16 %v1879, %v1873
        %v2150 = vpack.c.b16 %v1880, %v1874
        %v2151 = vpack.c.b16 %v1887, %v1881
        %v2152 = vpack.c.b16 %v1888, %v1882
        %v2153 = vpack.c.b16 %v1889, %v1883
        %v2154 = vpack.c.b16 %v1890, %v1884
        %v2155 = vpack.c.b16 %v1891, %v1885
        %v2156 = vpack.c.b16 %v1892, %v1886
        %v2157 = vpack.c.b16 %v1899, %v1893
        %v2158 = vpack.c.b16 %v1900, %v1894
        %v2159 = vpack.c.b16 %v1901, %v1895
        %v2160 = vpack.c.b16 %v1902, %v1896
        %v2161 = vpack.c.b16 %v1903, %v1897
        %v2162 = vpack.c.b16 %v1904, %v1898
        %v2163 = vpack.c.b16 %v1911, %v1905
        %v2164 = vpack.c.b16 %v1912, %v1906
        %v2165 = vpack.c.b16 %v1913, %v1907
        %v2166 = vpack.c.b16 %v1914, %v1908
        %v2167 = vpack.c.b16 %v1915, %v1909
        %v2168 = vpack.c.b16 %v1916, %v1910
        %v2169 = vpack.c.b16 %v1923, %v1917
        %v2170 = vpack.c.b16 %v1924, %v1918
        %v2171 = vpack.c.b16 %v1925, %v1919
        %v2172 = vpack.c.b16 %v1926, %v1920
        %v2173 = vpack.c.b16 %v1927, %v1921
        %v2174 = vpack.c.b16 %v1928, %v1922
        %v2175 = vpack.c.b16 %v1935, %v1929
        %v2176 = vpack.c.b16 %v1936, %v1930
        %v2177 = vpack.c.b16 %v1937, %v1931
        %v2178 = vpack.c.b16 %v1938, %v1932
        %v2179 = vpack.c.b16 %v1939, %v1933
        %v2180 = vpack.c.b16 %v1940, %v1934
        %v2181 = vpack.c.b16 %v1947, %v1941
        %v2182 = vpack.c.b16 %v1948, %v1942
        %v2183 = vpack.c.b16 %v1949, %v1943
        %v2184 = vpack.c.b16 %v1950, %v1944
        %v2185 = vpack.c.b16 %v1951, %v1945
        %v2186 = vpack.c.b16 %v1952, %v1946
        %v2187 = vpack.c.b16 %v1959, %v1953
        %v2188 = vpack.c.b16 %v1960, %v1954
        %v2189 = vpack.c.b16 %v1961, %v1955
        %v2190 = vpack.c.b16 %v1962, %v1956
        %v2191 = vpack.c.b16 %v1963, %v1957
        %v2192 = vpack.c.b16 %v1964, %v1958
        %v2193 = vpack.c.b16 %v1971, %v1965
        %v2194 = vpack.c.b16 %v1972, %v1966
        %v2195 = vpack.c.b16 %v1973, %v1967
        %v2196 = vpack.c.b16 %v1974, %v1968
        %v2197 = vpack.c.b16 %v1975, %v1969
        %v2198 = vpack.c.b16 %v1976, %v1970
        %v2199 = vpack.c.b16 %v1983, %v1977
        %v2200 = vpack.c.b16 %v1984, %v1978
        %v2201 = vpack.c.b16 %v1985, %v1979
        %v2202 = vpack.c.b16 %v1986, %v1980
        %v2203 = vpack.c.b16 %v1987, %v1981
        %v2204 = vpack.c.b16 %v1988, %v1982
        %v2205 = vpack.c.b16 %v1995, %v1989
        %v2206 = vpack.c.b16 %v1996, %v1990
        %v2207 = vpack.c.b16 %v1997, %v1991
        %v2208 = vpack.c.b16 %v1998, %v1992
        %v2209 = vpack.c.b16 %v1999, %v1993
        %v2210 = vpack.c.b16 %v2000, %v1994
        %v2211 = vpack.c.b16 %v2007, %v2001
        %v2212 = vpack.c.b16 %v2008, %v2002
        %v2213 = vpack.c.b16 %v2009, %v2003
        %v2214 = vpack.c.b16 %v2010, %v2004
        %v2215 = vpack.c.b16 %v2011, %v2005
        %v2216 = vpack.c.b16 %v2012, %v2006
        %v2217 = vpack.c.b16 %v2019, %v2013
        %v2218 = vpack.c.b16 %v2020, %v2014
        %v2219 = vpack.c.b16 %v2021, %v2015
        %v2220 = vpack.c.b16 %v2022, %v2016
        %v2221 = vpack.c.b16 %v2023, %v2017
        %v2222 = vpack.c.b16 %v2024, %v2018
        %v2223 = vpack.c.b16 %v2031, %v2025
        %v2224 = vpack.c.b16 %v2032, %v2026
        %v2225 = vpack.c.b16 %v2033, %v2027
        %v2226 = vpack.c.b16 %v2034, %v2028
        %v2227 = vpack.c.b16 %v2035, %v2029
        %v2228 = vpack.c.b16 %v2036, %v2030
        %v2229 = vpack.c.b16 %v2043, %v2037
        %v2230 = vpack.c.b16 %v2044, %v2038
        %v2231 = vpack.c.b16 %v2045, %v2039
        %v2232 = vpack.c.b16 %v2046, %v2040
        %v2233 = vpack.c.b16 %v2047, %v2041
        %v2234 = vpack.c.b16 %v2048, %v2042
        %v2235 = vpack.c.b16 %v2055, %v2049
        %v2236 = vpack.c.b16 %v2056, %v2050
        %v2237 = vpack.c.b16 %v2057, %v2051
        %v2238 = vpack.c.b16 %v2058, %v2052
        %v2239 = vpack.c.b16 %v2059, %v2053
        %v2240 = vpack.c.b16 %v2060, %v2054
        %v2241 = vpack.c.b16 %v2067, %v2061
        %v2242 = vpack.c.b16 %v2068, %v2062
        %v2243 = vpack.c.b16 %v2069, %v2063
        %v2244 = vpack.c.b16 %v2070, %v2064
        %v2245 = vpack.c.b16 %v2071, %v2065
        %v2246 = vpack.c.b16 %v2072, %v2066
        %v2247 = vpack.c.b16 %v2079, %v2073
        %v2248 = vpack.c.b16 %v2080, %v2074
        %v2249 = vpack.c.b16 %v2081, %v2075
        %v2250 = vpack.c.b16 %v2082, %v2076
        %v2251 = vpack.c.b16 %v2083, %v2077
        %v2252 = vpack.c.b16 %v2084, %v2078
        %v2253 = vpack.c.b16 %v2091, %v2085
        %v2254 = vpack.c.b16 %v2092, %v2086
        %v2255 = vpack.c.b16 %v2093, %v2087
        %v2256 = vpack.c.b16 %v2094, %v2088
        %v2257 = vpack.c.b16 %v2095, %v2089
        %v2258 = vpack.c.b16 %v2096, %v2090
        %v2259 = vpack.c.b16 %v2103, %v2097
        %v2260 = vpack.c.b16 %v2104, %v2098
        %v2261 = vpack.c.b16 %v2105, %v2099
        %v2262 = vpack.c.b16 %v2106, %v2100
        %v2263 = vpack.c.b16 %v2107, %v2101
        %v2264 = vpack.c.b16 %v2108, %v2102
        %v2265 = vpack.c.b16 %v2115, %v2109
        %v2266 = vpack.c.b16 %v2116, %v2110
        %v2267 = vpack.c.b16 %v2117, %v2111
        %v2268 = vpack.c.b16 %v2118, %v2112
        %v2269 = vpack.c.b16 %v2119, %v2113
        %v2270 = vpack.c.b16 %v2120, %v2114
        %v2271 = vpack.c.b16 %v2127, %v2121
        %v2272 = vpack.c.b16 %v2128, %v2122
        %v2273 = vpack.c.b16 %v2129, %v2123
        %v2274 = vpack.c.b16 %v2130, %v2124
        %v2275 = vpack.c.b16 %v2131, %v2125
        %v2276 = vpack.c.b16 %v2132, %v2126
        %2421 = vmatprep.subr.bf16.mxu0 0
        %2422 = vmatpush1.bf16.msra.mxu0 %v1468
        %2423 = vmatprep.subr.bf16.mxu0 0
        %2424 = vmatpush1.bf16.msra.mxu0 %v1467
        %2425 = vmatprep.subr.bf16.mxu0 0
        %2426 = vmatpush1.bf16.msra.mxu0 %v1466
        %2427 = vmatprep.subr.bf16.mxu0 0
        %2428 = vmatpush1.bf16.msra.mxu0 %v1465
        %2429 = vmatprep.subr.bf16.mxu0 0
        %2430 = vmatpush1.bf16.msra.mxu0 %v1464
        %2431 = vmatprep.subr.bf16.mxu0 0
        %2432 = vmatpush1.bf16.msra.mxu0 %v1463
        %2433 = vmatprep.subr.bf16.mxu0 0
        %2434 = vmatpush1.bf16.msra.mxu0 %v1462
        %2435 = vmatprep.subr.bf16.mxu0 0
        %2436 = vmatpush1.bf16.msra.mxu0 %v1461
        %2437 = vmatprep.subr.bf16.mxu0 0
        %2438 = vmatpush2.bf16.msra.mxu0 %v1476
        %2439 = vmatprep.subr.bf16.mxu0 0
        %2440 = vmatpush2.bf16.msra.mxu0 %v1475
        %2441 = vmatprep.subr.bf16.mxu0 0
        %2442 = vmatpush2.bf16.msra.mxu0 %v1474
        %2443 = vmatprep.subr.bf16.mxu0 0
        %2444 = vmatpush2.bf16.msra.mxu0 %v1473
        %2445 = vmatprep.subr.bf16.mxu0 0
        %2446 = vmatpush2.bf16.msra.mxu0 %v1472
        %2447 = vmatprep.subr.bf16.mxu0 0
        %2448 = vmatpush2.bf16.msra.mxu0 %v1471
        %2449 = vmatprep.subr.bf16.mxu0 0
        %2450 = vmatpush2.bf16.msra.mxu0 %v1470
        %2451 = vmatprep.subr.bf16.mxu0 0
        %2452 = vmatpush2.bf16.msra.mxu0 %v1469
        %2453 = vmatprep.mubr.bf16.mxu0 %v2134
        %2454 = vmatmul.mubr.bf16.gmra.mxu0 %v2133
        %v2455 = vpop.f32.mrf.mxu0
        %v2456 = vadd.f32 0.0, %v2455
        %v2457 = vpop.f32.mrf.mxu0
        %v2458 = vpop.f32.mrf.mxu0
        %v2459 = vadd.f32 0.0, %v2458
        %v2460 = vpop.f32.mrf.mxu0
        %2461 = vmatprep.mubr.bf16.mxu0 %v2140
        %2462 = vmatmul.mubr.bf16.gmra.mxu0 %v2139
        %v2463 = vpop.f32.mrf.mxu0
        %v2464 = vadd.f32 0.0, %v2463
        %v2465 = vpop.f32.mrf.mxu0
        %v2466 = vpop.f32.mrf.mxu0
        %v2467 = vadd.f32 0.0, %v2466
        %v2468 = vpop.f32.mrf.mxu0
        %2469 = vmatprep.mubr.bf16.mxu0 %v2146
        %2470 = vmatmul.mubr.bf16.gmra.mxu0 %v2145
        %v2471 = vpop.f32.mrf.mxu0
        %v2472 = vadd.f32 0.0, %v2471
        %v2473 = vpop.f32.mrf.mxu0
        %v2474 = vpop.f32.mrf.mxu0
        %v2475 = vadd.f32 0.0, %v2474
        %v2476 = vpop.f32.mrf.mxu0
        %2477 = vmatprep.mubr.bf16.mxu0 %v2152
        %2478 = vmatmul.mubr.bf16.gmra.mxu0 %v2151
        %v2479 = vpop.f32.mrf.mxu0
        %v2480 = vadd.f32 0.0, %v2479
        %v2481 = vpop.f32.mrf.mxu0
        %v2482 = vpop.f32.mrf.mxu0
        %v2483 = vadd.f32 0.0, %v2482
        %v2484 = vpop.f32.mrf.mxu0
        %2485 = vmatprep.mubr.bf16.mxu0 %v2158
        %2486 = vmatmul.mubr.bf16.gmra.mxu0 %v2157
        %v2487 = vpop.f32.mrf.mxu0
        %v2488 = vadd.f32 0.0, %v2487
        %v2489 = vpop.f32.mrf.mxu0
        %v2490 = vpop.f32.mrf.mxu0
        %v2491 = vadd.f32 0.0, %v2490
        %v2492 = vpop.f32.mrf.mxu0
        %2493 = vmatprep.mubr.bf16.mxu0 %v2164
        %2494 = vmatmul.mubr.bf16.gmra.mxu0 %v2163
        %v2495 = vpop.f32.mrf.mxu0
        %v2496 = vadd.f32 0.0, %v2495
        %v2497 = vpop.f32.mrf.mxu0
        %v2498 = vpop.f32.mrf.mxu0
        %v2499 = vadd.f32 0.0, %v2498
        %v2500 = vpop.f32.mrf.mxu0
        %2501 = vmatprep.mubr.bf16.mxu0 %v2170
        %2502 = vmatmul.mubr.bf16.gmra.mxu0 %v2169
        %v2503 = vpop.f32.mrf.mxu0
        %v2504 = vadd.f32 0.0, %v2503
        %v2505 = vpop.f32.mrf.mxu0
        %v2506 = vpop.f32.mrf.mxu0
        %v2507 = vadd.f32 0.0, %v2506
        %v2508 = vpop.f32.mrf.mxu0
        %2509 = vmatprep.mubr.bf16.mxu0 %v2176
        %2510 = vmatmul.mubr.bf16.gmra.mxu0 %v2175
        %v2511 = vpop.f32.mrf.mxu0
        %v2512 = vadd.f32 0.0, %v2511
        %v2513 = vpop.f32.mrf.mxu0
        %v2514 = vpop.f32.mrf.mxu0
        %v2515 = vadd.f32 0.0, %v2514
        %v2516 = vpop.f32.mrf.mxu0
        %2517 = vmatprep.mubr.bf16.mxu0 %v2182
        %2518 = vmatmul.mubr.bf16.gmra.mxu0 %v2181
        %v2519 = vpop.f32.mrf.mxu0
        %v2520 = vadd.f32 0.0, %v2519
        %v2521 = vpop.f32.mrf.mxu0
        %v2522 = vpop.f32.mrf.mxu0
        %v2523 = vadd.f32 0.0, %v2522
        %v2524 = vpop.f32.mrf.mxu0
        %2525 = vmatprep.mubr.bf16.mxu0 %v2188
        %2526 = vmatmul.mubr.bf16.gmra.mxu0 %v2187
        %v2527 = vpop.f32.mrf.mxu0
        %v2528 = vadd.f32 0.0, %v2527
        %v2529 = vpop.f32.mrf.mxu0
        %v2530 = vpop.f32.mrf.mxu0
        %v2531 = vadd.f32 0.0, %v2530
        %v2532 = vpop.f32.mrf.mxu0
        %2533 = vmatprep.mubr.bf16.mxu0 %v2194
        %2534 = vmatmul.mubr.bf16.gmra.mxu0 %v2193
        %v2535 = vpop.f32.mrf.mxu0
        %v2536 = vadd.f32 0.0, %v2535
        %v2537 = vpop.f32.mrf.mxu0
        %v2538 = vpop.f32.mrf.mxu0
        %v2539 = vadd.f32 0.0, %v2538
        %v2540 = vpop.f32.mrf.mxu0
        %2541 = vmatprep.mubr.bf16.mxu0 %v2200
        %2542 = vmatmul.mubr.bf16.gmra.mxu0 %v2199
        %v2543 = vpop.f32.mrf.mxu0
        %v2544 = vadd.f32 0.0, %v2543
        %v2545 = vpop.f32.mrf.mxu0
        %v2546 = vpop.f32.mrf.mxu0
        %v2547 = vadd.f32 0.0, %v2546
        %v2548 = vpop.f32.mrf.mxu0
        %2549 = vmatprep.mubr.bf16.mxu0 %v2206
        %2550 = vmatmul.mubr.bf16.gmra.mxu0 %v2205
        %v2551 = vpop.f32.mrf.mxu0
        %v2552 = vadd.f32 0.0, %v2551
        %v2553 = vpop.f32.mrf.mxu0
        %v2554 = vpop.f32.mrf.mxu0
        %v2555 = vadd.f32 0.0, %v2554
        %v2556 = vpop.f32.mrf.mxu0
        %2557 = vmatprep.mubr.bf16.mxu0 %v2212
        %2558 = vmatmul.mubr.bf16.gmra.mxu0 %v2211
        %v2559 = vpop.f32.mrf.mxu0
        %v2560 = vadd.f32 0.0, %v2559
        %v2561 = vpop.f32.mrf.mxu0
        %v2562 = vpop.f32.mrf.mxu0
        %v2563 = vadd.f32 0.0, %v2562
        %v2564 = vpop.f32.mrf.mxu0
        %2565 = vmatprep.mubr.bf16.mxu0 %v2218
        %2566 = vmatmul.mubr.bf16.gmra.mxu0 %v2217
        %v2567 = vpop.f32.mrf.mxu0
        %v2568 = vadd.f32 0.0, %v2567
        %v2569 = vpop.f32.mrf.mxu0
        %v2570 = vpop.f32.mrf.mxu0
        %v2571 = vadd.f32 0.0, %v2570
        %v2572 = vpop.f32.mrf.mxu0
        %2573 = vmatprep.mubr.bf16.mxu0 %v2224
        %2574 = vmatmul.mubr.bf16.gmra.mxu0 %v2223
        %v2575 = vpop.f32.mrf.mxu0
        %v2576 = vadd.f32 0.0, %v2575
        %v2577 = vpop.f32.mrf.mxu0
        %v2578 = vpop.f32.mrf.mxu0
        %v2579 = vadd.f32 0.0, %v2578
        %v2580 = vpop.f32.mrf.mxu0
        %2581 = vmatprep.mubr.bf16.mxu0 %v2230
        %2582 = vmatmul.mubr.bf16.gmra.mxu0 %v2229
        %v2583 = vpop.f32.mrf.mxu0
        %v2584 = vadd.f32 0.0, %v2583
        %v2585 = vpop.f32.mrf.mxu0
        %v2586 = vpop.f32.mrf.mxu0
        %v2587 = vadd.f32 0.0, %v2586
        %v2588 = vpop.f32.mrf.mxu0
        %2589 = vmatprep.mubr.bf16.mxu0 %v2236
        %2590 = vmatmul.mubr.bf16.gmra.mxu0 %v2235
        %v2591 = vpop.f32.mrf.mxu0
        %v2592 = vadd.f32 0.0, %v2591
        %v2593 = vpop.f32.mrf.mxu0
        %v2594 = vpop.f32.mrf.mxu0
        %v2595 = vadd.f32 0.0, %v2594
        %v2596 = vpop.f32.mrf.mxu0
        %2597 = vmatprep.mubr.bf16.mxu0 %v2242
        %2598 = vmatmul.mubr.bf16.gmra.mxu0 %v2241
        %v2599 = vpop.f32.mrf.mxu0
        %v2600 = vadd.f32 0.0, %v2599
        %v2601 = vpop.f32.mrf.mxu0
        %v2602 = vpop.f32.mrf.mxu0
        %v2603 = vadd.f32 0.0, %v2602
        %v2604 = vpop.f32.mrf.mxu0
        %2605 = vmatprep.mubr.bf16.mxu0 %v2248
        %2606 = vmatmul.mubr.bf16.gmra.mxu0 %v2247
        %v2607 = vpop.f32.mrf.mxu0
        %v2608 = vadd.f32 0.0, %v2607
        %v2609 = vpop.f32.mrf.mxu0
        %v2610 = vpop.f32.mrf.mxu0
        %v2611 = vadd.f32 0.0, %v2610
        %v2612 = vpop.f32.mrf.mxu0
        %2613 = vmatprep.mubr.bf16.mxu0 %v2254
        %2614 = vmatmul.mubr.bf16.gmra.mxu0 %v2253
        %v2615 = vpop.f32.mrf.mxu0
        %v2616 = vadd.f32 0.0, %v2615
        %v2617 = vpop.f32.mrf.mxu0
        %v2618 = vpop.f32.mrf.mxu0
        %v2619 = vadd.f32 0.0, %v2618
        %v2620 = vpop.f32.mrf.mxu0
        %2621 = vmatprep.mubr.bf16.mxu0 %v2260
        %2622 = vmatmul.mubr.bf16.gmra.mxu0 %v2259
        %v2623 = vpop.f32.mrf.mxu0
        %v2624 = vadd.f32 0.0, %v2623
        %v2625 = vpop.f32.mrf.mxu0
        %v2626 = vpop.f32.mrf.mxu0
        %v2627 = vadd.f32 0.0, %v2626
        %v2628 = vpop.f32.mrf.mxu0
        %2629 = vmatprep.mubr.bf16.mxu0 %v2266
        %2630 = vmatmul.mubr.bf16.gmra.mxu0 %v2265
        %v2631 = vpop.f32.mrf.mxu0
        %v2632 = vadd.f32 0.0, %v2631
        %v2633 = vpop.f32.mrf.mxu0
        %v2634 = vpop.f32.mrf.mxu0
        %v2635 = vadd.f32 0.0, %v2634
        %v2636 = vpop.f32.mrf.mxu0
        %2637 = vmatprep.mubr.bf16.mxu0 %v2272
        %2638 = vmatmul.mubr.bf16.gmra.mxu0 %v2271
        %v2639 = vpop.f32.mrf.mxu0
        %v2640 = vadd.f32 0.0, %v2639
        %v2641 = vpop.f32.mrf.mxu0
        %v2642 = vpop.f32.mrf.mxu0
        %v2643 = vadd.f32 0.0, %v2642
        %v2644 = vpop.f32.mrf.mxu0
        %2645 = vdwg.mxu0
        %2646 = vmatprep.subr.bf16.mxu0 0
        %2647 = vmatpush1.bf16.msra.mxu0 %v1484
        %2648 = vmatprep.subr.bf16.mxu0 0
        %2649 = vmatpush1.bf16.msra.mxu0 %v1483
        %2650 = vmatprep.subr.bf16.mxu0 0
        %2651 = vmatpush1.bf16.msra.mxu0 %v1482
        %2652 = vmatprep.subr.bf16.mxu0 0
        %2653 = vmatpush1.bf16.msra.mxu0 %v1481
        %2654 = vmatprep.subr.bf16.mxu0 0
        %2655 = vmatpush1.bf16.msra.mxu0 %v1480
        %2656 = vmatprep.subr.bf16.mxu0 0
        %2657 = vmatpush1.bf16.msra.mxu0 %v1479
        %2658 = vmatprep.subr.bf16.mxu0 0
        %2659 = vmatpush1.bf16.msra.mxu0 %v1478
        %2660 = vmatprep.subr.bf16.mxu0 0
        %2661 = vmatpush1.bf16.msra.mxu0 %v1477
        %2662 = vmatprep.subr.bf16.mxu0 0
        %2663 = vmatpush2.bf16.msra.mxu0 %v1492
        %2664 = vmatprep.subr.bf16.mxu0 0
        %2665 = vmatpush2.bf16.msra.mxu0 %v1491
        %2666 = vmatprep.subr.bf16.mxu0 0
        %2667 = vmatpush2.bf16.msra.mxu0 %v1490
        %2668 = vmatprep.subr.bf16.mxu0 0
        %2669 = vmatpush2.bf16.msra.mxu0 %v1489
        %2670 = vmatprep.subr.bf16.mxu0 0
        %2671 = vmatpush2.bf16.msra.mxu0 %v1488
        %2672 = vmatprep.subr.bf16.mxu0 0
        %2673 = vmatpush2.bf16.msra.mxu0 %v1487
        %2674 = vmatprep.subr.bf16.mxu0 0
        %2675 = vmatpush2.bf16.msra.mxu0 %v1486
        %2676 = vmatprep.subr.bf16.mxu0 0
        %2677 = vmatpush2.bf16.msra.mxu0 %v1485
        %2678 = vmatprep.mubr.bf16.mxu0 %v2136
        %2679 = vmatmul.mubr.bf16.gmra.mxu0 %v2135
        %v2680 = vpop.f32.mrf.mxu0
        %v2681 = vadd.f32 %v2456, %v2680
        %v2682 = vpop.f32.mrf.mxu0
        %v2683 = vpop.f32.mrf.mxu0
        %v2684 = vadd.f32 %v2459, %v2683
        %v2685 = vpop.f32.mrf.mxu0
        %2686 = vmatprep.mubr.bf16.mxu0 %v2142
        %2687 = vmatmul.mubr.bf16.gmra.mxu0 %v2141
        %v2688 = vpop.f32.mrf.mxu0
        %v2689 = vadd.f32 %v2464, %v2688
        %v2690 = vpop.f32.mrf.mxu0
        %v2691 = vpop.f32.mrf.mxu0
        %v2692 = vadd.f32 %v2467, %v2691
        %v2693 = vpop.f32.mrf.mxu0
        %2694 = vmatprep.mubr.bf16.mxu0 %v2148
        %2695 = vmatmul.mubr.bf16.gmra.mxu0 %v2147
        %v2696 = vpop.f32.mrf.mxu0
        %v2697 = vadd.f32 %v2472, %v2696
        %v2698 = vpop.f32.mrf.mxu0
        %v2699 = vpop.f32.mrf.mxu0
        %v2700 = vadd.f32 %v2475, %v2699
        %v2701 = vpop.f32.mrf.mxu0
        %2702 = vmatprep.mubr.bf16.mxu0 %v2154
        %2703 = vmatmul.mubr.bf16.gmra.mxu0 %v2153
        %v2704 = vpop.f32.mrf.mxu0
        %v2705 = vadd.f32 %v2480, %v2704
        %v2706 = vpop.f32.mrf.mxu0
        %v2707 = vpop.f32.mrf.mxu0
        %v2708 = vadd.f32 %v2483, %v2707
        %v2709 = vpop.f32.mrf.mxu0
        %2710 = vmatprep.mubr.bf16.mxu0 %v2160
        %2711 = vmatmul.mubr.bf16.gmra.mxu0 %v2159
        %v2712 = vpop.f32.mrf.mxu0
        %v2713 = vadd.f32 %v2488, %v2712
        %v2714 = vpop.f32.mrf.mxu0
        %v2715 = vpop.f32.mrf.mxu0
        %v2716 = vadd.f32 %v2491, %v2715
        %v2717 = vpop.f32.mrf.mxu0
        %2718 = vmatprep.mubr.bf16.mxu0 %v2166
        %2719 = vmatmul.mubr.bf16.gmra.mxu0 %v2165
        %v2720 = vpop.f32.mrf.mxu0
        %v2721 = vadd.f32 %v2496, %v2720
        %v2722 = vpop.f32.mrf.mxu0
        %v2723 = vpop.f32.mrf.mxu0
        %v2724 = vadd.f32 %v2499, %v2723
        %v2725 = vpop.f32.mrf.mxu0
        %2726 = vmatprep.mubr.bf16.mxu0 %v2172
        %2727 = vmatmul.mubr.bf16.gmra.mxu0 %v2171
        %v2728 = vpop.f32.mrf.mxu0
        %v2729 = vadd.f32 %v2504, %v2728
        %v2730 = vpop.f32.mrf.mxu0
        %v2731 = vpop.f32.mrf.mxu0
        %v2732 = vadd.f32 %v2507, %v2731
        %v2733 = vpop.f32.mrf.mxu0
        %2734 = vmatprep.mubr.bf16.mxu0 %v2178
        %2735 = vmatmul.mubr.bf16.gmra.mxu0 %v2177
        %v2736 = vpop.f32.mrf.mxu0
        %v2737 = vadd.f32 %v2512, %v2736
        %v2738 = vpop.f32.mrf.mxu0
        %v2739 = vpop.f32.mrf.mxu0
        %v2740 = vadd.f32 %v2515, %v2739
        %v2741 = vpop.f32.mrf.mxu0
        %2742 = vmatprep.mubr.bf16.mxu0 %v2184
        %2743 = vmatmul.mubr.bf16.gmra.mxu0 %v2183
        %v2744 = vpop.f32.mrf.mxu0
        %v2745 = vadd.f32 %v2520, %v2744
        %v2746 = vpop.f32.mrf.mxu0
        %v2747 = vpop.f32.mrf.mxu0
        %v2748 = vadd.f32 %v2523, %v2747
        %v2749 = vpop.f32.mrf.mxu0
        %2750 = vmatprep.mubr.bf16.mxu0 %v2190
        %2751 = vmatmul.mubr.bf16.gmra.mxu0 %v2189
        %v2752 = vpop.f32.mrf.mxu0
        %v2753 = vadd.f32 %v2528, %v2752
        %v2754 = vpop.f32.mrf.mxu0
        %v2755 = vpop.f32.mrf.mxu0
        %v2756 = vadd.f32 %v2531, %v2755
        %v2757 = vpop.f32.mrf.mxu0
        %2758 = vmatprep.mubr.bf16.mxu0 %v2196
        %2759 = vmatmul.mubr.bf16.gmra.mxu0 %v2195
        %v2760 = vpop.f32.mrf.mxu0
        %v2761 = vadd.f32 %v2536, %v2760
        %v2762 = vpop.f32.mrf.mxu0
        %v2763 = vpop.f32.mrf.mxu0
        %v2764 = vadd.f32 %v2539, %v2763
        %v2765 = vpop.f32.mrf.mxu0
        %2766 = vmatprep.mubr.bf16.mxu0 %v2202
        %2767 = vmatmul.mubr.bf16.gmra.mxu0 %v2201
        %v2768 = vpop.f32.mrf.mxu0
        %v2769 = vadd.f32 %v2544, %v2768
        %v2770 = vpop.f32.mrf.mxu0
        %v2771 = vpop.f32.mrf.mxu0
        %v2772 = vadd.f32 %v2547, %v2771
        %v2773 = vpop.f32.mrf.mxu0
        %2774 = vmatprep.mubr.bf16.mxu0 %v2208
        %2775 = vmatmul.mubr.bf16.gmra.mxu0 %v2207
        %v2776 = vpop.f32.mrf.mxu0
        %v2777 = vadd.f32 %v2552, %v2776
        %v2778 = vpop.f32.mrf.mxu0
        %v2779 = vpop.f32.mrf.mxu0
        %v2780 = vadd.f32 %v2555, %v2779
        %v2781 = vpop.f32.mrf.mxu0
        %2782 = vmatprep.mubr.bf16.mxu0 %v2214
        %2783 = vmatmul.mubr.bf16.gmra.mxu0 %v2213
        %v2784 = vpop.f32.mrf.mxu0
        %v2785 = vadd.f32 %v2560, %v2784
        %v2786 = vpop.f32.mrf.mxu0
        %v2787 = vpop.f32.mrf.mxu0
        %v2788 = vadd.f32 %v2563, %v2787
        %v2789 = vpop.f32.mrf.mxu0
        %2790 = vmatprep.mubr.bf16.mxu0 %v2220
        %2791 = vmatmul.mubr.bf16.gmra.mxu0 %v2219
        %v2792 = vpop.f32.mrf.mxu0
        %v2793 = vadd.f32 %v2568, %v2792
        %v2794 = vpop.f32.mrf.mxu0
        %v2795 = vpop.f32.mrf.mxu0
        %v2796 = vadd.f32 %v2571, %v2795
        %v2797 = vpop.f32.mrf.mxu0
        %2798 = vmatprep.mubr.bf16.mxu0 %v2226
        %2799 = vmatmul.mubr.bf16.gmra.mxu0 %v2225
        %v2800 = vpop.f32.mrf.mxu0
        %v2801 = vadd.f32 %v2576, %v2800
        %v2802 = vpop.f32.mrf.mxu0
        %v2803 = vpop.f32.mrf.mxu0
        %v2804 = vadd.f32 %v2579, %v2803
        %v2805 = vpop.f32.mrf.mxu0
        %2806 = vmatprep.mubr.bf16.mxu0 %v2232
        %2807 = vmatmul.mubr.bf16.gmra.mxu0 %v2231
        %v2808 = vpop.f32.mrf.mxu0
        %v2809 = vadd.f32 %v2584, %v2808
        %v2810 = vpop.f32.mrf.mxu0
        %v2811 = vpop.f32.mrf.mxu0
        %v2812 = vadd.f32 %v2587, %v2811
        %v2813 = vpop.f32.mrf.mxu0
        %2814 = vmatprep.mubr.bf16.mxu0 %v2238
        %2815 = vmatmul.mubr.bf16.gmra.mxu0 %v2237
        %v2816 = vpop.f32.mrf.mxu0
        %v2817 = vadd.f32 %v2592, %v2816
        %v2818 = vpop.f32.mrf.mxu0
        %v2819 = vpop.f32.mrf.mxu0
        %v2820 = vadd.f32 %v2595, %v2819
        %v2821 = vpop.f32.mrf.mxu0
        %2822 = vmatprep.mubr.bf16.mxu0 %v2244
        %2823 = vmatmul.mubr.bf16.gmra.mxu0 %v2243
        %v2824 = vpop.f32.mrf.mxu0
        %v2825 = vadd.f32 %v2600, %v2824
        %v2826 = vpop.f32.mrf.mxu0
        %v2827 = vpop.f32.mrf.mxu0
        %v2828 = vadd.f32 %v2603, %v2827
        %v2829 = vpop.f32.mrf.mxu0
        %2830 = vmatprep.mubr.bf16.mxu0 %v2250
        %2831 = vmatmul.mubr.bf16.gmra.mxu0 %v2249
        %v2832 = vpop.f32.mrf.mxu0
        %v2833 = vadd.f32 %v2608, %v2832
        %v2834 = vpop.f32.mrf.mxu0
        %v2835 = vpop.f32.mrf.mxu0
        %v2836 = vadd.f32 %v2611, %v2835
        %v2837 = vpop.f32.mrf.mxu0
        %2838 = vmatprep.mubr.bf16.mxu0 %v2256
        %2839 = vmatmul.mubr.bf16.gmra.mxu0 %v2255
        %v2840 = vpop.f32.mrf.mxu0
        %v2841 = vadd.f32 %v2616, %v2840
        %v2842 = vpop.f32.mrf.mxu0
        %v2843 = vpop.f32.mrf.mxu0
        %v2844 = vadd.f32 %v2619, %v2843
        %v2845 = vpop.f32.mrf.mxu0
        %2846 = vmatprep.mubr.bf16.mxu0 %v2262
        %2847 = vmatmul.mubr.bf16.gmra.mxu0 %v2261
        %v2848 = vpop.f32.mrf.mxu0
        %v2849 = vadd.f32 %v2624, %v2848
        %v2850 = vpop.f32.mrf.mxu0
        %v2851 = vpop.f32.mrf.mxu0
        %v2852 = vadd.f32 %v2627, %v2851
        %v2853 = vpop.f32.mrf.mxu0
        %2854 = vmatprep.mubr.bf16.mxu0 %v2268
        %2855 = vmatmul.mubr.bf16.gmra.mxu0 %v2267
        %v2856 = vpop.f32.mrf.mxu0
        %v2857 = vadd.f32 %v2632, %v2856
        %v2858 = vpop.f32.mrf.mxu0
        %v2859 = vpop.f32.mrf.mxu0
        %v2860 = vadd.f32 %v2635, %v2859
        %v2861 = vpop.f32.mrf.mxu0
        %2862 = vmatprep.mubr.bf16.mxu0 %v2274
        %2863 = vmatmul.mubr.bf16.gmra.mxu0 %v2273
        %v2864 = vpop.f32.mrf.mxu0
        %v2865 = vadd.f32 %v2640, %v2864
        %v2866 = vpop.f32.mrf.mxu0
        %v2867 = vpop.f32.mrf.mxu0
        %v2868 = vadd.f32 %v2643, %v2867
        %v2869 = vpop.f32.mrf.mxu0
        %2870 = vdwg.mxu0
        %2871 = vmatprep.subr.bf16.mxu0 0
        %2872 = vmatpush1.bf16.msra.mxu0 %v1500
        %2873 = vmatprep.subr.bf16.mxu0 0
        %2874 = vmatpush1.bf16.msra.mxu0 %v1499
        %2875 = vmatprep.subr.bf16.mxu0 0
        %2876 = vmatpush1.bf16.msra.mxu0 %v1498
        %2877 = vmatprep.subr.bf16.mxu0 0
        %2878 = vmatpush1.bf16.msra.mxu0 %v1497
        %2879 = vmatprep.subr.bf16.mxu0 0
        %2880 = vmatpush1.bf16.msra.mxu0 %v1496
        %2881 = vmatprep.subr.bf16.mxu0 0
        %2882 = vmatpush1.bf16.msra.mxu0 %v1495
        %2883 = vmatprep.subr.bf16.mxu0 0
        %2884 = vmatpush1.bf16.msra.mxu0 %v1494
        %2885 = vmatprep.subr.bf16.mxu0 0
        %2886 = vmatpush1.bf16.msra.mxu0 %v1493
        %2887 = vmatprep.subr.bf16.mxu0 0
        %2888 = vmatpush2.bf16.msra.mxu0 %v1508
        %2889 = vmatprep.subr.bf16.mxu0 0
        %2890 = vmatpush2.bf16.msra.mxu0 %v1507
        %2891 = vmatprep.subr.bf16.mxu0 0
        %2892 = vmatpush2.bf16.msra.mxu0 %v1506
        %2893 = vmatprep.subr.bf16.mxu0 0
        %2894 = vmatpush2.bf16.msra.mxu0 %v1505
        %2895 = vmatprep.subr.bf16.mxu0 0
        %2896 = vmatpush2.bf16.msra.mxu0 %v1504
        %2897 = vmatprep.subr.bf16.mxu0 0
        %2898 = vmatpush2.bf16.msra.mxu0 %v1503
        %2899 = vmatprep.subr.bf16.mxu0 0
        %2900 = vmatpush2.bf16.msra.mxu0 %v1502
        %2901 = vmatprep.subr.bf16.mxu0 0
        %2902 = vmatpush2.bf16.msra.mxu0 %v1501
        %2903 = vmatprep.mubr.bf16.mxu0 %v2138
        %2904 = vmatmul.mubr.bf16.gmra.mxu0 %v2137
        %v2905 = vpop.f32.mrf.mxu0
        %v2906 = vadd.f32 %v2681, %v2905
        %v2907 = vpop.f32.mrf.mxu0
        %v2908 = vpop.f32.mrf.mxu0
        %v2909 = vadd.f32 %v2684, %v2908
        %v2910 = vpop.f32.mrf.mxu0
        %2911 = vmatprep.mubr.bf16.mxu0 %v2144
        %2912 = vmatmul.mubr.bf16.gmra.mxu0 %v2143
        %v2913 = vpop.f32.mrf.mxu0
        %v2914 = vadd.f32 %v2689, %v2913
        %v2915 = vpop.f32.mrf.mxu0
        %v2916 = vpop.f32.mrf.mxu0
        %v2917 = vadd.f32 %v2692, %v2916
        %v2918 = vpop.f32.mrf.mxu0
        %2919 = vmatprep.mubr.bf16.mxu0 %v2150
        %2920 = vmatmul.mubr.bf16.gmra.mxu0 %v2149
        %v2921 = vpop.f32.mrf.mxu0
        %v2922 = vadd.f32 %v2697, %v2921
        %v2923 = vpop.f32.mrf.mxu0
        %v2924 = vpop.f32.mrf.mxu0
        %v2925 = vadd.f32 %v2700, %v2924
        %v2926 = vpop.f32.mrf.mxu0
        %2927 = vmatprep.mubr.bf16.mxu0 %v2156
        %2928 = vmatmul.mubr.bf16.gmra.mxu0 %v2155
        %v2929 = vpop.f32.mrf.mxu0
        %v2930 = vadd.f32 %v2705, %v2929
        %v2931 = vpop.f32.mrf.mxu0
        %v2932 = vpop.f32.mrf.mxu0
        %v2933 = vadd.f32 %v2708, %v2932
        %v2934 = vpop.f32.mrf.mxu0
        %2935 = vmatprep.mubr.bf16.mxu0 %v2162
        %2936 = vmatmul.mubr.bf16.gmra.mxu0 %v2161
        %v2937 = vpop.f32.mrf.mxu0
        %v2938 = vadd.f32 %v2713, %v2937
        %v2939 = vpop.f32.mrf.mxu0
        %v2940 = vpop.f32.mrf.mxu0
        %v2941 = vadd.f32 %v2716, %v2940
        %v2942 = vpop.f32.mrf.mxu0
        %2943 = vmatprep.mubr.bf16.mxu0 %v2168
        %2944 = vmatmul.mubr.bf16.gmra.mxu0 %v2167
        %v2945 = vpop.f32.mrf.mxu0
        %v2946 = vadd.f32 %v2721, %v2945
        %v2947 = vpop.f32.mrf.mxu0
        %v2948 = vpop.f32.mrf.mxu0
        %v2949 = vadd.f32 %v2724, %v2948
        %v2950 = vpop.f32.mrf.mxu0
        %2951 = vmatprep.mubr.bf16.mxu0 %v2174
        %2952 = vmatmul.mubr.bf16.gmra.mxu0 %v2173
        %v2953 = vpop.f32.mrf.mxu0
        %v2954 = vadd.f32 %v2729, %v2953
        %v2955 = vpop.f32.mrf.mxu0
        %v2956 = vpop.f32.mrf.mxu0
        %v2957 = vadd.f32 %v2732, %v2956
        %v2958 = vpop.f32.mrf.mxu0
        %2959 = vmatprep.mubr.bf16.mxu0 %v2180
        %2960 = vmatmul.mubr.bf16.gmra.mxu0 %v2179
        %v2961 = vpop.f32.mrf.mxu0
        %v2962 = vadd.f32 %v2737, %v2961
        %v2963 = vpop.f32.mrf.mxu0
        %v2964 = vpop.f32.mrf.mxu0
        %v2965 = vadd.f32 %v2740, %v2964
        %v2966 = vpop.f32.mrf.mxu0
        %2967 = vmatprep.mubr.bf16.mxu0 %v2186
        %2968 = vmatmul.mubr.bf16.gmra.mxu0 %v2185
        %v2969 = vpop.f32.mrf.mxu0
        %v2970 = vadd.f32 %v2745, %v2969
        %v2971 = vpop.f32.mrf.mxu0
        %v2972 = vpop.f32.mrf.mxu0
        %v2973 = vadd.f32 %v2748, %v2972
        %v2974 = vpop.f32.mrf.mxu0
        %2975 = vmatprep.mubr.bf16.mxu0 %v2192
        %2976 = vmatmul.mubr.bf16.gmra.mxu0 %v2191
        %v2977 = vpop.f32.mrf.mxu0
        %v2978 = vadd.f32 %v2753, %v2977
        %v2979 = vpop.f32.mrf.mxu0
        %v2980 = vpop.f32.mrf.mxu0
        %v2981 = vadd.f32 %v2756, %v2980
        %v2982 = vpop.f32.mrf.mxu0
        %2983 = vmatprep.mubr.bf16.mxu0 %v2198
        %2984 = vmatmul.mubr.bf16.gmra.mxu0 %v2197
        %v2985 = vpop.f32.mrf.mxu0
        %v2986 = vadd.f32 %v2761, %v2985
        %v2987 = vpop.f32.mrf.mxu0
        %v2988 = vpop.f32.mrf.mxu0
        %v2989 = vadd.f32 %v2764, %v2988
        %v2990 = vpop.f32.mrf.mxu0
        %2991 = vmatprep.mubr.bf16.mxu0 %v2204
        %2992 = vmatmul.mubr.bf16.gmra.mxu0 %v2203
        %v2993 = vpop.f32.mrf.mxu0
        %v2994 = vadd.f32 %v2769, %v2993
        %v2995 = vpop.f32.mrf.mxu0
        %v2996 = vpop.f32.mrf.mxu0
        %v2997 = vadd.f32 %v2772, %v2996
        %v2998 = vpop.f32.mrf.mxu0
        %2999 = vmatprep.mubr.bf16.mxu0 %v2210
        %3000 = vmatmul.mubr.bf16.gmra.mxu0 %v2209
        %v3001 = vpop.f32.mrf.mxu0
        %v3002 = vadd.f32 %v2777, %v3001
        %v3003 = vpop.f32.mrf.mxu0
        %v3004 = vpop.f32.mrf.mxu0
        %v3005 = vadd.f32 %v2780, %v3004
        %v3006 = vpop.f32.mrf.mxu0
        %3007 = vmatprep.mubr.bf16.mxu0 %v2216
        %3008 = vmatmul.mubr.bf16.gmra.mxu0 %v2215
        %v3009 = vpop.f32.mrf.mxu0
        %v3010 = vadd.f32 %v2785, %v3009
        %v3011 = vpop.f32.mrf.mxu0
        %v3012 = vpop.f32.mrf.mxu0
        %v3013 = vadd.f32 %v2788, %v3012
        %v3014 = vpop.f32.mrf.mxu0
        %3015 = vmatprep.mubr.bf16.mxu0 %v2222
        %3016 = vmatmul.mubr.bf16.gmra.mxu0 %v2221
        %v3017 = vpop.f32.mrf.mxu0
        %v3018 = vadd.f32 %v2793, %v3017
        %v3019 = vpop.f32.mrf.mxu0
        %v3020 = vpop.f32.mrf.mxu0
        %v3021 = vadd.f32 %v2796, %v3020
        %v3022 = vpop.f32.mrf.mxu0
        %3023 = vmatprep.mubr.bf16.mxu0 %v2228
        %3024 = vmatmul.mubr.bf16.gmra.mxu0 %v2227
        %v3025 = vpop.f32.mrf.mxu0
        %v3026 = vadd.f32 %v2801, %v3025
        %v3027 = vpop.f32.mrf.mxu0
        %v3028 = vpop.f32.mrf.mxu0
        %v3029 = vadd.f32 %v2804, %v3028
        %v3030 = vpop.f32.mrf.mxu0
        %3031 = vmatprep.mubr.bf16.mxu0 %v2234
        %3032 = vmatmul.mubr.bf16.gmra.mxu0 %v2233
        %v3033 = vpop.f32.mrf.mxu0
        %v3034 = vadd.f32 %v2809, %v3033
        %v3035 = vpop.f32.mrf.mxu0
        %v3036 = vpop.f32.mrf.mxu0
        %v3037 = vadd.f32 %v2812, %v3036
        %v3038 = vpop.f32.mrf.mxu0
        %3039 = vmatprep.mubr.bf16.mxu0 %v2240
        %3040 = vmatmul.mubr.bf16.gmra.mxu0 %v2239
        %v3041 = vpop.f32.mrf.mxu0
        %v3042 = vadd.f32 %v2817, %v3041
        %v3043 = vpop.f32.mrf.mxu0
        %v3044 = vpop.f32.mrf.mxu0
        %v3045 = vadd.f32 %v2820, %v3044
        %v3046 = vpop.f32.mrf.mxu0
        %3047 = vmatprep.mubr.bf16.mxu0 %v2246
        %3048 = vmatmul.mubr.bf16.gmra.mxu0 %v2245
        %v3049 = vpop.f32.mrf.mxu0
        %v3050 = vadd.f32 %v2825, %v3049
        %v3051 = vpop.f32.mrf.mxu0
        %v3052 = vpop.f32.mrf.mxu0
        %v3053 = vadd.f32 %v2828, %v3052
        %v3054 = vpop.f32.mrf.mxu0
        %3055 = vmatprep.mubr.bf16.mxu0 %v2252
        %3056 = vmatmul.mubr.bf16.gmra.mxu0 %v2251
        %v3057 = vpop.f32.mrf.mxu0
        %v3058 = vadd.f32 %v2833, %v3057
        %v3059 = vpop.f32.mrf.mxu0
        %v3060 = vpop.f32.mrf.mxu0
        %v3061 = vadd.f32 %v2836, %v3060
        %v3062 = vpop.f32.mrf.mxu0
        %3063 = vmatprep.mubr.bf16.mxu0 %v2258
        %3064 = vmatmul.mubr.bf16.gmra.mxu0 %v2257
        %v3065 = vpop.f32.mrf.mxu0
        %v3066 = vadd.f32 %v2841, %v3065
        %v3067 = vpop.f32.mrf.mxu0
        %v3068 = vpop.f32.mrf.mxu0
        %v3069 = vadd.f32 %v2844, %v3068
        %v3070 = vpop.f32.mrf.mxu0
        %3071 = vmatprep.mubr.bf16.mxu0 %v2264
        %3072 = vmatmul.mubr.bf16.gmra.mxu0 %v2263
        %v3073 = vpop.f32.mrf.mxu0
        %v3074 = vadd.f32 %v2849, %v3073
        %v3075 = vpop.f32.mrf.mxu0
        %v3076 = vpop.f32.mrf.mxu0
        %v3077 = vadd.f32 %v2852, %v3076
        %v3078 = vpop.f32.mrf.mxu0
        %3079 = vmatprep.mubr.bf16.mxu0 %v2270
        %3080 = vmatmul.mubr.bf16.gmra.mxu0 %v2269
        %v3081 = vpop.f32.mrf.mxu0
        %v3082 = vadd.f32 %v2857, %v3081
        %v3083 = vpop.f32.mrf.mxu0
        %v3084 = vpop.f32.mrf.mxu0
        %v3085 = vadd.f32 %v2860, %v3084
        %v3086 = vpop.f32.mrf.mxu0
        %3087 = vmatprep.mubr.bf16.mxu0 %v2276
        %3088 = vmatmul.mubr.bf16.gmra.mxu0 %v2275
        %v3089 = vpop.f32.mrf.mxu0
        %v3090 = vadd.f32 %v2865, %v3089
        %v3091 = vpop.f32.mrf.mxu0
        %v3092 = vpop.f32.mrf.mxu0
        %v3093 = vadd.f32 %v2868, %v3092
        %v3094 = vpop.f32.mrf.mxu0
        %3095 = vdwg.mxu0
        %v3096 = vadd.f32 %v1509, %v2906
        %v3097 = vadd.f32 %v1510, %v2909
        %v3098 = vadd.f32 %v1511, %v2914
        %v3099 = vadd.f32 %v1512, %v2917
        %v3100 = vadd.f32 %v1513, %v2922
        %v3101 = vadd.f32 %v1514, %v2925
        %v3102 = vadd.f32 %v1515, %v2930
        %v3103 = vadd.f32 %v1516, %v2933
        %v3104 = vadd.f32 %v1517, %v2938
        %v3105 = vadd.f32 %v1518, %v2941
        %v3106 = vadd.f32 %v1519, %v2946
        %v3107 = vadd.f32 %v1520, %v2949
        %v3108 = vadd.f32 %v1521, %v2954
        %v3109 = vadd.f32 %v1522, %v2957
        %v3110 = vadd.f32 %v1523, %v2962
        %v3111 = vadd.f32 %v1524, %v2965
        %v3112 = vadd.f32 %v1525, %v2970
        %v3113 = vadd.f32 %v1526, %v2973
        %v3114 = vadd.f32 %v1527, %v2978
        %v3115 = vadd.f32 %v1528, %v2981
        %v3116 = vadd.f32 %v1529, %v2986
        %v3117 = vadd.f32 %v1530, %v2989
        %v3118 = vadd.f32 %v1531, %v2994
        %v3119 = vadd.f32 %v1532, %v2997
        %v3120 = vadd.f32 %v1533, %v3002
        %v3121 = vadd.f32 %v1534, %v3005
        %v3122 = vadd.f32 %v1535, %v3010
        %v3123 = vadd.f32 %v1536, %v3013
        %v3124 = vadd.f32 %v1537, %v3018
        %v3125 = vadd.f32 %v1538, %v3021
        %v3126 = vadd.f32 %v1539, %v3026
        %v3127 = vadd.f32 %v1540, %v3029
        %v3128 = vadd.f32 %v1541, %v3034
        %v3129 = vadd.f32 %v1542, %v3037
        %v3130 = vadd.f32 %v1543, %v3042
        %v3131 = vadd.f32 %v1544, %v3045
        %v3132 = vadd.f32 %v1545, %v3050
        %v3133 = vadd.f32 %v1546, %v3053
        %v3134 = vadd.f32 %v1547, %v3058
        %v3135 = vadd.f32 %v1548, %v3061
        %v3136 = vadd.f32 %v1549, %v3066
        %v3137 = vadd.f32 %v1550, %v3069
        %v3138 = vadd.f32 %v1551, %v3074
        %v3139 = vadd.f32 %v1552, %v3077
        %v3140 = vadd.f32 %v1553, %v3082
        %v3141 = vadd.f32 %v1554, %v3085
        %v3142 = vadd.f32 %v1555, %v3090
        %v3143 = vadd.f32 %v1556, %v3093
        %vm3144 = vcmask 400384
        %3145 = vst.msk [vmem:[#allocation2] sm:$0xff] %vm3144, %v3096
        %3146 = vst.msk [vmem:[#allocation2 + $0x8] sm:$0xff] %vm3144, %v3097
        %3147 = vst.msk [vmem:[#allocation2 + $0x10] sm:$0xff] %vm3144, %v3098
        %3148 = vst.msk [vmem:[#allocation2 + $0x18] sm:$0xff] %vm3144, %v3099
        %3149 = vst.msk [vmem:[#allocation2 + $0x20] sm:$0xff] %vm3144, %v3100
        %3150 = vst.msk [vmem:[#allocation2 + $0x28] sm:$0xff] %vm3144, %v3101
        %3151 = vst.msk [vmem:[#allocation2 + $0x30] sm:$0xff] %vm3144, %v3102
        %3152 = vst.msk [vmem:[#allocation2 + $0x38] sm:$0xff] %vm3144, %v3103
        %3153 = vst.msk [vmem:[#allocation2 + $0x40] sm:$0xff] %vm3144, %v3104
        %3154 = vst.msk [vmem:[#allocation2 + $0x48] sm:$0xff] %vm3144, %v3105
        %3155 = vst.msk [vmem:[#allocation2 + $0x50] sm:$0xff] %vm3144, %v3106
        %3156 = vst.msk [vmem:[#allocation2 + $0x58] sm:$0xff] %vm3144, %v3107
        %3157 = vst.msk [vmem:[#allocation2 + $0x60] sm:$0xff] %vm3144, %v3108
        %3158 = vst.msk [vmem:[#allocation2 + $0x68] sm:$0xff] %vm3144, %v3109
        %3159 = vst.msk [vmem:[#allocation2 + $0x70] sm:$0xff] %vm3144, %v3110
        %3160 = vst.msk [vmem:[#allocation2 + $0x78] sm:$0xff] %vm3144, %v3111
        %3161 = vst.msk [vmem:[#allocation2 + $0x80] sm:$0xff] %vm3144, %v3112
        %3162 = vst.msk [vmem:[#allocation2 + $0x88] sm:$0xff] %vm3144, %v3113
        %3163 = vst.msk [vmem:[#allocation2 + $0x90] sm:$0xff] %vm3144, %v3114
        %3164 = vst.msk [vmem:[#allocation2 + $0x98] sm:$0xff] %vm3144, %v3115
        %3165 = vst.msk [vmem:[#allocation2 + $0xa0] sm:$0xff] %vm3144, %v3116
        %3166 = vst.msk [vmem:[#allocation2 + $0xa8] sm:$0xff] %vm3144, %v3117
        %3167 = vst.msk [vmem:[#allocation2 + $0xb0] sm:$0xff] %vm3144, %v3118
        %3168 = vst.msk [vmem:[#allocation2 + $0xb8] sm:$0xff] %vm3144, %v3119
        %3169 = vst.msk [vmem:[#allocation2 + $0xc0] sm:$0xff] %vm3144, %v3120
        %3170 = vst.msk [vmem:[#allocation2 + $0xc8] sm:$0xff] %vm3144, %v3121
        %3171 = vst.msk [vmem:[#allocation2 + $0xd0] sm:$0xff] %vm3144, %v3122
        %3172 = vst.msk [vmem:[#allocation2 + $0xd8] sm:$0xff] %vm3144, %v3123
        %3173 = vst.msk [vmem:[#allocation2 + $0xe0] sm:$0xff] %vm3144, %v3124
        %3174 = vst.msk [vmem:[#allocation2 + $0xe8] sm:$0xff] %vm3144, %v3125
        %3175 = vst.msk [vmem:[#allocation2 + $0xf0] sm:$0xff] %vm3144, %v3126
        %3176 = vst.msk [vmem:[#allocation2 + $0xf8] sm:$0xff] %vm3144, %v3127
        %3177 = vst.msk [vmem:[#allocation2 + $0x100] sm:$0xff] %vm3144, %v3128
        %3178 = vst.msk [vmem:[#allocation2 + $0x108] sm:$0xff] %vm3144, %v3129
        %3179 = vst.msk [vmem:[#allocation2 + $0x110] sm:$0xff] %vm3144, %v3130
        %3180 = vst.msk [vmem:[#allocation2 + $0x118] sm:$0xff] %vm3144, %v3131
        %3181 = vst.msk [vmem:[#allocation2 + $0x120] sm:$0xff] %vm3144, %v3132
        %3182 = vst.msk [vmem:[#allocation2 + $0x128] sm:$0xff] %vm3144, %v3133
        %3183 = vst.msk [vmem:[#allocation2 + $0x130] sm:$0xff] %vm3144, %v3134
        %3184 = vst.msk [vmem:[#allocation2 + $0x138] sm:$0xff] %vm3144, %v3135
        %3185 = vst.msk [vmem:[#allocation2 + $0x140] sm:$0xff] %vm3144, %v3136
        %3186 = vst.msk [vmem:[#allocation2 + $0x148] sm:$0xff] %vm3144, %v3137
        %3187 = vst.msk [vmem:[#allocation2 + $0x150] sm:$0xff] %vm3144, %v3138
        %3188 = vst.msk [vmem:[#allocation2 + $0x158] sm:$0xff] %vm3144, %v3139
        %3189 = vst.msk [vmem:[#allocation2 + $0x160] sm:$0xff] %vm3144, %v3140
        %3190 = vst.msk [vmem:[#allocation2 + $0x168] sm:$0xff] %vm3144, %v3141
        %3191 = vst.msk [vmem:[#allocation2 + $0x170] sm:$0xff] %vm3144, %v3142
        %3192 = vst.msk [vmem:[#allocation2 + $0x178] sm:$0xff] %vm3144, %v3143
        %p3193 = scmp.eq.s32.totalorder %s21, 2
        // Predicated region
        $region68: #{tpu_custom_call.1} parent=58 // pred_check
          %p3194 = pneg %p3193
        $region69: #{tpu_custom_call.1} parent=58 // pred_check_branch
          %3196 = sbr.rel (%p3194) target = $region71
        $region70: #{tpu_custom_call.1} parent=58 // pred_region
          %v3197 = vld [vmem:[#allocation2] sm:$0xff]
          %v3198 = vld [vmem:[#allocation2 + $0x8] sm:$0xff]
          %v3199 = vld [vmem:[#allocation2 + $0x10] sm:$0xff]
          %v3200 = vld [vmem:[#allocation2 + $0x18] sm:$0xff]
          %v3201 = vld [vmem:[#allocation2 + $0x20] sm:$0xff]
          %v3202 = vld [vmem:[#allocation2 + $0x28] sm:$0xff]
          %v3203 = vld [vmem:[#allocation2 + $0x30] sm:$0xff]
          %v3204 = vld [vmem:[#allocation2 + $0x38] sm:$0xff]
          %v3205 = vld [vmem:[#allocation2 + $0x40] sm:$0xff]
          %v3206 = vld [vmem:[#allocation2 + $0x48] sm:$0xff]
          %v3207 = vld [vmem:[#allocation2 + $0x50] sm:$0xff]
          %v3208 = vld [vmem:[#allocation2 + $0x58] sm:$0xff]
          %v3209 = vld [vmem:[#allocation2 + $0x60] sm:$0xff]
          %v3210 = vld [vmem:[#allocation2 + $0x68] sm:$0xff]
          %v3211 = vld [vmem:[#allocation2 + $0x70] sm:$0xff]
          %v3212 = vld [vmem:[#allocation2 + $0x78] sm:$0xff]
          %v3213 = vld [vmem:[#allocation2 + $0x80] sm:$0xff]
          %v3214 = vld [vmem:[#allocation2 + $0x88] sm:$0xff]
          %v3215 = vld [vmem:[#allocation2 + $0x90] sm:$0xff]
          %v3216 = vld [vmem:[#allocation2 + $0x98] sm:$0xff]
          %v3217 = vld [vmem:[#allocation2 + $0xa0] sm:$0xff]
          %v3218 = vld [vmem:[#allocation2 + $0xa8] sm:$0xff]
          %v3219 = vld [vmem:[#allocation2 + $0xb0] sm:$0xff]
          %v3220 = vld [vmem:[#allocation2 + $0xb8] sm:$0xff]
          %v3221 = vld [vmem:[#allocation2 + $0xc0] sm:$0xff]
          %v3222 = vld [vmem:[#allocation2 + $0xc8] sm:$0xff]
          %v3223 = vld [vmem:[#allocation2 + $0xd0] sm:$0xff]
          %v3224 = vld [vmem:[#allocation2 + $0xd8] sm:$0xff]
          %v3225 = vld [vmem:[#allocation2 + $0xe0] sm:$0xff]
          %v3226 = vld [vmem:[#allocation2 + $0xe8] sm:$0xff]
          %v3227 = vld [vmem:[#allocation2 + $0xf0] sm:$0xff]
          %v3228 = vld [vmem:[#allocation2 + $0xf8] sm:$0xff]
          %v3229 = vld [vmem:[#allocation2 + $0x100] sm:$0xff]
          %v3230 = vld [vmem:[#allocation2 + $0x108] sm:$0xff]
          %v3231 = vld [vmem:[#allocation2 + $0x110] sm:$0xff]
          %v3232 = vld [vmem:[#allocation2 + $0x118] sm:$0xff]
          %v3233 = vld [vmem:[#allocation2 + $0x120] sm:$0xff]
          %v3234 = vld [vmem:[#allocation2 + $0x128] sm:$0xff]
          %v3235 = vld [vmem:[#allocation2 + $0x130] sm:$0xff]
          %v3236 = vld [vmem:[#allocation2 + $0x138] sm:$0xff]
          %v3237 = vld [vmem:[#allocation2 + $0x140] sm:$0xff]
          %v3238 = vld [vmem:[#allocation2 + $0x148] sm:$0xff]
          %v3239 = vld [vmem:[#allocation2 + $0x150] sm:$0xff]
          %v3240 = vld [vmem:[#allocation2 + $0x158] sm:$0xff]
          %v3241 = vld [vmem:[#allocation2 + $0x160] sm:$0xff]
          %v3242 = vld [vmem:[#allocation2 + $0x168] sm:$0xff]
          %v3243 = vld [vmem:[#allocation2 + $0x170] sm:$0xff]
          %v3244 = vld [vmem:[#allocation2 + $0x178] sm:$0xff]
          %v3245 = vsel %vm3144, %v3197, 0.0
          %3246 = vadd.xlane.f32.xlu0 %v3245
          %v3247 = vpop.xlane.xlu0 %3246
          %v3248 = vsel %vm3144, %v3198, 0.0
          %3249 = vadd.xlane.f32.xlu0 %v3248
          %v3250 = vpop.xlane.xlu0 %3249
          %v3251 = vsel %vm3144, %v3199, 0.0
          %3252 = vadd.xlane.f32.xlu0 %v3251
          %v3253 = vpop.xlane.xlu0 %3252
          %v3254 = vsel %vm3144, %v3200, 0.0
          %3255 = vadd.xlane.f32.xlu0 %v3254
          %v3256 = vpop.xlane.xlu0 %3255
          %v3257 = vsel %vm3144, %v3201, 0.0
          %3258 = vadd.xlane.f32.xlu0 %v3257
          %v3259 = vpop.xlane.xlu0 %3258
          %v3260 = vsel %vm3144, %v3202, 0.0
          %3261 = vadd.xlane.f32.xlu0 %v3260
          %v3262 = vpop.xlane.xlu0 %3261
          %v3263 = vsel %vm3144, %v3203, 0.0
          %3264 = vadd.xlane.f32.xlu0 %v3263
          %v3265 = vpop.xlane.xlu0 %3264
          %v3266 = vsel %vm3144, %v3204, 0.0
          %3267 = vadd.xlane.f32.xlu0 %v3266
          %v3268 = vpop.xlane.xlu0 %3267
          %v3269 = vsel %vm3144, %v3205, 0.0
          %3270 = vadd.xlane.f32.xlu0 %v3269
          %v3271 = vpop.xlane.xlu0 %3270
          %v3272 = vsel %vm3144, %v3206, 0.0
          %3273 = vadd.xlane.f32.xlu0 %v3272
          %v3274 = vpop.xlane.xlu0 %3273
          %v3275 = vsel %vm3144, %v3207, 0.0
          %3276 = vadd.xlane.f32.xlu0 %v3275
          %v3277 = vpop.xlane.xlu0 %3276
          %v3278 = vsel %vm3144, %v3208, 0.0
          %3279 = vadd.xlane.f32.xlu0 %v3278
          %v3280 = vpop.xlane.xlu0 %3279
          %v3281 = vsel %vm3144, %v3209, 0.0
          %3282 = vadd.xlane.f32.xlu0 %v3281
          %v3283 = vpop.xlane.xlu0 %3282
          %v3284 = vsel %vm3144, %v3210, 0.0
          %3285 = vadd.xlane.f32.xlu0 %v3284
          %v3286 = vpop.xlane.xlu0 %3285
          %v3287 = vsel %vm3144, %v3211, 0.0
          %3288 = vadd.xlane.f32.xlu0 %v3287
          %v3289 = vpop.xlane.xlu0 %3288
          %v3290 = vsel %vm3144, %v3212, 0.0
          %3291 = vadd.xlane.f32.xlu0 %v3290
          %v3292 = vpop.xlane.xlu0 %3291
          %v3293 = vsel %vm3144, %v3213, 0.0
          %3294 = vadd.xlane.f32.xlu0 %v3293
          %v3295 = vpop.xlane.xlu0 %3294
          %v3296 = vsel %vm3144, %v3214, 0.0
          %3297 = vadd.xlane.f32.xlu0 %v3296
          %v3298 = vpop.xlane.xlu0 %3297
          %v3299 = vsel %vm3144, %v3215, 0.0
          %3300 = vadd.xlane.f32.xlu0 %v3299
          %v3301 = vpop.xlane.xlu0 %3300
          %v3302 = vsel %vm3144, %v3216, 0.0
          %3303 = vadd.xlane.f32.xlu0 %v3302
          %v3304 = vpop.xlane.xlu0 %3303
          %v3305 = vsel %vm3144, %v3217, 0.0
          %3306 = vadd.xlane.f32.xlu0 %v3305
          %v3307 = vpop.xlane.xlu0 %3306
          %v3308 = vsel %vm3144, %v3218, 0.0
          %3309 = vadd.xlane.f32.xlu0 %v3308
          %v3310 = vpop.xlane.xlu0 %3309
          %v3311 = vsel %vm3144, %v3219, 0.0
          %3312 = vadd.xlane.f32.xlu0 %v3311
          %v3313 = vpop.xlane.xlu0 %3312
          %v3314 = vsel %vm3144, %v3220, 0.0
          %3315 = vadd.xlane.f32.xlu0 %v3314
          %v3316 = vpop.xlane.xlu0 %3315
          %v3317 = vsel %vm3144, %v3221, 0.0
          %3318 = vadd.xlane.f32.xlu0 %v3317
          %v3319 = vpop.xlane.xlu0 %3318
          %v3320 = vsel %vm3144, %v3222, 0.0
          %3321 = vadd.xlane.f32.xlu0 %v3320
          %v3322 = vpop.xlane.xlu0 %3321
          %v3323 = vsel %vm3144, %v3223, 0.0
          %3324 = vadd.xlane.f32.xlu0 %v3323
          %v3325 = vpop.xlane.xlu0 %3324
          %v3326 = vsel %vm3144, %v3224, 0.0
          %3327 = vadd.xlane.f32.xlu0 %v3326
          %v3328 = vpop.xlane.xlu0 %3327
          %v3329 = vsel %vm3144, %v3225, 0.0
          %3330 = vadd.xlane.f32.xlu0 %v3329
          %v3331 = vpop.xlane.xlu0 %3330
          %v3332 = vsel %vm3144, %v3226, 0.0
          %3333 = vadd.xlane.f32.xlu0 %v3332
          %v3334 = vpop.xlane.xlu0 %3333
          %v3335 = vsel %vm3144, %v3227, 0.0
          %3336 = vadd.xlane.f32.xlu0 %v3335
          %v3337 = vpop.xlane.xlu0 %3336
          %v3338 = vsel %vm3144, %v3228, 0.0
          %3339 = vadd.xlane.f32.xlu0 %v3338
          %v3340 = vpop.xlane.xlu0 %3339
          %v3341 = vsel %vm3144, %v3229, 0.0
          %3342 = vadd.xlane.f32.xlu0 %v3341
          %v3343 = vpop.xlane.xlu0 %3342
          %v3344 = vsel %vm3144, %v3230, 0.0
          %3345 = vadd.xlane.f32.xlu0 %v3344
          %v3346 = vpop.xlane.xlu0 %3345
          %v3347 = vsel %vm3144, %v3231, 0.0
          %3348 = vadd.xlane.f32.xlu0 %v3347
          %v3349 = vpop.xlane.xlu0 %3348
          %v3350 = vsel %vm3144, %v3232, 0.0
          %3351 = vadd.xlane.f32.xlu0 %v3350
          %v3352 = vpop.xlane.xlu0 %3351
          %v3353 = vsel %vm3144, %v3233, 0.0
          %3354 = vadd.xlane.f32.xlu0 %v3353
          %v3355 = vpop.xlane.xlu0 %3354
          %v3356 = vsel %vm3144, %v3234, 0.0
          %3357 = vadd.xlane.f32.xlu0 %v3356
          %v3358 = vpop.xlane.xlu0 %3357
          %v3359 = vsel %vm3144, %v3235, 0.0
          %3360 = vadd.xlane.f32.xlu0 %v3359
          %v3361 = vpop.xlane.xlu0 %3360
          %v3362 = vsel %vm3144, %v3236, 0.0
          %3363 = vadd.xlane.f32.xlu0 %v3362
          %v3364 = vpop.xlane.xlu0 %3363
          %v3365 = vsel %vm3144, %v3237, 0.0
          %3366 = vadd.xlane.f32.xlu0 %v3365
          %v3367 = vpop.xlane.xlu0 %3366
          %v3368 = vsel %vm3144, %v3238, 0.0
          %3369 = vadd.xlane.f32.xlu0 %v3368
          %v3370 = vpop.xlane.xlu0 %3369
          %v3371 = vsel %vm3144, %v3239, 0.0
          %3372 = vadd.xlane.f32.xlu0 %v3371
          %v3373 = vpop.xlane.xlu0 %3372
          %v3374 = vsel %vm3144, %v3240, 0.0
          %3375 = vadd.xlane.f32.xlu0 %v3374
          %v3376 = vpop.xlane.xlu0 %3375
          %v3377 = vsel %vm3144, %v3241, 0.0
          %3378 = vadd.xlane.f32.xlu0 %v3377
          %v3379 = vpop.xlane.xlu0 %3378
          %v3380 = vsel %vm3144, %v3242, 0.0
          %3381 = vadd.xlane.f32.xlu0 %v3380
          %v3382 = vpop.xlane.xlu0 %3381
          %v3383 = vsel %vm3144, %v3243, 0.0
          %3384 = vadd.xlane.f32.xlu0 %v3383
          %v3385 = vpop.xlane.xlu0 %3384
          %v3386 = vsel %vm3144, %v3244, 0.0
          %3387 = vadd.xlane.f32.xlu0 %v3386
          %v3388 = vpop.xlane.xlu0 %3387
          %v3389 = vmul.f32 %v3247, 0.020408163
          %v3390 = vmul.f32 %v3250, 0.020408163
          %v3391 = vmul.f32 %v3253, 0.020408163
          %v3392 = vmul.f32 %v3256, 0.020408163
          %v3393 = vmul.f32 %v3259, 0.020408163
          %v3394 = vmul.f32 %v3262, 0.020408163
          %v3395 = vmul.f32 %v3265, 0.020408163
          %v3396 = vmul.f32 %v3268, 0.020408163
          %v3397 = vmul.f32 %v3271, 0.020408163
          %v3398 = vmul.f32 %v3274, 0.020408163
          %v3399 = vmul.f32 %v3277, 0.020408163
          %v3400 = vmul.f32 %v3280, 0.020408163
          %v3401 = vmul.f32 %v3283, 0.020408163
          %v3402 = vmul.f32 %v3286, 0.020408163
          %v3403 = vmul.f32 %v3289, 0.020408163
          %v3404 = vmul.f32 %v3292, 0.020408163
          %v3405 = vmul.f32 %v3295, 0.020408163
          %v3406 = vmul.f32 %v3298, 0.020408163
          %v3407 = vmul.f32 %v3301, 0.020408163
          %v3408 = vmul.f32 %v3304, 0.020408163
          %v3409 = vmul.f32 %v3307, 0.020408163
          %v3410 = vmul.f32 %v3310, 0.020408163
          %v3411 = vmul.f32 %v3313, 0.020408163
          %v3412 = vmul.f32 %v3316, 0.020408163
          %v3413 = vmul.f32 %v3319, 0.020408163
          %v3414 = vmul.f32 %v3322, 0.020408163
          %v3415 = vmul.f32 %v3325, 0.020408163
          %v3416 = vmul.f32 %v3328, 0.020408163
          %v3417 = vmul.f32 %v3331, 0.020408163
          %v3418 = vmul.f32 %v3334, 0.020408163
          %v3419 = vmul.f32 %v3337, 0.020408163
          %v3420 = vmul.f32 %v3340, 0.020408163
          %v3421 = vmul.f32 %v3343, 0.020408163
          %v3422 = vmul.f32 %v3346, 0.020408163
          %v3423 = vmul.f32 %v3349, 0.020408163
          %v3424 = vmul.f32 %v3352, 0.020408163
          %v3425 = vmul.f32 %v3355, 0.020408163
          %v3426 = vmul.f32 %v3358, 0.020408163
          %v3427 = vmul.f32 %v3361, 0.020408163
          %v3428 = vmul.f32 %v3364, 0.020408163
          %v3429 = vmul.f32 %v3367, 0.020408163
          %v3430 = vmul.f32 %v3370, 0.020408163
          %v3431 = vmul.f32 %v3373, 0.020408163
          %v3432 = vmul.f32 %v3376, 0.020408163
          %v3433 = vmul.f32 %v3379, 0.020408163
          %v3434 = vmul.f32 %v3382, 0.020408163
          %v3435 = vmul.f32 %v3385, 0.020408163
          %v3436 = vmul.f32 %v3388, 0.020408163
          %v3437 = vsub.f32 %v3197, %v3389
          %v3438 = vsub.f32 %v3198, %v3390
          %v3439 = vsub.f32 %v3199, %v3391
          %v3440 = vsub.f32 %v3200, %v3392
          %v3441 = vsub.f32 %v3201, %v3393
          %v3442 = vsub.f32 %v3202, %v3394
          %v3443 = vsub.f32 %v3203, %v3395
          %v3444 = vsub.f32 %v3204, %v3396
          %v3445 = vsub.f32 %v3205, %v3397
          %v3446 = vsub.f32 %v3206, %v3398
          %v3447 = vsub.f32 %v3207, %v3399
          %v3448 = vsub.f32 %v3208, %v3400
          %v3449 = vsub.f32 %v3209, %v3401
          %v3450 = vsub.f32 %v3210, %v3402
          %v3451 = vsub.f32 %v3211, %v3403
          %v3452 = vsub.f32 %v3212, %v3404
          %v3453 = vsub.f32 %v3213, %v3405
          %v3454 = vsub.f32 %v3214, %v3406
          %v3455 = vsub.f32 %v3215, %v3407
          %v3456 = vsub.f32 %v3216, %v3408
          %v3457 = vsub.f32 %v3217, %v3409
          %v3458 = vsub.f32 %v3218, %v3410
          %v3459 = vsub.f32 %v3219, %v3411
          %v3460 = vsub.f32 %v3220, %v3412
          %v3461 = vsub.f32 %v3221, %v3413
          %v3462 = vsub.f32 %v3222, %v3414
          %v3463 = vsub.f32 %v3223, %v3415
          %v3464 = vsub.f32 %v3224, %v3416
          %v3465 = vsub.f32 %v3225, %v3417
          %v3466 = vsub.f32 %v3226, %v3418
          %v3467 = vsub.f32 %v3227, %v3419
          %v3468 = vsub.f32 %v3228, %v3420
          %v3469 = vsub.f32 %v3229, %v3421
          %v3470 = vsub.f32 %v3230, %v3422
          %v3471 = vsub.f32 %v3231, %v3423
          %v3472 = vsub.f32 %v3232, %v3424
          %v3473 = vsub.f32 %v3233, %v3425
          %v3474 = vsub.f32 %v3234, %v3426
          %v3475 = vsub.f32 %v3235, %v3427
          %v3476 = vsub.f32 %v3236, %v3428
          %v3477 = vsub.f32 %v3237, %v3429
          %v3478 = vsub.f32 %v3238, %v3430
          %v3479 = vsub.f32 %v3239, %v3431
          %v3480 = vsub.f32 %v3240, %v3432
          %v3481 = vsub.f32 %v3241, %v3433
          %v3482 = vsub.f32 %v3242, %v3434
          %v3483 = vsub.f32 %v3243, %v3435
          %v3484 = vsub.f32 %v3244, %v3436
          %v3485 = vmul.f32 %v3437, %v3437
          %v3486 = vmul.f32 %v3438, %v3438
          %v3487 = vmul.f32 %v3439, %v3439
          %v3488 = vmul.f32 %v3440, %v3440
          %v3489 = vmul.f32 %v3441, %v3441
          %v3490 = vmul.f32 %v3442, %v3442
          %v3491 = vmul.f32 %v3443, %v3443
          %v3492 = vmul.f32 %v3444, %v3444
          %v3493 = vmul.f32 %v3445, %v3445
          %v3494 = vmul.f32 %v3446, %v3446
          %v3495 = vmul.f32 %v3447, %v3447
          %v3496 = vmul.f32 %v3448, %v3448
          %v3497 = vmul.f32 %v3449, %v3449
          %v3498 = vmul.f32 %v3450, %v3450
          %v3499 = vmul.f32 %v3451, %v3451
          %v3500 = vmul.f32 %v3452, %v3452
          %v3501 = vmul.f32 %v3453, %v3453
          %v3502 = vmul.f32 %v3454, %v3454
          %v3503 = vmul.f32 %v3455, %v3455
          %v3504 = vmul.f32 %v3456, %v3456
          %v3505 = vmul.f32 %v3457, %v3457
          %v3506 = vmul.f32 %v3458, %v3458
          %v3507 = vmul.f32 %v3459, %v3459
          %v3508 = vmul.f32 %v3460, %v3460
          %v3509 = vmul.f32 %v3461, %v3461
          %v3510 = vmul.f32 %v3462, %v3462
          %v3511 = vmul.f32 %v3463, %v3463
          %v3512 = vmul.f32 %v3464, %v3464
          %v3513 = vmul.f32 %v3465, %v3465
          %v3514 = vmul.f32 %v3466, %v3466
          %v3515 = vmul.f32 %v3467, %v3467
          %v3516 = vmul.f32 %v3468, %v3468
          %v3517 = vmul.f32 %v3469, %v3469
          %v3518 = vmul.f32 %v3470, %v3470
          %v3519 = vmul.f32 %v3471, %v3471
          %v3520 = vmul.f32 %v3472, %v3472
          %v3521 = vmul.f32 %v3473, %v3473
          %v3522 = vmul.f32 %v3474, %v3474
          %v3523 = vmul.f32 %v3475, %v3475
          %v3524 = vmul.f32 %v3476, %v3476
          %v3525 = vmul.f32 %v3477, %v3477
          %v3526 = vmul.f32 %v3478, %v3478
          %v3527 = vmul.f32 %v3479, %v3479
          %v3528 = vmul.f32 %v3480, %v3480
          %v3529 = vmul.f32 %v3481, %v3481
          %v3530 = vmul.f32 %v3482, %v3482
          %v3531 = vmul.f32 %v3483, %v3483
          %v3532 = vmul.f32 %v3484, %v3484
          %v3533 = vsel %vm3144, %v3485, 0.0
          %3534 = vadd.xlane.f32.xlu0 %v3533
          %v3535 = vpop.xlane.xlu0 %3534
          %v3536 = vsel %vm3144, %v3486, 0.0
          %3537 = vadd.xlane.f32.xlu0 %v3536
          %v3538 = vpop.xlane.xlu0 %3537
          %v3539 = vsel %vm3144, %v3487, 0.0
          %3540 = vadd.xlane.f32.xlu0 %v3539
          %v3541 = vpop.xlane.xlu0 %3540
          %v3542 = vsel %vm3144, %v3488, 0.0
          %3543 = vadd.xlane.f32.xlu0 %v3542
          %v3544 = vpop.xlane.xlu0 %3543
          %v3545 = vsel %vm3144, %v3489, 0.0
          %3546 = vadd.xlane.f32.xlu0 %v3545
          %v3547 = vpop.xlane.xlu0 %3546
          %v3548 = vsel %vm3144, %v3490, 0.0
          %3549 = vadd.xlane.f32.xlu0 %v3548
          %v3550 = vpop.xlane.xlu0 %3549
          %v3551 = vsel %vm3144, %v3491, 0.0
          %3552 = vadd.xlane.f32.xlu0 %v3551
          %v3553 = vpop.xlane.xlu0 %3552
          %v3554 = vsel %vm3144, %v3492, 0.0
          %3555 = vadd.xlane.f32.xlu0 %v3554
          %v3556 = vpop.xlane.xlu0 %3555
          %v3557 = vsel %vm3144, %v3493, 0.0
          %3558 = vadd.xlane.f32.xlu0 %v3557
          %v3559 = vpop.xlane.xlu0 %3558
          %v3560 = vsel %vm3144, %v3494, 0.0
          %3561 = vadd.xlane.f32.xlu0 %v3560
          %v3562 = vpop.xlane.xlu0 %3561
          %v3563 = vsel %vm3144, %v3495, 0.0
          %3564 = vadd.xlane.f32.xlu0 %v3563
          %v3565 = vpop.xlane.xlu0 %3564
          %v3566 = vsel %vm3144, %v3496, 0.0
          %3567 = vadd.xlane.f32.xlu0 %v3566
          %v3568 = vpop.xlane.xlu0 %3567
          %v3569 = vsel %vm3144, %v3497, 0.0
          %3570 = vadd.xlane.f32.xlu0 %v3569
          %v3571 = vpop.xlane.xlu0 %3570
          %v3572 = vsel %vm3144, %v3498, 0.0
          %3573 = vadd.xlane.f32.xlu0 %v3572
          %v3574 = vpop.xlane.xlu0 %3573
          %v3575 = vsel %vm3144, %v3499, 0.0
          %3576 = vadd.xlane.f32.xlu0 %v3575
          %v3577 = vpop.xlane.xlu0 %3576
          %v3578 = vsel %vm3144, %v3500, 0.0
          %3579 = vadd.xlane.f32.xlu0 %v3578
          %v3580 = vpop.xlane.xlu0 %3579
          %v3581 = vsel %vm3144, %v3501, 0.0
          %3582 = vadd.xlane.f32.xlu0 %v3581
          %v3583 = vpop.xlane.xlu0 %3582
          %v3584 = vsel %vm3144, %v3502, 0.0
          %3585 = vadd.xlane.f32.xlu0 %v3584
          %v3586 = vpop.xlane.xlu0 %3585
          %v3587 = vsel %vm3144, %v3503, 0.0
          %3588 = vadd.xlane.f32.xlu0 %v3587
          %v3589 = vpop.xlane.xlu0 %3588
          %v3590 = vsel %vm3144, %v3504, 0.0
          %3591 = vadd.xlane.f32.xlu0 %v3590
          %v3592 = vpop.xlane.xlu0 %3591
          %v3593 = vsel %vm3144, %v3505, 0.0
          %3594 = vadd.xlane.f32.xlu0 %v3593
          %v3595 = vpop.xlane.xlu0 %3594
          %v3596 = vsel %vm3144, %v3506, 0.0
          %3597 = vadd.xlane.f32.xlu0 %v3596
          %v3598 = vpop.xlane.xlu0 %3597
          %v3599 = vsel %vm3144, %v3507, 0.0
          %3600 = vadd.xlane.f32.xlu0 %v3599
          %v3601 = vpop.xlane.xlu0 %3600
          %v3602 = vsel %vm3144, %v3508, 0.0
          %3603 = vadd.xlane.f32.xlu0 %v3602
          %v3604 = vpop.xlane.xlu0 %3603
          %v3605 = vsel %vm3144, %v3509, 0.0
          %3606 = vadd.xlane.f32.xlu0 %v3605
          %v3607 = vpop.xlane.xlu0 %3606
          %v3608 = vsel %vm3144, %v3510, 0.0
          %3609 = vadd.xlane.f32.xlu0 %v3608
          %v3610 = vpop.xlane.xlu0 %3609
          %v3611 = vsel %vm3144, %v3511, 0.0
          %3612 = vadd.xlane.f32.xlu0 %v3611
          %v3613 = vpop.xlane.xlu0 %3612
          %v3614 = vsel %vm3144, %v3512, 0.0
          %3615 = vadd.xlane.f32.xlu0 %v3614
          %v3616 = vpop.xlane.xlu0 %3615
          %v3617 = vsel %vm3144, %v3513, 0.0
          %3618 = vadd.xlane.f32.xlu0 %v3617
          %v3619 = vpop.xlane.xlu0 %3618
          %v3620 = vsel %vm3144, %v3514, 0.0
          %3621 = vadd.xlane.f32.xlu0 %v3620
          %v3622 = vpop.xlane.xlu0 %3621
          %v3623 = vsel %vm3144, %v3515, 0.0
          %3624 = vadd.xlane.f32.xlu0 %v3623
          %v3625 = vpop.xlane.xlu0 %3624
          %v3626 = vsel %vm3144, %v3516, 0.0
          %3627 = vadd.xlane.f32.xlu0 %v3626
          %v3628 = vpop.xlane.xlu0 %3627
          %v3629 = vsel %vm3144, %v3517, 0.0
          %3630 = vadd.xlane.f32.xlu0 %v3629
          %v3631 = vpop.xlane.xlu0 %3630
          %v3632 = vsel %vm3144, %v3518, 0.0
          %3633 = vadd.xlane.f32.xlu0 %v3632
          %v3634 = vpop.xlane.xlu0 %3633
          %v3635 = vsel %vm3144, %v3519, 0.0
          %3636 = vadd.xlane.f32.xlu0 %v3635
          %v3637 = vpop.xlane.xlu0 %3636
          %v3638 = vsel %vm3144, %v3520, 0.0
          %3639 = vadd.xlane.f32.xlu0 %v3638
          %v3640 = vpop.xlane.xlu0 %3639
          %v3641 = vsel %vm3144, %v3521, 0.0
          %3642 = vadd.xlane.f32.xlu0 %v3641
          %v3643 = vpop.xlane.xlu0 %3642
          %v3644 = vsel %vm3144, %v3522, 0.0
          %3645 = vadd.xlane.f32.xlu0 %v3644
          %v3646 = vpop.xlane.xlu0 %3645
          %v3647 = vsel %vm3144, %v3523, 0.0
          %3648 = vadd.xlane.f32.xlu0 %v3647
          %v3649 = vpop.xlane.xlu0 %3648
          %v3650 = vsel %vm3144, %v3524, 0.0
          %3651 = vadd.xlane.f32.xlu0 %v3650
          %v3652 = vpop.xlane.xlu0 %3651
          %v3653 = vsel %vm3144, %v3525, 0.0
          %3654 = vadd.xlane.f32.xlu0 %v3653
          %v3655 = vpop.xlane.xlu0 %3654
          %v3656 = vsel %vm3144, %v3526, 0.0
          %3657 = vadd.xlane.f32.xlu0 %v3656
          %v3658 = vpop.xlane.xlu0 %3657
          %v3659 = vsel %vm3144, %v3527, 0.0
          %3660 = vadd.xlane.f32.xlu0 %v3659
          %v3661 = vpop.xlane.xlu0 %3660
          %v3662 = vsel %vm3144, %v3528, 0.0
          %3663 = vadd.xlane.f32.xlu0 %v3662
          %v3664 = vpop.xlane.xlu0 %3663
          %v3665 = vsel %vm3144, %v3529, 0.0
          %3666 = vadd.xlane.f32.xlu0 %v3665
          %v3667 = vpop.xlane.xlu0 %3666
          %v3668 = vsel %vm3144, %v3530, 0.0
          %3669 = vadd.xlane.f32.xlu0 %v3668
          %v3670 = vpop.xlane.xlu0 %3669
          %v3671 = vsel %vm3144, %v3531, 0.0
          %3672 = vadd.xlane.f32.xlu0 %v3671
          %v3673 = vpop.xlane.xlu0 %3672
          %v3674 = vsel %vm3144, %v3532, 0.0
          %3675 = vadd.xlane.f32.xlu0 %v3674
          %v3676 = vpop.xlane.xlu0 %3675
          %v3677 = vmul.f32 %v3535, 0.020408163
          %v3678 = vmul.f32 %v3538, 0.020408163
          %v3679 = vmul.f32 %v3541, 0.020408163
          %v3680 = vmul.f32 %v3544, 0.020408163
          %v3681 = vmul.f32 %v3547, 0.020408163
          %v3682 = vmul.f32 %v3550, 0.020408163
          %v3683 = vmul.f32 %v3553, 0.020408163
          %v3684 = vmul.f32 %v3556, 0.020408163
          %v3685 = vmul.f32 %v3559, 0.020408163
          %v3686 = vmul.f32 %v3562, 0.020408163
          %v3687 = vmul.f32 %v3565, 0.020408163
          %v3688 = vmul.f32 %v3568, 0.020408163
          %v3689 = vmul.f32 %v3571, 0.020408163
          %v3690 = vmul.f32 %v3574, 0.020408163
          %v3691 = vmul.f32 %v3577, 0.020408163
          %v3692 = vmul.f32 %v3580, 0.020408163
          %v3693 = vmul.f32 %v3583, 0.020408163
          %v3694 = vmul.f32 %v3586, 0.020408163
          %v3695 = vmul.f32 %v3589, 0.020408163
          %v3696 = vmul.f32 %v3592, 0.020408163
          %v3697 = vmul.f32 %v3595, 0.020408163
          %v3698 = vmul.f32 %v3598, 0.020408163
          %v3699 = vmul.f32 %v3601, 0.020408163
          %v3700 = vmul.f32 %v3604, 0.020408163
          %v3701 = vmul.f32 %v3607, 0.020408163
          %v3702 = vmul.f32 %v3610, 0.020408163
          %v3703 = vmul.f32 %v3613, 0.020408163
          %v3704 = vmul.f32 %v3616, 0.020408163
          %v3705 = vmul.f32 %v3619, 0.020408163
          %v3706 = vmul.f32 %v3622, 0.020408163
          %v3707 = vmul.f32 %v3625, 0.020408163
          %v3708 = vmul.f32 %v3628, 0.020408163
          %v3709 = vmul.f32 %v3631, 0.020408163
          %v3710 = vmul.f32 %v3634, 0.020408163
          %v3711 = vmul.f32 %v3637, 0.020408163
          %v3712 = vmul.f32 %v3640, 0.020408163
          %v3713 = vmul.f32 %v3643, 0.020408163
          %v3714 = vmul.f32 %v3646, 0.020408163
          %v3715 = vmul.f32 %v3649, 0.020408163
          %v3716 = vmul.f32 %v3652, 0.020408163
          %v3717 = vmul.f32 %v3655, 0.020408163
          %v3718 = vmul.f32 %v3658, 0.020408163
          %v3719 = vmul.f32 %v3661, 0.020408163
          %v3720 = vmul.f32 %v3664, 0.020408163
          %v3721 = vmul.f32 %v3667, 0.020408163
          %v3722 = vmul.f32 %v3670, 0.020408163
          %v3723 = vmul.f32 %v3673, 0.020408163
          %v3724 = vmul.f32 %v3676, 0.020408163
          %v3725 = vld [vmem:[%s625] sm:$0xff]
          %v3726 = vld [vmem:[%s625 + $0x8] sm:$0xff]
          %v3727 = vld [vmem:[%s625 + $0x10] sm:$0xff]
          %v3728 = vld [vmem:[%s625 + $0x18] sm:$0xff]
          %v3729 = vld [vmem:[%s625 + $0x20] sm:$0xff]
          %v3730 = vld [vmem:[%s625 + $0x28] sm:$0xff]
          %v3731 = vld [vmem:[%s625 + $0x30] sm:$0xff]
          %v3732 = vld [vmem:[%s625 + $0x38] sm:$0xff]
          %v3733 = vld [vmem:[%s625 + $0x40] sm:$0xff]
          %v3734 = vld [vmem:[%s625 + $0x48] sm:$0xff]
          %v3735 = vld [vmem:[%s625 + $0x50] sm:$0xff]
          %v3736 = vld [vmem:[%s625 + $0x58] sm:$0xff]
          %v3737 = vld [vmem:[%s625 + $0x60] sm:$0xff]
          %v3738 = vld [vmem:[%s625 + $0x68] sm:$0xff]
          %v3739 = vld [vmem:[%s625 + $0x70] sm:$0xff]
          %v3740 = vld [vmem:[%s625 + $0x78] sm:$0xff]
          %v3741 = vld [vmem:[%s625 + $0x80] sm:$0xff]
          %v3742 = vld [vmem:[%s625 + $0x88] sm:$0xff]
          %v3743 = vld [vmem:[%s625 + $0x90] sm:$0xff]
          %v3744 = vld [vmem:[%s625 + $0x98] sm:$0xff]
          %v3745 = vld [vmem:[%s625 + $0xa0] sm:$0xff]
          %v3746 = vld [vmem:[%s625 + $0xa8] sm:$0xff]
          %v3747 = vld [vmem:[%s625 + $0xb0] sm:$0xff]
          %v3748 = vld [vmem:[%s625 + $0xb8] sm:$0xff]
          %v3749 = vld [vmem:[%s625 + $0xc0] sm:$0xff]
          %v3750 = vld [vmem:[%s625 + $0xc8] sm:$0xff]
          %v3751 = vld [vmem:[%s625 + $0xd0] sm:$0xff]
          %v3752 = vld [vmem:[%s625 + $0xd8] sm:$0xff]
          %v3753 = vld [vmem:[%s625 + $0xe0] sm:$0xff]
          %v3754 = vld [vmem:[%s625 + $0xe8] sm:$0xff]
          %v3755 = vld [vmem:[%s625 + $0xf0] sm:$0xff]
          %v3756 = vld [vmem:[%s625 + $0xf8] sm:$0xff]
          %v3757 = vld [vmem:[%s625 + $0x100] sm:$0xff]
          %v3758 = vld [vmem:[%s625 + $0x108] sm:$0xff]
          %v3759 = vld [vmem:[%s625 + $0x110] sm:$0xff]
          %v3760 = vld [vmem:[%s625 + $0x118] sm:$0xff]
          %v3761 = vld [vmem:[%s625 + $0x120] sm:$0xff]
          %v3762 = vld [vmem:[%s625 + $0x128] sm:$0xff]
          %v3763 = vld [vmem:[%s625 + $0x130] sm:$0xff]
          %v3764 = vld [vmem:[%s625 + $0x138] sm:$0xff]
          %v3765 = vld [vmem:[%s625 + $0x140] sm:$0xff]
          %v3766 = vld [vmem:[%s625 + $0x148] sm:$0xff]
          %v3767 = vld [vmem:[%s625 + $0x150] sm:$0xff]
          %v3768 = vld [vmem:[%s625 + $0x158] sm:$0xff]
          %v3769 = vld [vmem:[%s625 + $0x160] sm:$0xff]
          %v3770 = vld [vmem:[%s625 + $0x168] sm:$0xff]
          %v3771 = vld [vmem:[%s625 + $0x170] sm:$0xff]
          %v3772 = vld [vmem:[%s625 + $0x178] sm:$0xff]
          %v3773 = vadd.f32 %v3677, 0.001
          %v3774 = vadd.f32 %v3678, 0.001
          %v3775 = vadd.f32 %v3679, 0.001
          %v3776 = vadd.f32 %v3680, 0.001
          %v3777 = vadd.f32 %v3681, 0.001
          %v3778 = vadd.f32 %v3682, 0.001
          %v3779 = vadd.f32 %v3683, 0.001
          %v3780 = vadd.f32 %v3684, 0.001
          %v3781 = vadd.f32 %v3685, 0.001
          %v3782 = vadd.f32 %v3686, 0.001
          %v3783 = vadd.f32 %v3687, 0.001
          %v3784 = vadd.f32 %v3688, 0.001
          %v3785 = vadd.f32 %v3689, 0.001
          %v3786 = vadd.f32 %v3690, 0.001
          %v3787 = vadd.f32 %v3691, 0.001
          %v3788 = vadd.f32 %v3692, 0.001
          %v3789 = vadd.f32 %v3693, 0.001
          %v3790 = vadd.f32 %v3694, 0.001
          %v3791 = vadd.f32 %v3695, 0.001
          %v3792 = vadd.f32 %v3696, 0.001
          %v3793 = vadd.f32 %v3697, 0.001
          %v3794 = vadd.f32 %v3698, 0.001
          %v3795 = vadd.f32 %v3699, 0.001
          %v3796 = vadd.f32 %v3700, 0.001
          %v3797 = vadd.f32 %v3701, 0.001
          %v3798 = vadd.f32 %v3702, 0.001
          %v3799 = vadd.f32 %v3703, 0.001
          %v3800 = vadd.f32 %v3704, 0.001
          %v3801 = vadd.f32 %v3705, 0.001
          %v3802 = vadd.f32 %v3706, 0.001
          %v3803 = vadd.f32 %v3707, 0.001
          %v3804 = vadd.f32 %v3708, 0.001
          %v3805 = vadd.f32 %v3709, 0.001
          %v3806 = vadd.f32 %v3710, 0.001
          %v3807 = vadd.f32 %v3711, 0.001
          %v3808 = vadd.f32 %v3712, 0.001
          %v3809 = vadd.f32 %v3713, 0.001
          %v3810 = vadd.f32 %v3714, 0.001
          %v3811 = vadd.f32 %v3715, 0.001
          %v3812 = vadd.f32 %v3716, 0.001
          %v3813 = vadd.f32 %v3717, 0.001
          %v3814 = vadd.f32 %v3718, 0.001
          %v3815 = vadd.f32 %v3719, 0.001
          %v3816 = vadd.f32 %v3720, 0.001
          %v3817 = vadd.f32 %v3721, 0.001
          %v3818 = vadd.f32 %v3722, 0.001
          %v3819 = vadd.f32 %v3723, 0.001
          %v3820 = vadd.f32 %v3724, 0.001
          %v3821 = vrsqrt.pop %v3773
          %v3822 = vrsqrt.pop %v3774
          %v3823 = vrsqrt.pop %v3775
          %v3824 = vrsqrt.pop %v3776
          %v3825 = vrsqrt.pop %v3777
          %v3826 = vrsqrt.pop %v3778
          %v3827 = vrsqrt.pop %v3779
          %v3828 = vrsqrt.pop %v3780
          %v3829 = vrsqrt.pop %v3781
          %v3830 = vrsqrt.pop %v3782
          %v3831 = vrsqrt.pop %v3783
          %v3832 = vrsqrt.pop %v3784
          %v3833 = vrsqrt.pop %v3785
          %v3834 = vrsqrt.pop %v3786
          %v3835 = vrsqrt.pop %v3787
          %v3836 = vrsqrt.pop %v3788
          %v3837 = vrsqrt.pop %v3789
          %v3838 = vrsqrt.pop %v3790
          %v3839 = vrsqrt.pop %v3791
          %v3840 = vrsqrt.pop %v3792
          %v3841 = vrsqrt.pop %v3793
          %v3842 = vrsqrt.pop %v3794
          %v3843 = vrsqrt.pop %v3795
          %v3844 = vrsqrt.pop %v3796
          %v3845 = vrsqrt.pop %v3797
          %v3846 = vrsqrt.pop %v3798
          %v3847 = vrsqrt.pop %v3799
          %v3848 = vrsqrt.pop %v3800
          %v3849 = vrsqrt.pop %v3801
          %v3850 = vrsqrt.pop %v3802
          %v3851 = vrsqrt.pop %v3803
          %v3852 = vrsqrt.pop %v3804
          %v3853 = vrsqrt.pop %v3805
          %v3854 = vrsqrt.pop %v3806
          %v3855 = vrsqrt.pop %v3807
          %v3856 = vrsqrt.pop %v3808
          %v3857 = vrsqrt.pop %v3809
          %v3858 = vrsqrt.pop %v3810
          %v3859 = vrsqrt.pop %v3811
          %v3860 = vrsqrt.pop %v3812
          %v3861 = vrsqrt.pop %v3813
          %v3862 = vrsqrt.pop %v3814
          %v3863 = vrsqrt.pop %v3815
          %v3864 = vrsqrt.pop %v3816
          %v3865 = vrsqrt.pop %v3817
          %v3866 = vrsqrt.pop %v3818
          %v3867 = vrsqrt.pop %v3819
          %v3868 = vrsqrt.pop %v3820
          %v3869 = vmul.f32 %v3725, %v3821
          %v3870 = vmul.f32 %v3726, %v3822
          %v3871 = vmul.f32 %v3727, %v3823
          %v3872 = vmul.f32 %v3728, %v3824
          %v3873 = vmul.f32 %v3729, %v3825
          %v3874 = vmul.f32 %v3730, %v3826
          %v3875 = vmul.f32 %v3731, %v3827
          %v3876 = vmul.f32 %v3732, %v3828
          %v3877 = vmul.f32 %v3733, %v3829
          %v3878 = vmul.f32 %v3734, %v3830
          %v3879 = vmul.f32 %v3735, %v3831
          %v3880 = vmul.f32 %v3736, %v3832
          %v3881 = vmul.f32 %v3737, %v3833
          %v3882 = vmul.f32 %v3738, %v3834
          %v3883 = vmul.f32 %v3739, %v3835
          %v3884 = vmul.f32 %v3740, %v3836
          %v3885 = vmul.f32 %v3741, %v3837
          %v3886 = vmul.f32 %v3742, %v3838
          %v3887 = vmul.f32 %v3743, %v3839
          %v3888 = vmul.f32 %v3744, %v3840
          %v3889 = vmul.f32 %v3745, %v3841
          %v3890 = vmul.f32 %v3746, %v3842
          %v3891 = vmul.f32 %v3747, %v3843
          %v3892 = vmul.f32 %v3748, %v3844
          %v3893 = vmul.f32 %v3749, %v3845
          %v3894 = vmul.f32 %v3750, %v3846
          %v3895 = vmul.f32 %v3751, %v3847
          %v3896 = vmul.f32 %v3752, %v3848
          %v3897 = vmul.f32 %v3753, %v3849
          %v3898 = vmul.f32 %v3754, %v3850
          %v3899 = vmul.f32 %v3755, %v3851
          %v3900 = vmul.f32 %v3756, %v3852
          %v3901 = vmul.f32 %v3757, %v3853
          %v3902 = vmul.f32 %v3758, %v3854
          %v3903 = vmul.f32 %v3759, %v3855
          %v3904 = vmul.f32 %v3760, %v3856
          %v3905 = vmul.f32 %v3761, %v3857
          %v3906 = vmul.f32 %v3762, %v3858
          %v3907 = vmul.f32 %v3763, %v3859
          %v3908 = vmul.f32 %v3764, %v3860
          %v3909 = vmul.f32 %v3765, %v3861
          %v3910 = vmul.f32 %v3766, %v3862
          %v3911 = vmul.f32 %v3767, %v3863
          %v3912 = vmul.f32 %v3768, %v3864
          %v3913 = vmul.f32 %v3769, %v3865
          %v3914 = vmul.f32 %v3770, %v3866
          %v3915 = vmul.f32 %v3771, %v3867
          %v3916 = vmul.f32 %v3772, %v3868
          %3918 = vset.pattern.permute.xlu0 0
          %3919 = vperm.xlu0 %3918, %v3869
          %v3920 = vpop.permute.xlu0 %3919
          %3923 = vset.pattern.permute.xlu0 0
          %3924 = vperm.xlu0 %3923, %v3870
          %v3925 = vpop.permute.xlu0 %3924
          %3928 = vset.pattern.permute.xlu0 0
          %3929 = vperm.xlu0 %3928, %v3871
          %v3930 = vpop.permute.xlu0 %3929
          %3933 = vset.pattern.permute.xlu0 0
          %3934 = vperm.xlu0 %3933, %v3872
          %v3935 = vpop.permute.xlu0 %3934
          %3938 = vset.pattern.permute.xlu0 0
          %3939 = vperm.xlu0 %3938, %v3873
          %v3940 = vpop.permute.xlu0 %3939
          %3943 = vset.pattern.permute.xlu0 0
          %3944 = vperm.xlu0 %3943, %v3874
          %v3945 = vpop.permute.xlu0 %3944
          %3948 = vset.pattern.permute.xlu0 0
          %3949 = vperm.xlu0 %3948, %v3875
          %v3950 = vpop.permute.xlu0 %3949
          %3953 = vset.pattern.permute.xlu0 0
          %3954 = vperm.xlu0 %3953, %v3876
          %v3955 = vpop.permute.xlu0 %3954
          %3958 = vset.pattern.permute.xlu0 0
          %3959 = vperm.xlu0 %3958, %v3877
          %v3960 = vpop.permute.xlu0 %3959
          %3963 = vset.pattern.permute.xlu0 0
          %3964 = vperm.xlu0 %3963, %v3878
          %v3965 = vpop.permute.xlu0 %3964
          %3968 = vset.pattern.permute.xlu0 0
          %3969 = vperm.xlu0 %3968, %v3879
          %v3970 = vpop.permute.xlu0 %3969
          %3973 = vset.pattern.permute.xlu0 0
          %3974 = vperm.xlu0 %3973, %v3880
          %v3975 = vpop.permute.xlu0 %3974
          %3978 = vset.pattern.permute.xlu0 0
          %3979 = vperm.xlu0 %3978, %v3881
          %v3980 = vpop.permute.xlu0 %3979
          %3983 = vset.pattern.permute.xlu0 0
          %3984 = vperm.xlu0 %3983, %v3882
          %v3985 = vpop.permute.xlu0 %3984
          %3988 = vset.pattern.permute.xlu0 0
          %3989 = vperm.xlu0 %3988, %v3883
          %v3990 = vpop.permute.xlu0 %3989
          %3993 = vset.pattern.permute.xlu0 0
          %3994 = vperm.xlu0 %3993, %v3884
          %v3995 = vpop.permute.xlu0 %3994
          %3998 = vset.pattern.permute.xlu0 0
          %3999 = vperm.xlu0 %3998, %v3885
          %v4000 = vpop.permute.xlu0 %3999
          %4003 = vset.pattern.permute.xlu0 0
          %4004 = vperm.xlu0 %4003, %v3886
          %v4005 = vpop.permute.xlu0 %4004
          %4008 = vset.pattern.permute.xlu0 0
          %4009 = vperm.xlu0 %4008, %v3887
          %v4010 = vpop.permute.xlu0 %4009
          %4013 = vset.pattern.permute.xlu0 0
          %4014 = vperm.xlu0 %4013, %v3888
          %v4015 = vpop.permute.xlu0 %4014
          %4018 = vset.pattern.permute.xlu0 0
          %4019 = vperm.xlu0 %4018, %v3889
          %v4020 = vpop.permute.xlu0 %4019
          %4023 = vset.pattern.permute.xlu0 0
          %4024 = vperm.xlu0 %4023, %v3890
          %v4025 = vpop.permute.xlu0 %4024
          %4028 = vset.pattern.permute.xlu0 0
          %4029 = vperm.xlu0 %4028, %v3891
          %v4030 = vpop.permute.xlu0 %4029
          %4033 = vset.pattern.permute.xlu0 0
          %4034 = vperm.xlu0 %4033, %v3892
          %v4035 = vpop.permute.xlu0 %4034
          %4038 = vset.pattern.permute.xlu0 0
          %4039 = vperm.xlu0 %4038, %v3893
          %v4040 = vpop.permute.xlu0 %4039
          %4043 = vset.pattern.permute.xlu0 0
          %4044 = vperm.xlu0 %4043, %v3894
          %v4045 = vpop.permute.xlu0 %4044
          %4048 = vset.pattern.permute.xlu0 0
          %4049 = vperm.xlu0 %4048, %v3895
          %v4050 = vpop.permute.xlu0 %4049
          %4053 = vset.pattern.permute.xlu0 0
          %4054 = vperm.xlu0 %4053, %v3896
          %v4055 = vpop.permute.xlu0 %4054
          %4058 = vset.pattern.permute.xlu0 0
          %4059 = vperm.xlu0 %4058, %v3897
          %v4060 = vpop.permute.xlu0 %4059
          %4063 = vset.pattern.permute.xlu0 0
          %4064 = vperm.xlu0 %4063, %v3898
          %v4065 = vpop.permute.xlu0 %4064
          %4068 = vset.pattern.permute.xlu0 0
          %4069 = vperm.xlu0 %4068, %v3899
          %v4070 = vpop.permute.xlu0 %4069
          %4073 = vset.pattern.permute.xlu0 0
          %4074 = vperm.xlu0 %4073, %v3900
          %v4075 = vpop.permute.xlu0 %4074
          %4078 = vset.pattern.permute.xlu0 0
          %4079 = vperm.xlu0 %4078, %v3901
          %v4080 = vpop.permute.xlu0 %4079
          %4083 = vset.pattern.permute.xlu0 0
          %4084 = vperm.xlu0 %4083, %v3902
          %v4085 = vpop.permute.xlu0 %4084
          %4088 = vset.pattern.permute.xlu0 0
          %4089 = vperm.xlu0 %4088, %v3903
          %v4090 = vpop.permute.xlu0 %4089
          %4093 = vset.pattern.permute.xlu0 0
          %4094 = vperm.xlu0 %4093, %v3904
          %v4095 = vpop.permute.xlu0 %4094
          %4098 = vset.pattern.permute.xlu0 0
          %4099 = vperm.xlu0 %4098, %v3905
          %v4100 = vpop.permute.xlu0 %4099
          %4103 = vset.pattern.permute.xlu0 0
          %4104 = vperm.xlu0 %4103, %v3906
          %v4105 = vpop.permute.xlu0 %4104
          %4108 = vset.pattern.permute.xlu0 0
          %4109 = vperm.xlu0 %4108, %v3907
          %v4110 = vpop.permute.xlu0 %4109
          %4113 = vset.pattern.permute.xlu0 0
          %4114 = vperm.xlu0 %4113, %v3908
          %v4115 = vpop.permute.xlu0 %4114
          %4118 = vset.pattern.permute.xlu0 0
          %4119 = vperm.xlu0 %4118, %v3909
          %v4120 = vpop.permute.xlu0 %4119
          %4123 = vset.pattern.permute.xlu0 0
          %4124 = vperm.xlu0 %4123, %v3910
          %v4125 = vpop.permute.xlu0 %4124
          %4128 = vset.pattern.permute.xlu0 0
          %4129 = vperm.xlu0 %4128, %v3911
          %v4130 = vpop.permute.xlu0 %4129
          %4133 = vset.pattern.permute.xlu0 0
          %4134 = vperm.xlu0 %4133, %v3912
          %v4135 = vpop.permute.xlu0 %4134
          %4138 = vset.pattern.permute.xlu0 0
          %4139 = vperm.xlu0 %4138, %v3913
          %v4140 = vpop.permute.xlu0 %4139
          %4143 = vset.pattern.permute.xlu0 0
          %4144 = vperm.xlu0 %4143, %v3914
          %v4145 = vpop.permute.xlu0 %4144
          %4148 = vset.pattern.permute.xlu0 0
          %4149 = vperm.xlu0 %4148, %v3915
          %v4150 = vpop.permute.xlu0 %4149
          %4153 = vset.pattern.permute.xlu0 0
          %4154 = vperm.xlu0 %4153, %v3916
          %v4155 = vpop.permute.xlu0 %4154
          %v4157 = vmul.f32 %v3437, %v3920
          %v4158 = vmul.f32 %v3438, %v3925
          %v4159 = vmul.f32 %v3439, %v3930
          %v4160 = vmul.f32 %v3440, %v3935
          %v4161 = vmul.f32 %v3441, %v3940
          %v4162 = vmul.f32 %v3442, %v3945
          %v4163 = vmul.f32 %v3443, %v3950
          %v4164 = vmul.f32 %v3444, %v3955
          %v4165 = vmul.f32 %v3445, %v3960
          %v4166 = vmul.f32 %v3446, %v3965
          %v4167 = vmul.f32 %v3447, %v3970
          %v4168 = vmul.f32 %v3448, %v3975
          %v4169 = vmul.f32 %v3449, %v3980
          %v4170 = vmul.f32 %v3450, %v3985
          %v4171 = vmul.f32 %v3451, %v3990
          %v4172 = vmul.f32 %v3452, %v3995
          %v4173 = vmul.f32 %v3453, %v4000
          %v4174 = vmul.f32 %v3454, %v4005
          %v4175 = vmul.f32 %v3455, %v4010
          %v4176 = vmul.f32 %v3456, %v4015
          %v4177 = vmul.f32 %v3457, %v4020
          %v4178 = vmul.f32 %v3458, %v4025
          %v4179 = vmul.f32 %v3459, %v4030
          %v4180 = vmul.f32 %v3460, %v4035
          %v4181 = vmul.f32 %v3461, %v4040
          %v4182 = vmul.f32 %v3462, %v4045
          %v4183 = vmul.f32 %v3463, %v4050
          %v4184 = vmul.f32 %v3464, %v4055
          %v4185 = vmul.f32 %v3465, %v4060
          %v4186 = vmul.f32 %v3466, %v4065
          %v4187 = vmul.f32 %v3467, %v4070
          %v4188 = vmul.f32 %v3468, %v4075
          %v4189 = vmul.f32 %v3469, %v4080
          %v4190 = vmul.f32 %v3470, %v4085
          %v4191 = vmul.f32 %v3471, %v4090
          %v4192 = vmul.f32 %v3472, %v4095
          %v4193 = vmul.f32 %v3473, %v4100
          %v4194 = vmul.f32 %v3474, %v4105
          %v4195 = vmul.f32 %v3475, %v4110
          %v4196 = vmul.f32 %v3476, %v4115
          %v4197 = vmul.f32 %v3477, %v4120
          %v4198 = vmul.f32 %v3478, %v4125
          %v4199 = vmul.f32 %v3479, %v4130
          %v4200 = vmul.f32 %v3480, %v4135
          %v4201 = vmul.f32 %v3481, %v4140
          %v4202 = vmul.f32 %v3482, %v4145
          %v4203 = vmul.f32 %v3483, %v4150
          %v4204 = vmul.f32 %v3484, %v4155
          %v4205 = vld [vmem:[%s631] sm:$0xff]
          %v4206 = vld [vmem:[%s631 + $0x8] sm:$0xff]
          %v4207 = vld [vmem:[%s631 + $0x10] sm:$0xff]
          %v4208 = vld [vmem:[%s631 + $0x18] sm:$0xff]
          %v4209 = vld [vmem:[%s631 + $0x20] sm:$0xff]
          %v4210 = vld [vmem:[%s631 + $0x28] sm:$0xff]
          %v4211 = vld [vmem:[%s631 + $0x30] sm:$0xff]
          %v4212 = vld [vmem:[%s631 + $0x38] sm:$0xff]
          %v4213 = vld [vmem:[%s631 + $0x40] sm:$0xff]
          %v4214 = vld [vmem:[%s631 + $0x48] sm:$0xff]
          %v4215 = vld [vmem:[%s631 + $0x50] sm:$0xff]
          %v4216 = vld [vmem:[%s631 + $0x58] sm:$0xff]
          %v4217 = vld [vmem:[%s631 + $0x60] sm:$0xff]
          %v4218 = vld [vmem:[%s631 + $0x68] sm:$0xff]
          %v4219 = vld [vmem:[%s631 + $0x70] sm:$0xff]
          %v4220 = vld [vmem:[%s631 + $0x78] sm:$0xff]
          %v4221 = vld [vmem:[%s631 + $0x80] sm:$0xff]
          %v4222 = vld [vmem:[%s631 + $0x88] sm:$0xff]
          %v4223 = vld [vmem:[%s631 + $0x90] sm:$0xff]
          %v4224 = vld [vmem:[%s631 + $0x98] sm:$0xff]
          %v4225 = vld [vmem:[%s631 + $0xa0] sm:$0xff]
          %v4226 = vld [vmem:[%s631 + $0xa8] sm:$0xff]
          %v4227 = vld [vmem:[%s631 + $0xb0] sm:$0xff]
          %v4228 = vld [vmem:[%s631 + $0xb8] sm:$0xff]
          %v4229 = vld [vmem:[%s631 + $0xc0] sm:$0xff]
          %v4230 = vld [vmem:[%s631 + $0xc8] sm:$0xff]
          %v4231 = vld [vmem:[%s631 + $0xd0] sm:$0xff]
          %v4232 = vld [vmem:[%s631 + $0xd8] sm:$0xff]
          %v4233 = vld [vmem:[%s631 + $0xe0] sm:$0xff]
          %v4234 = vld [vmem:[%s631 + $0xe8] sm:$0xff]
          %v4235 = vld [vmem:[%s631 + $0xf0] sm:$0xff]
          %v4236 = vld [vmem:[%s631 + $0xf8] sm:$0xff]
          %v4237 = vld [vmem:[%s631 + $0x100] sm:$0xff]
          %v4238 = vld [vmem:[%s631 + $0x108] sm:$0xff]
          %v4239 = vld [vmem:[%s631 + $0x110] sm:$0xff]
          %v4240 = vld [vmem:[%s631 + $0x118] sm:$0xff]
          %v4241 = vld [vmem:[%s631 + $0x120] sm:$0xff]
          %v4242 = vld [vmem:[%s631 + $0x128] sm:$0xff]
          %v4243 = vld [vmem:[%s631 + $0x130] sm:$0xff]
          %v4244 = vld [vmem:[%s631 + $0x138] sm:$0xff]
          %v4245 = vld [vmem:[%s631 + $0x140] sm:$0xff]
          %v4246 = vld [vmem:[%s631 + $0x148] sm:$0xff]
          %v4247 = vld [vmem:[%s631 + $0x150] sm:$0xff]
          %v4248 = vld [vmem:[%s631 + $0x158] sm:$0xff]
          %v4249 = vld [vmem:[%s631 + $0x160] sm:$0xff]
          %v4250 = vld [vmem:[%s631 + $0x168] sm:$0xff]
          %v4251 = vld [vmem:[%s631 + $0x170] sm:$0xff]
          %v4252 = vld [vmem:[%s631 + $0x178] sm:$0xff]
          %4254 = vset.pattern.permute.xlu0 0
          %4255 = vperm.xlu0 %4254, %v4205
          %v4256 = vpop.permute.xlu0 %4255
          %4259 = vset.pattern.permute.xlu0 0
          %4260 = vperm.xlu0 %4259, %v4206
          %v4261 = vpop.permute.xlu0 %4260
          %4264 = vset.pattern.permute.xlu0 0
          %4265 = vperm.xlu0 %4264, %v4207
          %v4266 = vpop.permute.xlu0 %4265
          %4269 = vset.pattern.permute.xlu0 0
          %4270 = vperm.xlu0 %4269, %v4208
          %v4271 = vpop.permute.xlu0 %4270
          %4274 = vset.pattern.permute.xlu0 0
          %4275 = vperm.xlu0 %4274, %v4209
          %v4276 = vpop.permute.xlu0 %4275
          %4279 = vset.pattern.permute.xlu0 0
          %4280 = vperm.xlu0 %4279, %v4210
          %v4281 = vpop.permute.xlu0 %4280
          %4284 = vset.pattern.permute.xlu0 0
          %4285 = vperm.xlu0 %4284, %v4211
          %v4286 = vpop.permute.xlu0 %4285
          %4289 = vset.pattern.permute.xlu0 0
          %4290 = vperm.xlu0 %4289, %v4212
          %v4291 = vpop.permute.xlu0 %4290
          %4294 = vset.pattern.permute.xlu0 0
          %4295 = vperm.xlu0 %4294, %v4213
          %v4296 = vpop.permute.xlu0 %4295
          %4299 = vset.pattern.permute.xlu0 0
          %4300 = vperm.xlu0 %4299, %v4214
          %v4301 = vpop.permute.xlu0 %4300
          %4304 = vset.pattern.permute.xlu0 0
          %4305 = vperm.xlu0 %4304, %v4215
          %v4306 = vpop.permute.xlu0 %4305
          %4309 = vset.pattern.permute.xlu0 0
          %4310 = vperm.xlu0 %4309, %v4216
          %v4311 = vpop.permute.xlu0 %4310
          %4314 = vset.pattern.permute.xlu0 0
          %4315 = vperm.xlu0 %4314, %v4217
          %v4316 = vpop.permute.xlu0 %4315
          %4319 = vset.pattern.permute.xlu0 0
          %4320 = vperm.xlu0 %4319, %v4218
          %v4321 = vpop.permute.xlu0 %4320
          %4324 = vset.pattern.permute.xlu0 0
          %4325 = vperm.xlu0 %4324, %v4219
          %v4326 = vpop.permute.xlu0 %4325
          %4329 = vset.pattern.permute.xlu0 0
          %4330 = vperm.xlu0 %4329, %v4220
          %v4331 = vpop.permute.xlu0 %4330
          %4334 = vset.pattern.permute.xlu0 0
          %4335 = vperm.xlu0 %4334, %v4221
          %v4336 = vpop.permute.xlu0 %4335
          %4339 = vset.pattern.permute.xlu0 0
          %4340 = vperm.xlu0 %4339, %v4222
          %v4341 = vpop.permute.xlu0 %4340
          %4344 = vset.pattern.permute.xlu0 0
          %4345 = vperm.xlu0 %4344, %v4223
          %v4346 = vpop.permute.xlu0 %4345
          %4349 = vset.pattern.permute.xlu0 0
          %4350 = vperm.xlu0 %4349, %v4224
          %v4351 = vpop.permute.xlu0 %4350
          %4354 = vset.pattern.permute.xlu0 0
          %4355 = vperm.xlu0 %4354, %v4225
          %v4356 = vpop.permute.xlu0 %4355
          %4359 = vset.pattern.permute.xlu0 0
          %4360 = vperm.xlu0 %4359, %v4226
          %v4361 = vpop.permute.xlu0 %4360
          %4364 = vset.pattern.permute.xlu0 0
          %4365 = vperm.xlu0 %4364, %v4227
          %v4366 = vpop.permute.xlu0 %4365
          %4369 = vset.pattern.permute.xlu0 0
          %4370 = vperm.xlu0 %4369, %v4228
          %v4371 = vpop.permute.xlu0 %4370
          %4374 = vset.pattern.permute.xlu0 0
          %4375 = vperm.xlu0 %4374, %v4229
          %v4376 = vpop.permute.xlu0 %4375
          %4379 = vset.pattern.permute.xlu0 0
          %4380 = vperm.xlu0 %4379, %v4230
          %v4381 = vpop.permute.xlu0 %4380
          %4384 = vset.pattern.permute.xlu0 0
          %4385 = vperm.xlu0 %4384, %v4231
          %v4386 = vpop.permute.xlu0 %4385
          %4389 = vset.pattern.permute.xlu0 0
          %4390 = vperm.xlu0 %4389, %v4232
          %v4391 = vpop.permute.xlu0 %4390
          %4394 = vset.pattern.permute.xlu0 0
          %4395 = vperm.xlu0 %4394, %v4233
          %v4396 = vpop.permute.xlu0 %4395
          %4399 = vset.pattern.permute.xlu0 0
          %4400 = vperm.xlu0 %4399, %v4234
          %v4401 = vpop.permute.xlu0 %4400
          %4404 = vset.pattern.permute.xlu0 0
          %4405 = vperm.xlu0 %4404, %v4235
          %v4406 = vpop.permute.xlu0 %4405
          %4409 = vset.pattern.permute.xlu0 0
          %4410 = vperm.xlu0 %4409, %v4236
          %v4411 = vpop.permute.xlu0 %4410
          %4414 = vset.pattern.permute.xlu0 0
          %4415 = vperm.xlu0 %4414, %v4237
          %v4416 = vpop.permute.xlu0 %4415
          %4419 = vset.pattern.permute.xlu0 0
          %4420 = vperm.xlu0 %4419, %v4238
          %v4421 = vpop.permute.xlu0 %4420
          %4424 = vset.pattern.permute.xlu0 0
          %4425 = vperm.xlu0 %4424, %v4239
          %v4426 = vpop.permute.xlu0 %4425
          %4429 = vset.pattern.permute.xlu0 0
          %4430 = vperm.xlu0 %4429, %v4240
          %v4431 = vpop.permute.xlu0 %4430
          %4434 = vset.pattern.permute.xlu0 0
          %4435 = vperm.xlu0 %4434, %v4241
          %v4436 = vpop.permute.xlu0 %4435
          %4439 = vset.pattern.permute.xlu0 0
          %4440 = vperm.xlu0 %4439, %v4242
          %v4441 = vpop.permute.xlu0 %4440
          %4444 = vset.pattern.permute.xlu0 0
          %4445 = vperm.xlu0 %4444, %v4243
          %v4446 = vpop.permute.xlu0 %4445
          %4449 = vset.pattern.permute.xlu0 0
          %4450 = vperm.xlu0 %4449, %v4244
          %v4451 = vpop.permute.xlu0 %4450
          %4454 = vset.pattern.permute.xlu0 0
          %4455 = vperm.xlu0 %4454, %v4245
          %v4456 = vpop.permute.xlu0 %4455
          %4459 = vset.pattern.permute.xlu0 0
          %4460 = vperm.xlu0 %4459, %v4246
          %v4461 = vpop.permute.xlu0 %4460
          %4464 = vset.pattern.permute.xlu0 0
          %4465 = vperm.xlu0 %4464, %v4247
          %v4466 = vpop.permute.xlu0 %4465
          %4469 = vset.pattern.permute.xlu0 0
          %4470 = vperm.xlu0 %4469, %v4248
          %v4471 = vpop.permute.xlu0 %4470
          %4474 = vset.pattern.permute.xlu0 0
          %4475 = vperm.xlu0 %4474, %v4249
          %v4476 = vpop.permute.xlu0 %4475
          %4479 = vset.pattern.permute.xlu0 0
          %4480 = vperm.xlu0 %4479, %v4250
          %v4481 = vpop.permute.xlu0 %4480
          %4484 = vset.pattern.permute.xlu0 0
          %4485 = vperm.xlu0 %4484, %v4251
          %v4486 = vpop.permute.xlu0 %4485
          %4489 = vset.pattern.permute.xlu0 0
          %4490 = vperm.xlu0 %4489, %v4252
          %v4491 = vpop.permute.xlu0 %4490
          %v4493 = vadd.f32 %v4157, %v4256
          %v4494 = vadd.f32 %v4158, %v4261
          %v4495 = vadd.f32 %v4159, %v4266
          %v4496 = vadd.f32 %v4160, %v4271
          %v4497 = vadd.f32 %v4161, %v4276
          %v4498 = vadd.f32 %v4162, %v4281
          %v4499 = vadd.f32 %v4163, %v4286
          %v4500 = vadd.f32 %v4164, %v4291
          %v4501 = vadd.f32 %v4165, %v4296
          %v4502 = vadd.f32 %v4166, %v4301
          %v4503 = vadd.f32 %v4167, %v4306
          %v4504 = vadd.f32 %v4168, %v4311
          %v4505 = vadd.f32 %v4169, %v4316
          %v4506 = vadd.f32 %v4170, %v4321
          %v4507 = vadd.f32 %v4171, %v4326
          %v4508 = vadd.f32 %v4172, %v4331
          %v4509 = vadd.f32 %v4173, %v4336
          %v4510 = vadd.f32 %v4174, %v4341
          %v4511 = vadd.f32 %v4175, %v4346
          %v4512 = vadd.f32 %v4176, %v4351
          %v4513 = vadd.f32 %v4177, %v4356
          %v4514 = vadd.f32 %v4178, %v4361
          %v4515 = vadd.f32 %v4179, %v4366
          %v4516 = vadd.f32 %v4180, %v4371
          %v4517 = vadd.f32 %v4181, %v4376
          %v4518 = vadd.f32 %v4182, %v4381
          %v4519 = vadd.f32 %v4183, %v4386
          %v4520 = vadd.f32 %v4184, %v4391
          %v4521 = vadd.f32 %v4185, %v4396
          %v4522 = vadd.f32 %v4186, %v4401
          %v4523 = vadd.f32 %v4187, %v4406
          %v4524 = vadd.f32 %v4188, %v4411
          %v4525 = vadd.f32 %v4189, %v4416
          %v4526 = vadd.f32 %v4190, %v4421
          %v4527 = vadd.f32 %v4191, %v4426
          %v4528 = vadd.f32 %v4192, %v4431
          %v4529 = vadd.f32 %v4193, %v4436
          %v4530 = vadd.f32 %v4194, %v4441
          %v4531 = vadd.f32 %v4195, %v4446
          %v4532 = vadd.f32 %v4196, %v4451
          %v4533 = vadd.f32 %v4197, %v4456
          %v4534 = vadd.f32 %v4198, %v4461
          %v4535 = vadd.f32 %v4199, %v4466
          %v4536 = vadd.f32 %v4200, %v4471
          %v4537 = vadd.f32 %v4201, %v4476
          %v4538 = vadd.f32 %v4202, %v4481
          %v4539 = vadd.f32 %v4203, %v4486
          %v4540 = vadd.f32 %v4204, %v4491
          %4541 = vst.msk [vmem:[%s637] sm:$0xff] %vm3144, %v4493
          %4542 = vst.msk [vmem:[%s637 + $0x8] sm:$0xff] %vm3144, %v4494
          %4543 = vst.msk [vmem:[%s637 + $0x10] sm:$0xff] %vm3144, %v4495
          %4544 = vst.msk [vmem:[%s637 + $0x18] sm:$0xff] %vm3144, %v4496
          %4545 = vst.msk [vmem:[%s637 + $0x20] sm:$0xff] %vm3144, %v4497
          %4546 = vst.msk [vmem:[%s637 + $0x28] sm:$0xff] %vm3144, %v4498
          %4547 = vst.msk [vmem:[%s637 + $0x30] sm:$0xff] %vm3144, %v4499
          %4548 = vst.msk [vmem:[%s637 + $0x38] sm:$0xff] %vm3144, %v4500
          %4549 = vst.msk [vmem:[%s637 + $0x40] sm:$0xff] %vm3144, %v4501
          %4550 = vst.msk [vmem:[%s637 + $0x48] sm:$0xff] %vm3144, %v4502
          %4551 = vst.msk [vmem:[%s637 + $0x50] sm:$0xff] %vm3144, %v4503
          %4552 = vst.msk [vmem:[%s637 + $0x58] sm:$0xff] %vm3144, %v4504
          %4553 = vst.msk [vmem:[%s637 + $0x60] sm:$0xff] %vm3144, %v4505
          %4554 = vst.msk [vmem:[%s637 + $0x68] sm:$0xff] %vm3144, %v4506
          %4555 = vst.msk [vmem:[%s637 + $0x70] sm:$0xff] %vm3144, %v4507
          %4556 = vst.msk [vmem:[%s637 + $0x78] sm:$0xff] %vm3144, %v4508
          %4557 = vst.msk [vmem:[%s637 + $0x80] sm:$0xff] %vm3144, %v4509
          %4558 = vst.msk [vmem:[%s637 + $0x88] sm:$0xff] %vm3144, %v4510
          %4559 = vst.msk [vmem:[%s637 + $0x90] sm:$0xff] %vm3144, %v4511
          %4560 = vst.msk [vmem:[%s637 + $0x98] sm:$0xff] %vm3144, %v4512
          %4561 = vst.msk [vmem:[%s637 + $0xa0] sm:$0xff] %vm3144, %v4513
          %4562 = vst.msk [vmem:[%s637 + $0xa8] sm:$0xff] %vm3144, %v4514
          %4563 = vst.msk [vmem:[%s637 + $0xb0] sm:$0xff] %vm3144, %v4515
          %4564 = vst.msk [vmem:[%s637 + $0xb8] sm:$0xff] %vm3144, %v4516
          %4565 = vst.msk [vmem:[%s637 + $0xc0] sm:$0xff] %vm3144, %v4517
          %4566 = vst.msk [vmem:[%s637 + $0xc8] sm:$0xff] %vm3144, %v4518
          %4567 = vst.msk [vmem:[%s637 + $0xd0] sm:$0xff] %vm3144, %v4519
          %4568 = vst.msk [vmem:[%s637 + $0xd8] sm:$0xff] %vm3144, %v4520
          %4569 = vst.msk [vmem:[%s637 + $0xe0] sm:$0xff] %vm3144, %v4521
          %4570 = vst.msk [vmem:[%s637 + $0xe8] sm:$0xff] %vm3144, %v4522
          %4571 = vst.msk [vmem:[%s637 + $0xf0] sm:$0xff] %vm3144, %v4523
          %4572 = vst.msk [vmem:[%s637 + $0xf8] sm:$0xff] %vm3144, %v4524
          %4573 = vst.msk [vmem:[%s637 + $0x100] sm:$0xff] %vm3144, %v4525
          %4574 = vst.msk [vmem:[%s637 + $0x108] sm:$0xff] %vm3144, %v4526
          %4575 = vst.msk [vmem:[%s637 + $0x110] sm:$0xff] %vm3144, %v4527
          %4576 = vst.msk [vmem:[%s637 + $0x118] sm:$0xff] %vm3144, %v4528
          %4577 = vst.msk [vmem:[%s637 + $0x120] sm:$0xff] %vm3144, %v4529
          %4578 = vst.msk [vmem:[%s637 + $0x128] sm:$0xff] %vm3144, %v4530
          %4579 = vst.msk [vmem:[%s637 + $0x130] sm:$0xff] %vm3144, %v4531
          %4580 = vst.msk [vmem:[%s637 + $0x138] sm:$0xff] %vm3144, %v4532
          %4581 = vst.msk [vmem:[%s637 + $0x140] sm:$0xff] %vm3144, %v4533
          %4582 = vst.msk [vmem:[%s637 + $0x148] sm:$0xff] %vm3144, %v4534
          %4583 = vst.msk [vmem:[%s637 + $0x150] sm:$0xff] %vm3144, %v4535
          %4584 = vst.msk [vmem:[%s637 + $0x158] sm:$0xff] %vm3144, %v4536
          %4585 = vst.msk [vmem:[%s637 + $0x160] sm:$0xff] %vm3144, %v4537
          %4586 = vst.msk [vmem:[%s637 + $0x168] sm:$0xff] %vm3144, %v4538
          %4587 = vst.msk [vmem:[%s637 + $0x170] sm:$0xff] %vm3144, %v4539
          %4588 = vst.msk [vmem:[%s637 + $0x178] sm:$0xff] %vm3144, %v4540
        $region71: #{tpu_custom_call.1} parent=58 // pred_fallthru
          _
        %s4589 = smul.u32 48, %s20
        %p4590 = scmp.lt.s32.totalorder %s4589, 47
        %s4591 = scalar_select %p4590, %s4589, 47
        %s4592 = smul.addr %s4591, 8
        %s4593 = scalar_lea.vmem %s5, %s4592
        // Predicated region
        $region72: #{tpu_custom_call.1} parent=58 // pred_check
          %p4594 = pneg %p178
        $region73: #{tpu_custom_call.1} parent=58 // pred_check_branch
          %4596 = sbr.rel (%p4594) target = $region75
        $region74: #{tpu_custom_call.1} parent=58 // pred_region
          %s4597 = smul.u32 48, %s20
        $region75: #{tpu_custom_call.1} parent=58 // pred_fallthru
          _
        // Predicated region
        $region76: #{tpu_custom_call.1} parent=58 // pred_check
          %p4598 = pneg %p178
        $region77: #{tpu_custom_call.1} parent=58 // pred_check_branch
          %4600 = sbr.rel (%p4598) target = $region79
        $region78: #{tpu_custom_call.1} parent=58 // pred_region
          %s4601 = smul.u32 48, %s20
          %p4602 = scmp.lt.s32.totalorder %s4601, 47
          %s4603 = scalar_select %p4602, %s4601, 47
          %s4604 = smul.addr %s4603, 8
          %s4605 = scalar_lea.vmem %s5, %s4604
        $region79: #{tpu_custom_call.1} parent=58 // pred_fallthru
          _
      $region59: #{tpu_custom_call.1} parent=5 // pred_fallthru
        _
      %p4606 = scmp.le.s32.totalorder 2, %s11
      // Predicated region
      $region80: #{tpu_custom_call.1} parent=5 // pred_check
        %p4607 = pneg %p4606
      $region81: #{tpu_custom_call.1} parent=5 // pred_check_branch
        %4609 = sbr.rel (%p4607) target = $region83
      $region82: #{tpu_custom_call.1} parent=5 // pred_region
        %s4610 = ssub.s32 %s11, 2
      $region83: #{tpu_custom_call.1} parent=5 // pred_fallthru
        _
    $region6: #{tpu_custom_call.1} parent=1 // loop_footer
      %s15 = sadd.s32 1, %s11
    $region7: #{tpu_custom_call.1} parent=1 // loop_footer_branch
      %10 = sbr.rel target = $region3
    $region8: #{tpu_custom_call.1} parent=1 // loop_exit
      _

</llo_original>
